<compile_context>
chip_gen: v5e
topology: v5e:2x2
jax: 0.10.0
libtpu: 0.0.40
codegen_flags: <defaults>
</compile_context>

<pallas_src>
import functools

import jax
import jax.numpy as jnp
from jax.experimental import pallas as pl
from jax.experimental.pallas import tpu as pltpu


# ----------------------------------------------------------------------------
# Helpers
# ----------------------------------------------------------------------------
def _round_up(x, m):
    return ((x + m - 1) // m) * m


def _choose_tile(n, requested):
    """Token tile: multiple of 8, <= requested, and small enough that the grid
    has >= 2 steps whenever the problem allows it (v7x has two TensorCores
    sharded via dimension_semantics=("parallel",))."""
    req = max(8, (int(requested) // 8) * 8)
    tile = min(req, _round_up(max(n, 8), 8))
    if n > 8 and -(-n // tile) < 2:           # grid would be a single step
        tile = _round_up(max((n + 1) // 2, 8), 8)
    return max(8, (tile // 8) * 8)


# ----------------------------------------------------------------------------
# Kernel: batch-OMP in K-space over one tile of tokens
# ----------------------------------------------------------------------------
def _omp_kspace_kernel(corr0_ref, gram_ref, coeff_ref, *, sparsity, epsilon):
    corr0 = corr0_ref[...].astype(jnp.float32)    # [TN, K]  Dt @ x (per token)
    gram = gram_ref[...].astype(jnp.float32)      # [K, K]   D.T @ D (no eps)

    TN, K = corr0.shape
    lane = jax.lax.broadcasted_iota(jnp.int32, (TN, K), 1)   # atom id per lane
    neg_inf = jnp.float32(-jnp.inf)
    eps = jnp.float32(epsilon)

    def gsym(G, i, j, diag_eps=False):
        a, b = (i, j) if i <= j else (j, i)
        g = G[(a, b)]
        return g + eps if (diag_eps and i == j) else g

    corr = corr0                                   # Dt @ residual (current iter)
    active = jnp.zeros((TN, K), dtype=jnp.bool_)   # previously selected atoms
    gramrows = []                                  # cached Gram rows   [TN, K]
    idxs = []                                      # selected atom ids  [TN, 1] i32
    G = {}                                         # (i,j) i<=j -> gram[a_i,a_j] [TN,1]
    y0 = []                                        # corr0[a_i]         [TN, 1]
    c = []                                         # most recent solve  list of [TN,1]

    for k in range(sparsity):
        # ---- atom selection: masked SIGNED argmax (first index on ties).
        # TODO(synk): could fuse into one packed-key max-reduce (perf only; risks
        # changing near-tie selections vs. the reference, so kept as two reduces).
        masked = jnp.where(active, neg_inf, corr)
        m = jnp.max(masked, axis=1, keepdims=True)                       # [TN, 1]
        idx = jnp.min(jnp.where(masked >= m, lane, K), axis=1, keepdims=True)
        oh_b = lane == idx
        active = jnp.logical_or(active, oh_b)
        oh = oh_b.astype(jnp.float32)
        idxs.append(idx)

        # ---- Gram row of the new atom: gramrow[t, :] = gram[a_k(t), :]
        #      (one-hot gather via a single f32 MXU matmul; cached for later).
        gramrows.append(jnp.dot(oh, gram, preferred_element_type=jnp.float32))

        # ---- new Gram scalars G[i, k] = gram[a_i, a_k]; only the CURRENT
        #      one-hot is needed (old one-hots are never stored).
        for i in range(k + 1):
            G[(i, k)] = jnp.sum(oh * gramrows[i], axis=1, keepdims=True)

        # ---- rhs via scalar recurrences (no extra cross-lane reductions):
        #      y_i = Dt[a_i] . r_k = y0_i - sum_{j<k} c_j G[i, j];
        #      the newly selected atom's y equals the argmax value m, and its
        #      y0 follows from m + sum_{j<k} c_j G[j, k].
        y = []
        for i in range(k):
            acc = y0[i]
            for j in range(k):
                acc = acc - c[j] * gsym(G, i, j)
            y.append(acc)
        y.append(m)
        y0k = m
        for j in range(k):
            y0k = y0k + c[j] * gsym(G, j, k)
        y0.append(y0k)

        # ---- solve (G_sel + eps*I) c = y : unrolled Gaussian elimination
        #      (SPD + eps, no pivoting), vectorized over TN.
        # TODO(synk): lane-pack the (k+1)x(k+2) augmented rows into [TN, k+2]
        # arrays to cut [TN,1] VPU ops ~s-fold (perf only).
        s = k + 1
        A = [[gsym(G, i, j, diag_eps=True) for j in range(s)] for i in range(s)]
        rhs = list(y)
        for i in range(s):
            inv_piv = 1.0 / A[i][i]
            for r in range(i + 1, s):
                f = A[r][i] * inv_piv
                for cc in range(i + 1, s):
                    A[r][cc] = A[r][cc] - f * A[i][cc]
                rhs[r] = rhs[r] - f * rhs[i]
        c = [None] * s
        for i in reversed(range(s)):
            acc = rhs[i]
            for j in range(i + 1, s):
                acc = acc - A[i][j] * c[j]
            c[i] = acc / A[i][i]

        # ---- residual-correlation update from the cached Gram rows (VPU FMAs
        #      only — no coeffs@gram matmul). Skipped on the last iteration.
        if k + 1 < sparsity:
            corr = corr0
            for i in range(s):
                corr = corr - c[i] * gramrows[i]

    # ---- single dense scatter of the FINAL solution (the reference overwrites
    #      the scattered coefficients every iteration; only the last survives).
    coeffs = jnp.zeros((TN, K), dtype=jnp.float32)
    for i in range(sparsity):
        coeffs = jnp.where(lane == idxs[i], c[i], coeffs)

    coeff_ref[...] = jnp.clip(coeffs, -1.0e7, 1.0e7)


# ----------------------------------------------------------------------------
# Wrapper (forward pass)
# ----------------------------------------------------------------------------
def dictionary_learning_bottleneck(z, dictionary, *, sparsity=5,
                                   commitment_cost=0.25, epsilon=1e-10,
                                   tile_n=256):
    """Forward pass of DictionaryLearningBottleneck.

    Args:
      z          : [B, E, H, W] float32 (NCHW, as in the torch module)
      dictionary : [E, K] float32, unit-norm columns
    Returns:
      z_q          : [B, E, H, W]  straight-through quantized output
      loss         : scalar
      coefficients : [K, B*H*W]    (matches torch `coefficients`)
    """
    B, E, H, W = z.shape
    Edim, K = dictionary.shape
    assert Edim == E
    assert 1 <= sparsity <= K
    N = B * H * W

    x_tok = jnp.transpose(z, (0, 2, 3, 1)).reshape(N, E).astype(jnp.float32)
    D = dictionary.astype(jnp.float32)

    # Heavy E-space matmuls stay in XLA. They feed the in-kernel solve, so keep
    # f32 HIGHEST to stay numerically faithful to the torch reference
    # (dropping corr0/zq to bf16 inputs is a possible, precision-sensitive opt).
    corr0 = jnp.dot(x_tok, D, preferred_element_type=jnp.float32,
                    precision=jax.lax.Precision.HIGHEST)            # [N, K]
    gram = jnp.dot(D.T, D, preferred_element_type=jnp.float32,
                   precision=jax.lax.Precision.HIGHEST)             # [K, K]

    # Tile the token dimension; pad with zero tokens (they solve to c == 0).
    tile = _choose_tile(N, tile_n)
    n_pad = _round_up(N, tile)
    if n_pad != N:
        corr0 = jnp.pad(corr0, ((0, n_pad - N), (0, 0)))
    grid_n = n_pad // tile

    # Realistic per-tile VMEM estimate: double-buffered corr0/out blocks, the
    # Gram block, the cached Gram rows + wide temporaries, and the [tile,1]
    # solve scalars (counted lane-padded to 128, NOT as [tile, K]).
    k_pad = _round_up(K, 128)
    blk = tile * k_pad * 4
    n_scalars = 3 * sparsity + (sparsity * (sparsity + 1)) // 2 + sparsity * sparsity
    est_bytes = (4 * blk                                   # in/out double buffers
                 + 2 * _round_up(K, 8) * k_pad * 4         # gram block
                 + (sparsity + 6) * blk                    # gramrows + wide temps
                 + n_scalars * tile * 128 * 4)             # [tile,1] solve scalars
    # Cap below v7x's 64 MiB physical VMEM; v5e/v6e (128 MiB) are unaffected.
    vmem_limit = int(min(48 * 2**20, max(32 * 2**20, 2 * est_bytes)))

    gram_spec_kw = {}
    if K >= 512:
        # Grid-invariant block: a second pipeline buffer only wastes VMEM.
        gram_spec_kw["pipeline_mode"] = pl.Buffered(1)

    kernel = functools.partial(_omp_kspace_kernel,
                               sparsity=sparsity, epsilon=epsilon)

    coeffs_full = pl.pallas_call(
        kernel,
        out_shape=jax.ShapeDtypeStruct((n_pad, K), jnp.float32),
        grid_spec=pltpu.PrefetchScalarGridSpec(
            num_scalar_prefetch=0,
            grid=(grid_n,),
            in_specs=[
                pl.BlockSpec((tile, K), lambda i: (i, 0)),            # corr0 tile
                pl.BlockSpec((K, K), lambda i: (0, 0), **gram_spec_kw),  # full Gram
            ],
            out_specs=pl.BlockSpec((tile, K), lambda i: (i, 0)),
        ),
        compiler_params=pltpu.CompilerParams(
            dimension_semantics=("parallel",),
            vmem_limit_bytes=vmem_limit),
    )(corr0, gram)

    coeffs_tok = coeffs_full[:N]                                     # [N, K]

    # Reconstruction + straight-through + losses in XLA (cheap, lane-dense).
    zq_tok = jnp.dot(coeffs_tok, D.T, preferred_element_type=jnp.float32,
                     precision=jax.lax.Precision.HIGHEST)            # [N, E]

    rec_loss = jnp.mean((zq_tok - x_tok) ** 2)      # mse(z_q_flat, z_flat)
    commit_loss = rec_loss                          # identical forward value
    # TODO(synk): detach/stop-gradient semantics of the rec/commit losses and
    # the straight-through estimator are forward-value only (no autograd).
    effective_cost = commitment_cost * (1.0 + sparsity / 10.0)
    coeff_loss = jnp.mean(jnp.abs(coeffs_tok))
    loss = rec_loss + effective_cost * commit_loss + 0.001 * coeff_loss

    zq_nchw = jnp.transpose(zq_tok.reshape(B, H, W, E), (0, 3, 1, 2))
    z_q = z + jnp.clip(zq_nchw - z.astype(jnp.float32), -1.0, 1.0)
    coefficients = coeffs_tok.T                     # [K, N] to match torch
    return z_q, loss, coefficients


# ----------------------------------------------------------------------------
# Main
# ----------------------------------------------------------------------------
if __name__ == "__main__":
    # Small, forward-consistent shapes
    B, E, H, W = 2, 16, 8, 8          # batch, embedding_dim, spatial
    K = 128                           # dict_size
    SPARSITY = 4
    COMMIT = 0.25
    EPS = 1e-10

    key = jax.random.PRNGKey(0)
    k_dict, k_z = jax.random.split(key)

    # Deterministic parameter init: randn(E, K) with unit-L2-norm columns
    dictionary = jax.random.normal(k_dict, (E, K), dtype=jnp.float32)
    dictionary = dictionary / jnp.linalg.norm(dictionary, axis=0, keepdims=True)

    z = jax.random.normal(k_z, (B, E, H, W), dtype=jnp.float32)

    z_q, loss, coefficients = dictionary_learning_bottleneck(
        z, dictionary, sparsity=SPARSITY, commitment_cost=COMMIT, epsilon=EPS)
    jax.block_until_ready((z_q, loss, coefficients))

    # Structural sanity checks
    assert z_q.shape == (B, E, H, W)
    assert coefficients.shape == (K, B * H * W)
    assert loss.shape == ()
    assert bool(jnp.isfinite(z_q).all())
    assert bool(jnp.isfinite(loss))
    assert bool(jnp.isfinite(coefficients).all())
    nnz_per_token = jnp.sum(jnp.abs(coefficients) > 0, axis=0)
    assert bool(jnp.all(nnz_per_token <= SPARSITY))
    assert bool(jnp.all(nnz_per_token >= 1))

    print("KERNEL_OK")
</pallas_src>

<mosaic_0001>
module attributes {stable_mosaic.version = 11 : i64} {
  func.func @_omp_kspace_kernel(%arg0: i32, %arg1: memref<64x128xf32, #tpu.memory_space<vmem>>, %arg2: memref<128x128xf32, #tpu.memory_space<vmem>>, %arg3: memref<64x128xf32, #tpu.memory_space<vmem>>) attributes {dimension_semantics = [#tpu.dimension_semantics<parallel>], iteration_bounds = array<i64: 2>, scalar_prefetch = 0 : i64, scratch_operands = 0 : i64, tpu.core_type = #tpu.core_type<tc>, window_params = [{transform_indices = @transform_0, window_bounds = array<i64: 64, 128>}, {pipeline_mode = #tpu.pipeline_mode<synchronous>, transform_indices = @transform_1, window_bounds = array<i64: 128, 128>}, {transform_indices = @transform_2, window_bounds = array<i64: 64, 128>}]} {
    %c0 = arith.constant 0 : index
    %c0_0 = arith.constant 0 : index
    %0 = vector.load %arg1[%c0, %c0_0] : memref<64x128xf32, #tpu.memory_space<vmem>>, vector<64x128xf32>
    %c0_1 = arith.constant 0 : index
    %c0_2 = arith.constant 0 : index
    %1 = vector.load %arg2[%c0_1, %c0_2] : memref<128x128xf32, #tpu.memory_space<vmem>>, vector<128x128xf32>
    %2 = tpu.iota {dimensions = array<i32: 1>} : vector<64x128xi32>
    %false = arith.constant false
    %3 = vector.broadcast %false : i1 to vector<64x128xi1>
    %cst = arith.constant 0xFF800000 : f32
    %4 = vector.broadcast %cst : f32 to vector<64x128xf32>
    %5 = arith.select %3, %4, %0 : vector<64x128xi1>, vector<64x128xf32>
    %cst_3 = arith.constant dense<0xFF800000> : vector<64xf32>
    %6 = vector.multi_reduction <maximumf>, %5, %cst_3 [1] : vector<64x128xf32> to vector<64xf32>
    %7 = vector.shape_cast %6 : vector<64xf32> to vector<64x1xf32>
    %8 = vector.broadcast %7 : vector<64x1xf32> to vector<64x128xf32>
    %9 = arith.cmpf oge, %5, %8 : vector<64x128xf32>
    %c128_i32 = arith.constant 128 : i32
    %10 = vector.broadcast %c128_i32 : i32 to vector<64x128xi32>
    %11 = arith.select %9, %2, %10 : vector<64x128xi1>, vector<64x128xi32>
    %cst_4 = arith.constant dense<2147483647> : vector<64xi32>
    %12 = vector.multi_reduction <minsi>, %11, %cst_4 [1] : vector<64x128xi32> to vector<64xi32>
    %13 = vector.shape_cast %12 : vector<64xi32> to vector<64x1xi32>
    %14 = vector.broadcast %13 : vector<64x1xi32> to vector<64x128xi32>
    %15 = arith.cmpi eq, %2, %14 : vector<64x128xi32>
    %16 = arith.ori %3, %15 : vector<64x128xi1>
    %17 = arith.extui %15 : vector<64x128xi1> to vector<64x128xi32>
    %18 = arith.sitofp %17 : vector<64x128xi32> to vector<64x128xf32>
    %cst_5 = arith.constant dense<0.000000e+00> : vector<64x128xf32>
    %19 = tpu.matmul %18, %1, %cst_5 {dimension_numbers = #tpu.dot_dimension_numbers<[1], [0], [0], [1], [0, 0, 1, 1], [], []>} : vector<64x128xf32>, vector<128x128xf32>, vector<64x128xf32> -> vector<64x128xf32>
    %20 = arith.mulf %18, %19 : vector<64x128xf32>
    %cst_6 = arith.constant dense<0.000000e+00> : vector<64xf32>
    %21 = vector.multi_reduction <add>, %20, %cst_6 [1] : vector<64x128xf32> to vector<64xf32>
    %22 = vector.shape_cast %21 : vector<64xf32> to vector<64x1xf32>
    %cst_7 = arith.constant 1.000000e-10 : f32
    %23 = vector.broadcast %cst_7 : f32 to vector<64x1xf32>
    %24 = arith.addf %22, %23 : vector<64x1xf32>
    %25 = arith.divf %7, %24 : vector<64x1xf32>
    %26 = vector.broadcast %25 : vector<64x1xf32> to vector<64x128xf32>
    %27 = arith.mulf %26, %19 : vector<64x128xf32>
    %28 = arith.subf %0, %27 : vector<64x128xf32>
    %cst_8 = arith.constant 0xFF800000 : f32
    %29 = vector.broadcast %cst_8 : f32 to vector<64x128xf32>
    %30 = arith.select %16, %29, %28 : vector<64x128xi1>, vector<64x128xf32>
    %cst_9 = arith.constant dense<0xFF800000> : vector<64xf32>
    %31 = vector.multi_reduction <maximumf>, %30, %cst_9 [1] : vector<64x128xf32> to vector<64xf32>
    %32 = vector.shape_cast %31 : vector<64xf32> to vector<64x1xf32>
    %33 = vector.broadcast %32 : vector<64x1xf32> to vector<64x128xf32>
    %34 = arith.cmpf oge, %30, %33 : vector<64x128xf32>
    %c128_i32_10 = arith.constant 128 : i32
    %35 = vector.broadcast %c128_i32_10 : i32 to vector<64x128xi32>
    %36 = arith.select %34, %2, %35 : vector<64x128xi1>, vector<64x128xi32>
    %cst_11 = arith.constant dense<2147483647> : vector<64xi32>
    %37 = vector.multi_reduction <minsi>, %36, %cst_11 [1] : vector<64x128xi32> to vector<64xi32>
    %38 = vector.shape_cast %37 : vector<64xi32> to vector<64x1xi32>
    %39 = vector.broadcast %38 : vector<64x1xi32> to vector<64x128xi32>
    %40 = arith.cmpi eq, %2, %39 : vector<64x128xi32>
    %41 = arith.ori %16, %40 : vector<64x128xi1>
    %42 = arith.extui %40 : vector<64x128xi1> to vector<64x128xi32>
    %43 = arith.sitofp %42 : vector<64x128xi32> to vector<64x128xf32>
    %cst_12 = arith.constant dense<0.000000e+00> : vector<64x128xf32>
    %44 = tpu.matmul %43, %1, %cst_12 {dimension_numbers = #tpu.dot_dimension_numbers<[1], [0], [0], [1], [0, 0, 1, 1], [], []>} : vector<64x128xf32>, vector<128x128xf32>, vector<64x128xf32> -> vector<64x128xf32>
    %45 = arith.mulf %43, %19 : vector<64x128xf32>
    %cst_13 = arith.constant dense<0.000000e+00> : vector<64xf32>
    %46 = vector.multi_reduction <add>, %45, %cst_13 [1] : vector<64x128xf32> to vector<64xf32>
    %47 = vector.shape_cast %46 : vector<64xf32> to vector<64x1xf32>
    %48 = arith.mulf %43, %44 : vector<64x128xf32>
    %cst_14 = arith.constant dense<0.000000e+00> : vector<64xf32>
    %49 = vector.multi_reduction <add>, %48, %cst_14 [1] : vector<64x128xf32> to vector<64xf32>
    %50 = vector.shape_cast %49 : vector<64xf32> to vector<64x1xf32>
    %51 = arith.mulf %25, %22 : vector<64x1xf32>
    %52 = arith.subf %7, %51 : vector<64x1xf32>
    %53 = arith.mulf %25, %47 : vector<64x1xf32>
    %54 = arith.addf %32, %53 : vector<64x1xf32>
    %cst_15 = arith.constant 1.000000e-10 : f32
    %55 = vector.broadcast %cst_15 : f32 to vector<64x1xf32>
    %56 = arith.addf %22, %55 : vector<64x1xf32>
    %cst_16 = arith.constant 1.000000e-10 : f32
    %57 = vector.broadcast %cst_16 : f32 to vector<64x1xf32>
    %58 = arith.addf %50, %57 : vector<64x1xf32>
    %cst_17 = arith.constant 1.000000e+00 : f32
    %59 = vector.broadcast %cst_17 : f32 to vector<64x1xf32>
    %60 = arith.divf %59, %56 : vector<64x1xf32>
    %61 = arith.mulf %47, %60 : vector<64x1xf32>
    %62 = arith.mulf %61, %47 : vector<64x1xf32>
    %63 = arith.subf %58, %62 : vector<64x1xf32>
    %64 = arith.mulf %61, %52 : vector<64x1xf32>
    %65 = arith.subf %32, %64 : vector<64x1xf32>
    %66 = arith.divf %65, %63 : vector<64x1xf32>
    %67 = arith.mulf %47, %66 : vector<64x1xf32>
    %68 = arith.subf %52, %67 : vector<64x1xf32>
    %69 = arith.divf %68, %56 : vector<64x1xf32>
    %70 = vector.broadcast %69 : vector<64x1xf32> to vector<64x128xf32>
    %71 = arith.mulf %70, %19 : vector<64x128xf32>
    %72 = arith.subf %0, %71 : vector<64x128xf32>
    %73 = vector.broadcast %66 : vector<64x1xf32> to vector<64x128xf32>
    %74 = arith.mulf %73, %44 : vector<64x128xf32>
    %75 = arith.subf %72, %74 : vector<64x128xf32>
    %cst_18 = arith.constant 0xFF800000 : f32
    %76 = vector.broadcast %cst_18 : f32 to vector<64x128xf32>
    %77 = arith.select %41, %76, %75 : vector<64x128xi1>, vector<64x128xf32>
    %cst_19 = arith.constant dense<0xFF800000> : vector<64xf32>
    %78 = vector.multi_reduction <maximumf>, %77, %cst_19 [1] : vector<64x128xf32> to vector<64xf32>
    %79 = vector.shape_cast %78 : vector<64xf32> to vector<64x1xf32>
    %80 = vector.broadcast %79 : vector<64x1xf32> to vector<64x128xf32>
    %81 = arith.cmpf oge, %77, %80 : vector<64x128xf32>
    %c128_i32_20 = arith.constant 128 : i32
    %82 = vector.broadcast %c128_i32_20 : i32 to vector<64x128xi32>
    %83 = arith.select %81, %2, %82 : vector<64x128xi1>, vector<64x128xi32>
    %cst_21 = arith.constant dense<2147483647> : vector<64xi32>
    %84 = vector.multi_reduction <minsi>, %83, %cst_21 [1] : vector<64x128xi32> to vector<64xi32>
    %85 = vector.shape_cast %84 : vector<64xi32> to vector<64x1xi32>
    %86 = vector.broadcast %85 : vector<64x1xi32> to vector<64x128xi32>
    %87 = arith.cmpi eq, %2, %86 : vector<64x128xi32>
    %88 = arith.ori %41, %87 : vector<64x128xi1>
    %89 = arith.extui %87 : vector<64x128xi1> to vector<64x128xi32>
    %90 = arith.sitofp %89 : vector<64x128xi32> to vector<64x128xf32>
    %cst_22 = arith.constant dense<0.000000e+00> : vector<64x128xf32>
    %91 = tpu.matmul %90, %1, %cst_22 {dimension_numbers = #tpu.dot_dimension_numbers<[1], [0], [0], [1], [0, 0, 1, 1], [], []>} : vector<64x128xf32>, vector<128x128xf32>, vector<64x128xf32> -> vector<64x128xf32>
    %92 = arith.mulf %90, %19 : vector<64x128xf32>
    %cst_23 = arith.constant dense<0.000000e+00> : vector<64xf32>
    %93 = vector.multi_reduction <add>, %92, %cst_23 [1] : vector<64x128xf32> to vector<64xf32>
    %94 = vector.shape_cast %93 : vector<64xf32> to vector<64x1xf32>
    %95 = arith.mulf %90, %44 : vector<64x128xf32>
    %cst_24 = arith.constant dense<0.000000e+00> : vector<64xf32>
    %96 = vector.multi_reduction <add>, %95, %cst_24 [1] : vector<64x128xf32> to vector<64xf32>
    %97 = vector.shape_cast %96 : vector<64xf32> to vector<64x1xf32>
    %98 = arith.mulf %90, %91 : vector<64x128xf32>
    %cst_25 = arith.constant dense<0.000000e+00> : vector<64xf32>
    %99 = vector.multi_reduction <add>, %98, %cst_25 [1] : vector<64x128xf32> to vector<64xf32>
    %100 = vector.shape_cast %99 : vector<64xf32> to vector<64x1xf32>
    %101 = arith.mulf %69, %22 : vector<64x1xf32>
    %102 = arith.subf %7, %101 : vector<64x1xf32>
    %103 = arith.mulf %66, %47 : vector<64x1xf32>
    %104 = arith.subf %102, %103 : vector<64x1xf32>
    %105 = arith.mulf %69, %47 : vector<64x1xf32>
    %106 = arith.subf %54, %105 : vector<64x1xf32>
    %107 = arith.mulf %66, %50 : vector<64x1xf32>
    %108 = arith.subf %106, %107 : vector<64x1xf32>
    %109 = arith.mulf %69, %94 : vector<64x1xf32>
    %110 = arith.addf %79, %109 : vector<64x1xf32>
    %111 = arith.mulf %66, %97 : vector<64x1xf32>
    %112 = arith.addf %110, %111 : vector<64x1xf32>
    %cst_26 = arith.constant 1.000000e-10 : f32
    %113 = vector.broadcast %cst_26 : f32 to vector<64x1xf32>
    %114 = arith.addf %22, %113 : vector<64x1xf32>
    %cst_27 = arith.constant 1.000000e-10 : f32
    %115 = vector.broadcast %cst_27 : f32 to vector<64x1xf32>
    %116 = arith.addf %50, %115 : vector<64x1xf32>
    %cst_28 = arith.constant 1.000000e-10 : f32
    %117 = vector.broadcast %cst_28 : f32 to vector<64x1xf32>
    %118 = arith.addf %100, %117 : vector<64x1xf32>
    %cst_29 = arith.constant 1.000000e+00 : f32
    %119 = vector.broadcast %cst_29 : f32 to vector<64x1xf32>
    %120 = arith.divf %119, %114 : vector<64x1xf32>
    %121 = arith.mulf %47, %120 : vector<64x1xf32>
    %122 = arith.mulf %121, %47 : vector<64x1xf32>
    %123 = arith.subf %116, %122 : vector<64x1xf32>
    %124 = arith.mulf %121, %94 : vector<64x1xf32>
    %125 = arith.subf %97, %124 : vector<64x1xf32>
    %126 = arith.mulf %121, %104 : vector<64x1xf32>
    %127 = arith.subf %108, %126 : vector<64x1xf32>
    %128 = arith.mulf %94, %120 : vector<64x1xf32>
    %129 = arith.mulf %128, %47 : vector<64x1xf32>
    %130 = arith.subf %97, %129 : vector<64x1xf32>
    %131 = arith.mulf %128, %94 : vector<64x1xf32>
    %132 = arith.subf %118, %131 : vector<64x1xf32>
    %133 = arith.mulf %128, %104 : vector<64x1xf32>
    %134 = arith.subf %79, %133 : vector<64x1xf32>
    %cst_30 = arith.constant 1.000000e+00 : f32
    %135 = vector.broadcast %cst_30 : f32 to vector<64x1xf32>
    %136 = arith.divf %135, %123 : vector<64x1xf32>
    %137 = arith.mulf %130, %136 : vector<64x1xf32>
    %138 = arith.mulf %137, %125 : vector<64x1xf32>
    %139 = arith.subf %132, %138 : vector<64x1xf32>
    %140 = arith.mulf %137, %127 : vector<64x1xf32>
    %141 = arith.subf %134, %140 : vector<64x1xf32>
    %142 = arith.divf %141, %139 : vector<64x1xf32>
    %143 = arith.mulf %125, %142 : vector<64x1xf32>
    %144 = arith.subf %127, %143 : vector<64x1xf32>
    %145 = arith.divf %144, %123 : vector<64x1xf32>
    %146 = arith.mulf %47, %145 : vector<64x1xf32>
    %147 = arith.subf %104, %146 : vector<64x1xf32>
    %148 = arith.mulf %94, %142 : vector<64x1xf32>
    %149 = arith.subf %147, %148 : vector<64x1xf32>
    %150 = arith.divf %149, %114 : vector<64x1xf32>
    %151 = vector.broadcast %150 : vector<64x1xf32> to vector<64x128xf32>
    %152 = arith.mulf %151, %19 : vector<64x128xf32>
    %153 = arith.subf %0, %152 : vector<64x128xf32>
    %154 = vector.broadcast %145 : vector<64x1xf32> to vector<64x128xf32>
    %155 = arith.mulf %154, %44 : vector<64x128xf32>
    %156 = arith.subf %153, %155 : vector<64x128xf32>
    %157 = vector.broadcast %142 : vector<64x1xf32> to vector<64x128xf32>
    %158 = arith.mulf %157, %91 : vector<64x128xf32>
    %159 = arith.subf %156, %158 : vector<64x128xf32>
    %cst_31 = arith.constant 0xFF800000 : f32
    %160 = vector.broadcast %cst_31 : f32 to vector<64x128xf32>
    %161 = arith.select %88, %160, %159 : vector<64x128xi1>, vector<64x128xf32>
    %cst_32 = arith.constant dense<0xFF800000> : vector<64xf32>
    %162 = vector.multi_reduction <maximumf>, %161, %cst_32 [1] : vector<64x128xf32> to vector<64xf32>
    %163 = vector.shape_cast %162 : vector<64xf32> to vector<64x1xf32>
    %164 = vector.broadcast %163 : vector<64x1xf32> to vector<64x128xf32>
    %165 = arith.cmpf oge, %161, %164 : vector<64x128xf32>
    %c128_i32_33 = arith.constant 128 : i32
    %166 = vector.broadcast %c128_i32_33 : i32 to vector<64x128xi32>
    %167 = arith.select %165, %2, %166 : vector<64x128xi1>, vector<64x128xi32>
    %cst_34 = arith.constant dense<2147483647> : vector<64xi32>
    %168 = vector.multi_reduction <minsi>, %167, %cst_34 [1] : vector<64x128xi32> to vector<64xi32>
    %169 = vector.shape_cast %168 : vector<64xi32> to vector<64x1xi32>
    %170 = vector.broadcast %169 : vector<64x1xi32> to vector<64x128xi32>
    %171 = arith.cmpi eq, %2, %170 : vector<64x128xi32>
    %172 = arith.extui %171 : vector<64x128xi1> to vector<64x128xi32>
    %173 = arith.sitofp %172 : vector<64x128xi32> to vector<64x128xf32>
    %cst_35 = arith.constant dense<0.000000e+00> : vector<64x128xf32>
    %174 = tpu.matmul %173, %1, %cst_35 {dimension_numbers = #tpu.dot_dimension_numbers<[1], [0], [0], [1], [0, 0, 1, 1], [], []>} : vector<64x128xf32>, vector<128x128xf32>, vector<64x128xf32> -> vector<64x128xf32>
    %175 = arith.mulf %173, %19 : vector<64x128xf32>
    %cst_36 = arith.constant dense<0.000000e+00> : vector<64xf32>
    %176 = vector.multi_reduction <add>, %175, %cst_36 [1] : vector<64x128xf32> to vector<64xf32>
    %177 = vector.shape_cast %176 : vector<64xf32> to vector<64x1xf32>
    %178 = arith.mulf %173, %44 : vector<64x128xf32>
    %cst_37 = arith.constant dense<0.000000e+00> : vector<64xf32>
    %179 = vector.multi_reduction <add>, %178, %cst_37 [1] : vector<64x128xf32> to vector<64xf32>
    %180 = vector.shape_cast %179 : vector<64xf32> to vector<64x1xf32>
    %181 = arith.mulf %173, %91 : vector<64x128xf32>
    %cst_38 = arith.constant dense<0.000000e+00> : vector<64xf32>
    %182 = vector.multi_reduction <add>, %181, %cst_38 [1] : vector<64x128xf32> to vector<64xf32>
    %183 = vector.shape_cast %182 : vector<64xf32> to vector<64x1xf32>
    %184 = arith.mulf %173, %174 : vector<64x128xf32>
    %cst_39 = arith.constant dense<0.000000e+00> : vector<64xf32>
    %185 = vector.multi_reduction <add>, %184, %cst_39 [1] : vector<64x128xf32> to vector<64xf32>
    %186 = vector.shape_cast %185 : vector<64xf32> to vector<64x1xf32>
    %187 = arith.mulf %150, %22 : vector<64x1xf32>
    %188 = arith.subf %7, %187 : vector<64x1xf32>
    %189 = arith.mulf %145, %47 : vector<64x1xf32>
    %190 = arith.subf %188, %189 : vector<64x1xf32>
    %191 = arith.mulf %142, %94 : vector<64x1xf32>
    %192 = arith.subf %190, %191 : vector<64x1xf32>
    %193 = arith.mulf %150, %47 : vector<64x1xf32>
    %194 = arith.subf %54, %193 : vector<64x1xf32>
    %195 = arith.mulf %145, %50 : vector<64x1xf32>
    %196 = arith.subf %194, %195 : vector<64x1xf32>
    %197 = arith.mulf %142, %97 : vector<64x1xf32>
    %198 = arith.subf %196, %197 : vector<64x1xf32>
    %199 = arith.mulf %150, %94 : vector<64x1xf32>
    %200 = arith.subf %112, %199 : vector<64x1xf32>
    %201 = arith.mulf %145, %97 : vector<64x1xf32>
    %202 = arith.subf %200, %201 : vector<64x1xf32>
    %203 = arith.mulf %142, %100 : vector<64x1xf32>
    %204 = arith.subf %202, %203 : vector<64x1xf32>
    %cst_40 = arith.constant 1.000000e-10 : f32
    %205 = vector.broadcast %cst_40 : f32 to vector<64x1xf32>
    %206 = arith.addf %22, %205 : vector<64x1xf32>
    %cst_41 = arith.constant 1.000000e-10 : f32
    %207 = vector.broadcast %cst_41 : f32 to vector<64x1xf32>
    %208 = arith.addf %50, %207 : vector<64x1xf32>
    %cst_42 = arith.constant 1.000000e-10 : f32
    %209 = vector.broadcast %cst_42 : f32 to vector<64x1xf32>
    %210 = arith.addf %100, %209 : vector<64x1xf32>
    %cst_43 = arith.constant 1.000000e-10 : f32
    %211 = vector.broadcast %cst_43 : f32 to vector<64x1xf32>
    %212 = arith.addf %186, %211 : vector<64x1xf32>
    %cst_44 = arith.constant 1.000000e+00 : f32
    %213 = vector.broadcast %cst_44 : f32 to vector<64x1xf32>
    %214 = arith.divf %213, %206 : vector<64x1xf32>
    %215 = arith.mulf %47, %214 : vector<64x1xf32>
    %216 = arith.mulf %215, %47 : vector<64x1xf32>
    %217 = arith.subf %208, %216 : vector<64x1xf32>
    %218 = arith.mulf %215, %94 : vector<64x1xf32>
    %219 = arith.subf %97, %218 : vector<64x1xf32>
    %220 = arith.mulf %215, %177 : vector<64x1xf32>
    %221 = arith.subf %180, %220 : vector<64x1xf32>
    %222 = arith.mulf %215, %192 : vector<64x1xf32>
    %223 = arith.subf %198, %222 : vector<64x1xf32>
    %224 = arith.mulf %94, %214 : vector<64x1xf32>
    %225 = arith.mulf %224, %47 : vector<64x1xf32>
    %226 = arith.subf %97, %225 : vector<64x1xf32>
    %227 = arith.mulf %224, %94 : vector<64x1xf32>
    %228 = arith.subf %210, %227 : vector<64x1xf32>
    %229 = arith.mulf %224, %177 : vector<64x1xf32>
    %230 = arith.subf %183, %229 : vector<64x1xf32>
    %231 = arith.mulf %224, %192 : vector<64x1xf32>
    %232 = arith.subf %204, %231 : vector<64x1xf32>
    %233 = arith.mulf %177, %214 : vector<64x1xf32>
    %234 = arith.mulf %233, %47 : vector<64x1xf32>
    %235 = arith.subf %180, %234 : vector<64x1xf32>
    %236 = arith.mulf %233, %94 : vector<64x1xf32>
    %237 = arith.subf %183, %236 : vector<64x1xf32>
    %238 = arith.mulf %233, %177 : vector<64x1xf32>
    %239 = arith.subf %212, %238 : vector<64x1xf32>
    %240 = arith.mulf %233, %192 : vector<64x1xf32>
    %241 = arith.subf %163, %240 : vector<64x1xf32>
    %cst_45 = arith.constant 1.000000e+00 : f32
    %242 = vector.broadcast %cst_45 : f32 to vector<64x1xf32>
    %243 = arith.divf %242, %217 : vector<64x1xf32>
    %244 = arith.mulf %226, %243 : vector<64x1xf32>
    %245 = arith.mulf %244, %219 : vector<64x1xf32>
    %246 = arith.subf %228, %245 : vector<64x1xf32>
    %247 = arith.mulf %244, %221 : vector<64x1xf32>
    %248 = arith.subf %230, %247 : vector<64x1xf32>
    %249 = arith.mulf %244, %223 : vector<64x1xf32>
    %250 = arith.subf %232, %249 : vector<64x1xf32>
    %251 = arith.mulf %235, %243 : vector<64x1xf32>
    %252 = arith.mulf %251, %219 : vector<64x1xf32>
    %253 = arith.subf %237, %252 : vector<64x1xf32>
    %254 = arith.mulf %251, %221 : vector<64x1xf32>
    %255 = arith.subf %239, %254 : vector<64x1xf32>
    %256 = arith.mulf %251, %223 : vector<64x1xf32>
    %257 = arith.subf %241, %256 : vector<64x1xf32>
    %cst_46 = arith.constant 1.000000e+00 : f32
    %258 = vector.broadcast %cst_46 : f32 to vector<64x1xf32>
    %259 = arith.divf %258, %246 : vector<64x1xf32>
    %260 = arith.mulf %253, %259 : vector<64x1xf32>
    %261 = arith.mulf %260, %248 : vector<64x1xf32>
    %262 = arith.subf %255, %261 : vector<64x1xf32>
    %263 = arith.mulf %260, %250 : vector<64x1xf32>
    %264 = arith.subf %257, %263 : vector<64x1xf32>
    %265 = arith.divf %264, %262 : vector<64x1xf32>
    %266 = arith.mulf %248, %265 : vector<64x1xf32>
    %267 = arith.subf %250, %266 : vector<64x1xf32>
    %268 = arith.divf %267, %246 : vector<64x1xf32>
    %269 = arith.mulf %219, %268 : vector<64x1xf32>
    %270 = arith.subf %223, %269 : vector<64x1xf32>
    %271 = arith.mulf %221, %265 : vector<64x1xf32>
    %272 = arith.subf %270, %271 : vector<64x1xf32>
    %273 = arith.divf %272, %217 : vector<64x1xf32>
    %274 = arith.mulf %47, %273 : vector<64x1xf32>
    %275 = arith.subf %192, %274 : vector<64x1xf32>
    %276 = arith.mulf %94, %268 : vector<64x1xf32>
    %277 = arith.subf %275, %276 : vector<64x1xf32>
    %278 = arith.mulf %177, %265 : vector<64x1xf32>
    %279 = arith.subf %277, %278 : vector<64x1xf32>
    %280 = arith.divf %279, %206 : vector<64x1xf32>
    %cst_47 = arith.constant 0.000000e+00 : f32
    %281 = vector.broadcast %cst_47 : f32 to vector<64x128xf32>
    %282 = vector.broadcast %13 : vector<64x1xi32> to vector<64x128xi32>
    %283 = arith.cmpi eq, %2, %282 : vector<64x128xi32>
    %284 = vector.shape_cast %280 : vector<64x1xf32> to vector<64x1xf32>
    %285 = vector.broadcast %284 : vector<64x1xf32> to vector<64x128xf32>
    %286 = arith.select %283, %285, %281 : vector<64x128xi1>, vector<64x128xf32>
    %287 = vector.broadcast %38 : vector<64x1xi32> to vector<64x128xi32>
    %288 = arith.cmpi eq, %2, %287 : vector<64x128xi32>
    %289 = vector.shape_cast %273 : vector<64x1xf32> to vector<64x1xf32>
    %290 = vector.broadcast %289 : vector<64x1xf32> to vector<64x128xf32>
    %291 = arith.select %288, %290, %286 : vector<64x128xi1>, vector<64x128xf32>
    %292 = vector.broadcast %85 : vector<64x1xi32> to vector<64x128xi32>
    %293 = arith.cmpi eq, %2, %292 : vector<64x128xi32>
    %294 = vector.shape_cast %268 : vector<64x1xf32> to vector<64x1xf32>
    %295 = vector.broadcast %294 : vector<64x1xf32> to vector<64x128xf32>
    %296 = arith.select %293, %295, %291 : vector<64x128xi1>, vector<64x128xf32>
    %297 = vector.broadcast %169 : vector<64x1xi32> to vector<64x128xi32>
    %298 = arith.cmpi eq, %2, %297 : vector<64x128xi32>
    %299 = vector.shape_cast %265 : vector<64x1xf32> to vector<64x1xf32>
    %300 = vector.broadcast %299 : vector<64x1xf32> to vector<64x128xf32>
    %301 = arith.select %298, %300, %296 : vector<64x128xi1>, vector<64x128xf32>
    %cst_48 = arith.constant -1.000000e+07 : f32
    %cst_49 = arith.constant 1.000000e+07 : f32
    %302 = vector.broadcast %cst_48 : f32 to vector<64x128xf32>
    %303 = arith.maximumf %302, %301 : vector<64x128xf32>
    %304 = vector.broadcast %cst_49 : f32 to vector<64x128xf32>
    %305 = arith.minimumf %304, %303 : vector<64x128xf32>
    %c0_50 = arith.constant 0 : index
    %c0_51 = arith.constant 0 : index
    %306 = vector.load %arg3[%c0_50, %c0_51] : memref<64x128xf32, #tpu.memory_space<vmem>>, vector<64x128xf32>
    tpu.vector_store %arg3[%c0_50, %c0_51], %305 {strides = array<i32>} : memref<64x128xf32, #tpu.memory_space<vmem>>, vector<64x128xf32>,
    return
  }
  func.func @transform_0(%arg0: i32) -> (i32, i32) {
    %c0_i32 = arith.constant 0 : i32
    %c0_i32_0 = arith.constant 0 : i32
    return %arg0, %c0_i32 : i32, i32
  }
  func.func @transform_1(%arg0: i32) -> (i32, i32) {
    %c0_i32 = arith.constant 0 : i32
    %c0_i32_0 = arith.constant 0 : i32
    %c0_i32_1 = arith.constant 0 : i32
    return %c0_i32, %c0_i32_0 : i32, i32
  }
  func.func @transform_2(%arg0: i32) -> (i32, i32) {
    %c0_i32 = arith.constant 0 : i32
    %c0_i32_0 = arith.constant 0 : i32
    return %arg0, %c0_i32 : i32, i32
  }
}

</mosaic_0001>

<llo_original>
// kernel: tpu_custom_call.1
$region0: #{tpu_custom_call.1}
  #allocation0 [shape = 'u32[]', space=smem, size = 0x4, offset = 0x4, fixed_abs, tag = 'smem constant byte address 0x4 - core index']
  #allocation1 [shape = 'u32[72,128]{1,0:T(1,128)}', space=vmem, size = 0x9000, scoped, tag = 'internal scratch']
  %s0 = inlined_call_operand.hbm [shape: f32[128,128], index: 0, kind: input, shape index: {}]
  %s1 = inlined_call_operand.hbm [shape: f32[128,128], index: 1, kind: input, shape index: {}]
  %s2 = inlined_call_operand.hbm [shape: f32[128,128], index: 2, kind: output, shape index: {}]
  %s3 = sld [smem:[#allocation0]]
  $region49: #{tpu_custom_call.1} parent=0
    _
  %s5 = ssub.s32 1, %s3
  %s6 = scalar_select 0, %s5, %s3
  $region1: #{tpu_custom_call.1} parent=0
    #allocation2 [shape = 'u8[65536]{0}', space=vmem, size = 0x10000, scoped, tag = 'input window, operand 0']
    #allocation3 [shape = 's32[2]{0}', space=sflag, size = 0x8, scoped, tag = 'scoped memory for tpu_custom_call.1']
    #allocation4 [shape = 's32[2]{0}', space=sflag, size = 0x8, scoped, tag = 'scoped memory for tpu_custom_call.1']
    #allocation5 [shape = 'u8[65536]{0}', space=vmem, size = 0x10000, scoped, tag = 'input window, operand 1, single buffered']
    #allocation6 [shape = 's32[1]{0}', space=sflag, size = 0x4, scoped, tag = 'scoped memory for tpu_custom_call.1']
    #allocation7 [shape = 'u8[65536]{0}', space=vmem, size = 0x10000, scoped, tag = 'output window, operand 0']
    %7 = vsyncpa [#allocation3], 0
    %s8 = scalar_lea.sflag [#allocation3], 1
    %9 = vsyncpa %s8, 0
    %10 = vsyncpa [#allocation6], 0
    %11 = vsyncpa [#allocation4], 0
    %s12 = scalar_lea.sflag [#allocation4], 1
    %13 = vsyncpa %s12, 0
    loop: start=0, step=1, limit=4
    $region2: #{tpu_custom_call.1} parent=1 // loop_pre_header
      _
    $region3: #{tpu_custom_call.1} parent=1 // loop_header
      %s15 = sphi 0, %s19
      %p16 = scmp.ge.s32.totalorder %s15, 4
      %s25 = sphi 0, %s27
      %s28 = sphi 0, %s25
      %s29 = sphi 0, %s28
      %s45 = sphi 0, %s29
      %s49 = sphi 0, %s49
      %s51 = sphi 0, %s49
      %s52 = sphi 0, %s51
      %s66 = sphi 0, %s52
      %s72 = sphi 0, %s74
      %s75 = sphi 0, %s72
      %s76 = sphi 0, %s75
      %s92 = sphi 0, %s76
    $region4: #{tpu_custom_call.1} parent=1 // loop_header_branch
      %18 = sbr.rel (%p16) target = $region8
    $region5: #{tpu_custom_call.1} parent=1 // loop_body
      %s20 = ssub.s32 %s15, 1
      %s21 = ssub.s32 %s15, 2
      %s22 = sadd.s32 %s15, 1
      %s23 = ssub.s32 %s15, %s22
      %p24 = scmp.eq.s32.totalorder %s23, 0
      %s26 = sadd.s32 %s25, 1
      %s27 = scalar_select %p24, %s25, %s26
      %p30 = pneg %p24
      %p31 = scmp.eq.s32.totalorder %s15, 1
      %p32 = por %p30, %p31
      %p33 = scmp.ne.s32.totalorder %s25, %s28
      %p34 = scmp.eq.s32.totalorder %s15, 0
      %p35 = por %p33, %p34
      %p36 = scmp.ne.s32.totalorder %s25, %s28
      %p37 = scmp.eq.s32.totalorder %s20, 1
      %p38 = por %p36, %p37
      %p39 = scmp.ne.s32.totalorder %s28, %s29
      %p40 = scmp.eq.s32.totalorder %s20, 0
      %p41 = por %p39, %p40
      %p42 = scmp.ne.s32.totalorder %s28, %s29
      %p43 = scmp.eq.s32.totalorder %s21, 1
      %p44 = por %p42, %p43
      %p46 = scmp.ne.s32.totalorder %s29, %s45
      %p47 = scmp.eq.s32.totalorder %s21, 0
      %p48 = por %p46, %p47
      %s50 = sadd.s32 %s49, 1
      %p53 = scmp.eq.s32.totalorder %s15, 1
      %p54 = scmp.ne.s32.totalorder %s49, %s51
      %p55 = scmp.eq.s32.totalorder %s15, 0
      %p56 = por %p54, %p55
      %p57 = scmp.ne.s32.totalorder %s49, %s51
      %p58 = scmp.eq.s32.totalorder %s20, 1
      %p59 = por %p57, %p58
      %p60 = scmp.ne.s32.totalorder %s51, %s52
      %p61 = scmp.eq.s32.totalorder %s20, 0
      %p62 = por %p60, %p61
      %p63 = scmp.ne.s32.totalorder %s51, %s52
      %p64 = scmp.eq.s32.totalorder %s21, 1
      %p65 = por %p63, %p64
      %p67 = scmp.ne.s32.totalorder %s52, %s66
      %p68 = scmp.eq.s32.totalorder %s21, 0
      %p69 = por %p67, %p68
      %s70 = ssub.s32 %s15, %s22
      %p71 = scmp.eq.s32.totalorder %s70, 0
      %s73 = sadd.s32 %s72, 1
      %s74 = scalar_select %p71, %s72, %s73
      %p77 = pneg %p71
      %p78 = scmp.eq.s32.totalorder %s15, 1
      %p79 = por %p77, %p78
      %p80 = scmp.ne.s32.totalorder %s72, %s75
      %p81 = scmp.eq.s32.totalorder %s15, 0
      %p82 = por %p80, %p81
      %p83 = scmp.ne.s32.totalorder %s72, %s75
      %p84 = scmp.eq.s32.totalorder %s20, 1
      %p85 = por %p83, %p84
      %p86 = scmp.ne.s32.totalorder %s75, %s76
      %p87 = scmp.eq.s32.totalorder %s20, 0
      %p88 = por %p86, %p87
      %p89 = scmp.ne.s32.totalorder %s75, %s76
      %p90 = scmp.eq.s32.totalorder %s21, 1
      %p91 = por %p89, %p90
      %p93 = scmp.ne.s32.totalorder %s76, %s92
      %p94 = scmp.eq.s32.totalorder %s21, 0
      %p95 = por %p93, %p94
      %p96 = scmp.le.s32.totalorder 1, %s15
      %p97 = scmp.lt.s32.totalorder %s15, 3
      %p98 = pnand %p96, %p97
      %p99 = pneg %p98
      // Predicated region
      $region9: #{tpu_custom_call.1} parent=5 // pred_check
        _
      $region10: #{tpu_custom_call.1} parent=5 // pred_check_branch
        %101 = sbr.rel (%p98) target = $region12
      $region11: #{tpu_custom_call.1} parent=5 // pred_region
        %s102 = ssub.s32 %s15, 1
        // Predicated region
        $region13: #{tpu_custom_call.1} parent=11 // pred_check
          %p103 = pneg %p62
        $region14: #{tpu_custom_call.1} parent=11 // pred_check_branch
          %105 = sbr.rel (%p103) target = $region16
        $region15: #{tpu_custom_call.1} parent=11 // pred_region
          %107 = vsyncadd [#allocation6], 0
          %s108 = sshll.u32 %s1, 4
          %s109 = int_to_ptr.hbm [resolvable:$true] %s108
          %s110 = sshll.u32 [#allocation5], 4
          %s111 = int_to_ptr.vmem [resolvable:$true] %s110
          %116 = dma.hbm_to_vmem [thread:$0]  %s109, 2048, %s111, [#allocation6], 128, 128, 8
        $region16: #{tpu_custom_call.1} parent=11 // pred_fallthru
          _
      $region12: #{tpu_custom_call.1} parent=5 // pred_fallthru
        _
      %p117 = scmp.lt.s32.totalorder %s15, 2
      // Predicated region
      $region17: #{tpu_custom_call.1} parent=5 // pred_check
        %p118 = pneg %p117
      $region18: #{tpu_custom_call.1} parent=5 // pred_check_branch
        %120 = sbr.rel (%p118) target = $region20
      $region19: #{tpu_custom_call.1} parent=5 // pred_region
        // Predicated region
        $region21: #{tpu_custom_call.1} parent=19 // pred_check
          %p121 = pneg %p35
        $region22: #{tpu_custom_call.1} parent=19 // pred_check_branch
          %123 = sbr.rel (%p121) target = $region24
        $region23: #{tpu_custom_call.1} parent=19 // pred_region
          %s124 = sand.u32 %s25, 1
          %s125 = scalar_lea.sflag [#allocation3], %s124
          %s126 = sand.u32 %s25, 1
          %s127 = smul.addr %s126, 64
          %s128 = scalar_lea.vmem [#allocation2], %s127
          %s129 = smul.u32 8, %s15
          %131 = vsyncadd %s125, 0
          %s132 = smul.addr %s129, 8
          %s133 = scalar_lea.hbm %s0, %s132
          %s134 = sshll.u32 %s133, 4
          %s135 = int_to_ptr.hbm [resolvable:$true] %s134
          %s136 = sshll.u32 %s128, 4
          %s137 = int_to_ptr.vmem [resolvable:$true] %s136
          %142 = dma.hbm_to_vmem [thread:$0]  %s135, 1024, %s137, %s125, 128, 128, 8
        $region24: #{tpu_custom_call.1} parent=19 // pred_fallthru
          _
      $region20: #{tpu_custom_call.1} parent=5 // pred_fallthru
        _
      %p143 = scmp.le.s32.totalorder 1, %s15
      %p144 = scmp.lt.s32.totalorder %s15, 3
      %p145 = pnand %p143, %p144
      %p146 = pneg %p145
      // Predicated region
      $region25: #{tpu_custom_call.1} parent=5 // pred_check
        _
      $region26: #{tpu_custom_call.1} parent=5 // pred_check_branch
        %148 = sbr.rel (%p145) target = $region28
      $region27: #{tpu_custom_call.1} parent=5 // pred_region
        %s149 = ssub.s32 %s15, 1
        %s150 = sand.u32 %s28, 1
        %s151 = scalar_lea.sflag [#allocation3], %s150
        %s152 = sand.u32 %s28, 1
        %s153 = smul.addr %s152, 64
        %s154 = scalar_lea.vmem [#allocation2], %s153
        // Predicated region
        $region29: #{tpu_custom_call.1} parent=27 // pred_check
          %p155 = pneg %p41
        $region30: #{tpu_custom_call.1} parent=27 // pred_check_branch
          %157 = sbr.rel (%p155) target = $region32
        $region31: #{tpu_custom_call.1} parent=27 // pred_region
          %159 = dma.done %s151, 1024
        $region32: #{tpu_custom_call.1} parent=27 // pred_fallthru
          _
        // Predicated region
        $region33: #{tpu_custom_call.1} parent=27 // pred_check
          %p160 = pneg %p62
        $region34: #{tpu_custom_call.1} parent=27 // pred_check_branch
          %162 = sbr.rel (%p160) target = $region36
        $region35: #{tpu_custom_call.1} parent=27 // pred_region
          %164 = dma.done [#allocation6], 2048
        $region36: #{tpu_custom_call.1} parent=27 // pred_fallthru
          _
        %s165 = sand.u32 %s28, 1
        %s166 = scalar_lea.sflag [#allocation3], %s165
        %s167 = sand.u32 %s28, 1
        %s168 = smul.addr %s167, 64
        %s169 = scalar_lea.vmem [#allocation2], %s168
        %p170 = pneg %p41
        %p171 = pneg %p38
        %p172 = pneg %p62
        %p173 = pneg %p59
        %p174 = pneg %p88
        %p175 = pneg %p85
        %s176 = sand.u32 %s75, 1
        %s177 = scalar_lea.sflag [#allocation4], %s176
        %s178 = sand.u32 %s75, 1
        %s179 = smul.addr %s178, 64
        %s180 = scalar_lea.vmem [#allocation7], %s179
        %s181 = smul.u32 8, %s20
        %s182 = smul.u32 8, %s20
        %v183 = vld [vmem:[%s154] sm:$0xff]
        %v184 = vld [vmem:[%s154 + $0x8] sm:$0xff]
        %v185 = vld [vmem:[%s154 + $0x10] sm:$0xff]
        %v186 = vld [vmem:[%s154 + $0x18] sm:$0xff]
        %v187 = vld [vmem:[%s154 + $0x20] sm:$0xff]
        %v188 = vld [vmem:[%s154 + $0x28] sm:$0xff]
        %v189 = vld [vmem:[%s154 + $0x30] sm:$0xff]
        %v190 = vld [vmem:[%s154 + $0x38] sm:$0xff]
        %v191 = vld [vmem:[#allocation5] sm:$0xff]
        %v192 = vld [vmem:[#allocation5 + $0x8] sm:$0xff]
        %v193 = vld [vmem:[#allocation5 + $0x10] sm:$0xff]
        %v194 = vld [vmem:[#allocation5 + $0x18] sm:$0xff]
        %v195 = vld [vmem:[#allocation5 + $0x20] sm:$0xff]
        %v196 = vld [vmem:[#allocation5 + $0x28] sm:$0xff]
        %v197 = vld [vmem:[#allocation5 + $0x30] sm:$0xff]
        %v198 = vld [vmem:[#allocation5 + $0x38] sm:$0xff]
        %v199 = vld [vmem:[#allocation5 + $0x40] sm:$0xff]
        %v200 = vld [vmem:[#allocation5 + $0x48] sm:$0xff]
        %v201 = vld [vmem:[#allocation5 + $0x50] sm:$0xff]
        %v202 = vld [vmem:[#allocation5 + $0x58] sm:$0xff]
        %v203 = vld [vmem:[#allocation5 + $0x60] sm:$0xff]
        %v204 = vld [vmem:[#allocation5 + $0x68] sm:$0xff]
        %v205 = vld [vmem:[#allocation5 + $0x70] sm:$0xff]
        %v206 = vld [vmem:[#allocation5 + $0x78] sm:$0xff]
        %v207 = vlaneseq
        %v208 = vand.u32 %v207, 127
        %209 = vmax.xlane.f32.xlu0 %v183
        %v210 = vpop.xlane.xlu0 %209
        %211 = vmax.xlane.f32.xlu0 %v184
        %v212 = vpop.xlane.xlu0 %211
        %213 = vmax.xlane.f32.xlu0 %v185
        %v214 = vpop.xlane.xlu0 %213
        %215 = vmax.xlane.f32.xlu0 %v186
        %v216 = vpop.xlane.xlu0 %215
        %217 = vmax.xlane.f32.xlu0 %v187
        %v218 = vpop.xlane.xlu0 %217
        %219 = vmax.xlane.f32.xlu0 %v188
        %v220 = vpop.xlane.xlu0 %219
        %221 = vmax.xlane.f32.xlu0 %v189
        %v222 = vpop.xlane.xlu0 %221
        %223 = vmax.xlane.f32.xlu0 %v190
        %v224 = vpop.xlane.xlu0 %223
        %vm225 = vcmp.ge.f32.partialorder %v183, %v210
        %vm226 = vcmp.ge.f32.partialorder %v184, %v212
        %vm227 = vcmp.ge.f32.partialorder %v185, %v214
        %vm228 = vcmp.ge.f32.partialorder %v186, %v216
        %vm229 = vcmp.ge.f32.partialorder %v187, %v218
        %vm230 = vcmp.ge.f32.partialorder %v188, %v220
        %vm231 = vcmp.ge.f32.partialorder %v189, %v222
        %vm232 = vcmp.ge.f32.partialorder %v190, %v224
        %v233 = vsel %vm225, %v208, 128
        %v234 = vsel %vm226, %v208, 128
        %v235 = vsel %vm227, %v208, 128
        %v236 = vsel %vm228, %v208, 128
        %v237 = vsel %vm229, %v208, 128
        %v238 = vsel %vm230, %v208, 128
        %v239 = vsel %vm231, %v208, 128
        %v240 = vsel %vm232, %v208, 128
        %v241 = vand.u32 %v233, 65535
        %v242 = vshra.s32 %v233, 16
        %v243 = vcvt.s32.f32 %v241
        %v244 = vcvt.s32.f32 %v242
        %245 = vmin.xlane.f32.xlu0 %v244
        %v246 = vpop.xlane.xlu0 %245
        %vm247 = vcmp.eq.f32.partialorder %v244, %v246
        %v248 = vsel %vm247, %v243, inf
        %249 = vmin.xlane.f32.xlu0 %v248
        %v250 = vpop.xlane.xlu0 %249
        %v251 = vcvt.f32.s32 %v250
        %v252 = vcvt.f32.s32 %v246
        %v253 = vshll.u32 %v252, 16
        %v254 = vadd.s32 %v253, %v251
        %v255 = vand.u32 %v234, 65535
        %v256 = vshra.s32 %v234, 16
        %v257 = vcvt.s32.f32 %v255
        %v258 = vcvt.s32.f32 %v256
        %259 = vmin.xlane.f32.xlu0 %v258
        %v260 = vpop.xlane.xlu0 %259
        %vm261 = vcmp.eq.f32.partialorder %v258, %v260
        %v262 = vsel %vm261, %v257, inf
        %263 = vmin.xlane.f32.xlu0 %v262
        %v264 = vpop.xlane.xlu0 %263
        %v265 = vcvt.f32.s32 %v264
        %v266 = vcvt.f32.s32 %v260
        %v267 = vshll.u32 %v266, 16
        %v268 = vadd.s32 %v267, %v265
        %v269 = vand.u32 %v235, 65535
        %v270 = vshra.s32 %v235, 16
        %v271 = vcvt.s32.f32 %v269
        %v272 = vcvt.s32.f32 %v270
        %273 = vmin.xlane.f32.xlu0 %v272
        %v274 = vpop.xlane.xlu0 %273
        %vm275 = vcmp.eq.f32.partialorder %v272, %v274
        %v276 = vsel %vm275, %v271, inf
        %277 = vmin.xlane.f32.xlu0 %v276
        %v278 = vpop.xlane.xlu0 %277
        %v279 = vcvt.f32.s32 %v278
        %v280 = vcvt.f32.s32 %v274
        %v281 = vshll.u32 %v280, 16
        %v282 = vadd.s32 %v281, %v279
        %v283 = vand.u32 %v236, 65535
        %v284 = vshra.s32 %v236, 16
        %v285 = vcvt.s32.f32 %v283
        %v286 = vcvt.s32.f32 %v284
        %287 = vmin.xlane.f32.xlu0 %v286
        %v288 = vpop.xlane.xlu0 %287
        %vm289 = vcmp.eq.f32.partialorder %v286, %v288
        %v290 = vsel %vm289, %v285, inf
        %291 = vmin.xlane.f32.xlu0 %v290
        %v292 = vpop.xlane.xlu0 %291
        %v293 = vcvt.f32.s32 %v292
        %v294 = vcvt.f32.s32 %v288
        %v295 = vshll.u32 %v294, 16
        %v296 = vadd.s32 %v295, %v293
        %v297 = vand.u32 %v237, 65535
        %v298 = vshra.s32 %v237, 16
        %v299 = vcvt.s32.f32 %v297
        %v300 = vcvt.s32.f32 %v298
        %301 = vmin.xlane.f32.xlu0 %v300
        %v302 = vpop.xlane.xlu0 %301
        %vm303 = vcmp.eq.f32.partialorder %v300, %v302
        %v304 = vsel %vm303, %v299, inf
        %305 = vmin.xlane.f32.xlu0 %v304
        %v306 = vpop.xlane.xlu0 %305
        %v307 = vcvt.f32.s32 %v306
        %v308 = vcvt.f32.s32 %v302
        %v309 = vshll.u32 %v308, 16
        %v310 = vadd.s32 %v309, %v307
        %v311 = vand.u32 %v238, 65535
        %v312 = vshra.s32 %v238, 16
        %v313 = vcvt.s32.f32 %v311
        %v314 = vcvt.s32.f32 %v312
        %315 = vmin.xlane.f32.xlu0 %v314
        %v316 = vpop.xlane.xlu0 %315
        %vm317 = vcmp.eq.f32.partialorder %v314, %v316
        %v318 = vsel %vm317, %v313, inf
        %319 = vmin.xlane.f32.xlu0 %v318
        %v320 = vpop.xlane.xlu0 %319
        %v321 = vcvt.f32.s32 %v320
        %v322 = vcvt.f32.s32 %v316
        %v323 = vshll.u32 %v322, 16
        %v324 = vadd.s32 %v323, %v321
        %v325 = vand.u32 %v239, 65535
        %v326 = vshra.s32 %v239, 16
        %v327 = vcvt.s32.f32 %v325
        %v328 = vcvt.s32.f32 %v326
        %329 = vmin.xlane.f32.xlu0 %v328
        %v330 = vpop.xlane.xlu0 %329
        %vm331 = vcmp.eq.f32.partialorder %v328, %v330
        %v332 = vsel %vm331, %v327, inf
        %333 = vmin.xlane.f32.xlu0 %v332
        %v334 = vpop.xlane.xlu0 %333
        %v335 = vcvt.f32.s32 %v334
        %v336 = vcvt.f32.s32 %v330
        %v337 = vshll.u32 %v336, 16
        %v338 = vadd.s32 %v337, %v335
        %v339 = vand.u32 %v240, 65535
        %v340 = vshra.s32 %v240, 16
        %v341 = vcvt.s32.f32 %v339
        %v342 = vcvt.s32.f32 %v340
        %343 = vmin.xlane.f32.xlu0 %v342
        %v344 = vpop.xlane.xlu0 %343
        %vm345 = vcmp.eq.f32.partialorder %v342, %v344
        %v346 = vsel %vm345, %v341, inf
        %347 = vmin.xlane.f32.xlu0 %v346
        %v348 = vpop.xlane.xlu0 %347
        %v349 = vcvt.f32.s32 %v348
        %v350 = vcvt.f32.s32 %v344
        %v351 = vshll.u32 %v350, 16
        %v352 = vadd.s32 %v351, %v349
        %vm353 = vcmp.eq.s32.totalorder %v208, %v254
        %vm354 = vcmp.eq.s32.totalorder %v208, %v268
        %vm355 = vcmp.eq.s32.totalorder %v208, %v282
        %vm356 = vcmp.eq.s32.totalorder %v208, %v296
        %vm357 = vcmp.eq.s32.totalorder %v208, %v310
        %vm358 = vcmp.eq.s32.totalorder %v208, %v324
        %vm359 = vcmp.eq.s32.totalorder %v208, %v338
        %vm360 = vcmp.eq.s32.totalorder %v208, %v352
        %v361 = vsel %vm353, 1, 0
        %v362 = vsel %vm354, 1, 0
        %v363 = vsel %vm355, 1, 0
        %v364 = vsel %vm356, 1, 0
        %v365 = vsel %vm357, 1, 0
        %v366 = vsel %vm358, 1, 0
        %v367 = vsel %vm359, 1, 0
        %v368 = vsel %vm360, 1, 0
        %v369 = vcvt.s32.f32 %v361
        %v370 = vcvt.s32.f32 %v362
        %v371 = vcvt.s32.f32 %v363
        %v372 = vcvt.s32.f32 %v364
        %v373 = vcvt.s32.f32 %v365
        %v374 = vcvt.s32.f32 %v366
        %v375 = vcvt.s32.f32 %v367
        %v376 = vcvt.s32.f32 %v368
        %377 = vmatpush.msra.mxu0 %v206
        %378 = vmatpush.msra.mxu0 %v205
        %379 = vmatpush.msra.mxu0 %v204
        %380 = vmatpush.msra.mxu0 %v203
        %381 = vmatpush.msra.mxu0 %v202
        %382 = vmatpush.msra.mxu0 %v201
        %383 = vmatpush.msra.mxu0 %v200
        %384 = vmatpush.msra.mxu0 %v199
        %385 = vmatpush.msra.mxu0 %v198
        %386 = vmatpush.msra.mxu0 %v197
        %387 = vmatpush.msra.mxu0 %v196
        %388 = vmatpush.msra.mxu0 %v195
        %389 = vmatpush.msra.mxu0 %v194
        %390 = vmatpush.msra.mxu0 %v193
        %391 = vmatpush.msra.mxu0 %v192
        %392 = vmatpush.msra.mxu0 %v191
        %393 = vmatmul.f32.gmra.mxu0 %v369
        %v394 = vpop.f32.mrf.mxu0
        %v395 = vadd.f32 0.0, %v394
        %396 = vmatmul.f32.gmra.mxu0 %v370
        %v397 = vpop.f32.mrf.mxu0
        %v398 = vadd.f32 0.0, %v397
        %399 = vmatmul.f32.gmra.mxu0 %v371
        %v400 = vpop.f32.mrf.mxu0
        %v401 = vadd.f32 0.0, %v400
        %402 = vmatmul.f32.gmra.mxu0 %v372
        %v403 = vpop.f32.mrf.mxu0
        %v404 = vadd.f32 0.0, %v403
        %405 = vmatmul.f32.gmra.mxu0 %v373
        %v406 = vpop.f32.mrf.mxu0
        %v407 = vadd.f32 0.0, %v406
        %408 = vmatmul.f32.gmra.mxu0 %v374
        %v409 = vpop.f32.mrf.mxu0
        %v410 = vadd.f32 0.0, %v409
        %411 = vmatmul.f32.gmra.mxu0 %v375
        %v412 = vpop.f32.mrf.mxu0
        %v413 = vadd.f32 0.0, %v412
        %414 = vmatmul.f32.gmra.mxu0 %v376
        %v415 = vpop.f32.mrf.mxu0
        %v416 = vadd.f32 0.0, %v415
        %417 = vdwg.mxu0
        %v418 = vmul.f32 %v369, %v395
        %v419 = vmul.f32 %v370, %v398
        %v420 = vmul.f32 %v371, %v401
        %v421 = vmul.f32 %v372, %v404
        %v422 = vmul.f32 %v373, %v407
        %v423 = vmul.f32 %v374, %v410
        %v424 = vmul.f32 %v375, %v413
        %v425 = vmul.f32 %v376, %v416
        %426 = vadd.xlane.f32.xlu0 %v418
        %v427 = vpop.xlane.xlu0 %426
        %428 = vadd.xlane.f32.xlu0 %v419
        %v429 = vpop.xlane.xlu0 %428
        %430 = vadd.xlane.f32.xlu0 %v420
        %v431 = vpop.xlane.xlu0 %430
        %432 = vadd.xlane.f32.xlu0 %v421
        %v433 = vpop.xlane.xlu0 %432
        %434 = vadd.xlane.f32.xlu0 %v422
        %v435 = vpop.xlane.xlu0 %434
        %436 = vadd.xlane.f32.xlu0 %v423
        %v437 = vpop.xlane.xlu0 %436
        %438 = vadd.xlane.f32.xlu0 %v424
        %v439 = vpop.xlane.xlu0 %438
        %440 = vadd.xlane.f32.xlu0 %v425
        %v441 = vpop.xlane.xlu0 %440
        %v442 = vadd.f32 %v427, 1e-10
        %v443 = vadd.f32 %v429, 1e-10
        %v444 = vadd.f32 %v431, 1e-10
        %v445 = vadd.f32 %v433, 1e-10
        %v446 = vadd.f32 %v435, 1e-10
        %v447 = vadd.f32 %v437, 1e-10
        %v448 = vadd.f32 %v439, 1e-10
        %v449 = vadd.f32 %v441, 1e-10
        %v450 = vrcp.pop %v442
        %v451 = vmul.f32 %v442, %v450
        %v452 = vsub.f32 1.0, %v451
        %v453 = vmul.f32 %v450, %v452
        %v454 = vadd.f32 %v450, %v453
        %vm455 = vweird.f32 %v442
        %vm456 = vweird.f32 %v450
        %vm457 = vmor %vm455, %vm456
        %v458 = vsel %vm457, %v450, %v454
        %v459 = vand.u32 2147483647, %v442
        %vm460 = vcmp.eq.f32.partialorder %v459, 8.507059e+37
        %v461 = vand.u32 %v442, 2147483648
        %v462 = vor.u32 1.1754944e-38, %v461
        %v463 = vsel %vm460, %v462, %v458
        %v464 = vmul.f32 %v210, %v463
        %v465 = vrcp.pop %v443
        %v466 = vmul.f32 %v443, %v465
        %v467 = vsub.f32 1.0, %v466
        %v468 = vmul.f32 %v465, %v467
        %v469 = vadd.f32 %v465, %v468
        %vm470 = vweird.f32 %v443
        %vm471 = vweird.f32 %v465
        %vm472 = vmor %vm470, %vm471
        %v473 = vsel %vm472, %v465, %v469
        %v474 = vand.u32 2147483647, %v443
        %vm475 = vcmp.eq.f32.partialorder %v474, 8.507059e+37
        %v476 = vand.u32 %v443, 2147483648
        %v477 = vor.u32 1.1754944e-38, %v476
        %v478 = vsel %vm475, %v477, %v473
        %v479 = vmul.f32 %v212, %v478
        %v480 = vrcp.pop %v444
        %v481 = vmul.f32 %v444, %v480
        %v482 = vsub.f32 1.0, %v481
        %v483 = vmul.f32 %v480, %v482
        %v484 = vadd.f32 %v480, %v483
        %vm485 = vweird.f32 %v444
        %vm486 = vweird.f32 %v480
        %vm487 = vmor %vm485, %vm486
        %v488 = vsel %vm487, %v480, %v484
        %v489 = vand.u32 2147483647, %v444
        %vm490 = vcmp.eq.f32.partialorder %v489, 8.507059e+37
        %v491 = vand.u32 %v444, 2147483648
        %v492 = vor.u32 1.1754944e-38, %v491
        %v493 = vsel %vm490, %v492, %v488
        %v494 = vmul.f32 %v214, %v493
        %v495 = vrcp.pop %v445
        %v496 = vmul.f32 %v445, %v495
        %v497 = vsub.f32 1.0, %v496
        %v498 = vmul.f32 %v495, %v497
        %v499 = vadd.f32 %v495, %v498
        %vm500 = vweird.f32 %v445
        %vm501 = vweird.f32 %v495
        %vm502 = vmor %vm500, %vm501
        %v503 = vsel %vm502, %v495, %v499
        %v504 = vand.u32 2147483647, %v445
        %vm505 = vcmp.eq.f32.partialorder %v504, 8.507059e+37
        %v506 = vand.u32 %v445, 2147483648
        %v507 = vor.u32 1.1754944e-38, %v506
        %v508 = vsel %vm505, %v507, %v503
        %v509 = vmul.f32 %v216, %v508
        %v510 = vrcp.pop %v446
        %v511 = vmul.f32 %v446, %v510
        %v512 = vsub.f32 1.0, %v511
        %v513 = vmul.f32 %v510, %v512
        %v514 = vadd.f32 %v510, %v513
        %vm515 = vweird.f32 %v446
        %vm516 = vweird.f32 %v510
        %vm517 = vmor %vm515, %vm516
        %v518 = vsel %vm517, %v510, %v514
        %v519 = vand.u32 2147483647, %v446
        %vm520 = vcmp.eq.f32.partialorder %v519, 8.507059e+37
        %v521 = vand.u32 %v446, 2147483648
        %v522 = vor.u32 1.1754944e-38, %v521
        %v523 = vsel %vm520, %v522, %v518
        %v524 = vmul.f32 %v218, %v523
        %v525 = vrcp.pop %v447
        %v526 = vmul.f32 %v447, %v525
        %v527 = vsub.f32 1.0, %v526
        %v528 = vmul.f32 %v525, %v527
        %v529 = vadd.f32 %v525, %v528
        %vm530 = vweird.f32 %v447
        %vm531 = vweird.f32 %v525
        %vm532 = vmor %vm530, %vm531
        %v533 = vsel %vm532, %v525, %v529
        %v534 = vand.u32 2147483647, %v447
        %vm535 = vcmp.eq.f32.partialorder %v534, 8.507059e+37
        %v536 = vand.u32 %v447, 2147483648
        %v537 = vor.u32 1.1754944e-38, %v536
        %v538 = vsel %vm535, %v537, %v533
        %v539 = vmul.f32 %v220, %v538
        %v540 = vrcp.pop %v448
        %v541 = vmul.f32 %v448, %v540
        %v542 = vsub.f32 1.0, %v541
        %v543 = vmul.f32 %v540, %v542
        %v544 = vadd.f32 %v540, %v543
        %vm545 = vweird.f32 %v448
        %vm546 = vweird.f32 %v540
        %vm547 = vmor %vm545, %vm546
        %v548 = vsel %vm547, %v540, %v544
        %v549 = vand.u32 2147483647, %v448
        %vm550 = vcmp.eq.f32.partialorder %v549, 8.507059e+37
        %v551 = vand.u32 %v448, 2147483648
        %v552 = vor.u32 1.1754944e-38, %v551
        %v553 = vsel %vm550, %v552, %v548
        %v554 = vmul.f32 %v222, %v553
        %v555 = vrcp.pop %v449
        %v556 = vmul.f32 %v449, %v555
        %v557 = vsub.f32 1.0, %v556
        %v558 = vmul.f32 %v555, %v557
        %v559 = vadd.f32 %v555, %v558
        %vm560 = vweird.f32 %v449
        %vm561 = vweird.f32 %v555
        %vm562 = vmor %vm560, %vm561
        %v563 = vsel %vm562, %v555, %v559
        %v564 = vand.u32 2147483647, %v449
        %vm565 = vcmp.eq.f32.partialorder %v564, 8.507059e+37
        %v566 = vand.u32 %v449, 2147483648
        %v567 = vor.u32 1.1754944e-38, %v566
        %v568 = vsel %vm565, %v567, %v563
        %v569 = vmul.f32 %v224, %v568
        %v570 = vmul.f32 %v464, %v395
        %v571 = vmul.f32 %v479, %v398
        %v572 = vmul.f32 %v494, %v401
        %v573 = vmul.f32 %v509, %v404
        %v574 = vmul.f32 %v524, %v407
        %v575 = vmul.f32 %v539, %v410
        %v576 = vmul.f32 %v554, %v413
        %v577 = vmul.f32 %v569, %v416
        %v578 = vsub.f32 %v183, %v570
        %v579 = vsub.f32 %v184, %v571
        %v580 = vsub.f32 %v185, %v572
        %v581 = vsub.f32 %v186, %v573
        %v582 = vsub.f32 %v187, %v574
        %v583 = vsub.f32 %v188, %v575
        %v584 = vsub.f32 %v189, %v576
        %v585 = vsub.f32 %v190, %v577
        %v586 = vsel %vm353, -inf, %v578
        %v587 = vsel %vm354, -inf, %v579
        %v588 = vsel %vm355, -inf, %v580
        %v589 = vsel %vm356, -inf, %v581
        %v590 = vsel %vm357, -inf, %v582
        %v591 = vsel %vm358, -inf, %v583
        %v592 = vsel %vm359, -inf, %v584
        %v593 = vsel %vm360, -inf, %v585
        %594 = vmax.xlane.f32.xlu0 %v586
        %v595 = vpop.xlane.xlu0 %594
        %596 = vmax.xlane.f32.xlu0 %v587
        %v597 = vpop.xlane.xlu0 %596
        %598 = vmax.xlane.f32.xlu0 %v588
        %v599 = vpop.xlane.xlu0 %598
        %600 = vmax.xlane.f32.xlu0 %v589
        %v601 = vpop.xlane.xlu0 %600
        %602 = vmax.xlane.f32.xlu0 %v590
        %v603 = vpop.xlane.xlu0 %602
        %604 = vmax.xlane.f32.xlu0 %v591
        %v605 = vpop.xlane.xlu0 %604
        %606 = vmax.xlane.f32.xlu0 %v592
        %v607 = vpop.xlane.xlu0 %606
        %608 = vmax.xlane.f32.xlu0 %v593
        %v609 = vpop.xlane.xlu0 %608
        %vm610 = vcmp.ge.f32.partialorder %v586, %v595
        %vm611 = vcmp.ge.f32.partialorder %v587, %v597
        %vm612 = vcmp.ge.f32.partialorder %v588, %v599
        %vm613 = vcmp.ge.f32.partialorder %v589, %v601
        %vm614 = vcmp.ge.f32.partialorder %v590, %v603
        %vm615 = vcmp.ge.f32.partialorder %v591, %v605
        %vm616 = vcmp.ge.f32.partialorder %v592, %v607
        %vm617 = vcmp.ge.f32.partialorder %v593, %v609
        %v618 = vsel %vm610, %v208, 128
        %v619 = vsel %vm611, %v208, 128
        %v620 = vsel %vm612, %v208, 128
        %v621 = vsel %vm613, %v208, 128
        %v622 = vsel %vm614, %v208, 128
        %v623 = vsel %vm615, %v208, 128
        %v624 = vsel %vm616, %v208, 128
        %v625 = vsel %vm617, %v208, 128
        %v626 = vand.u32 %v618, 65535
        %v627 = vshra.s32 %v618, 16
        %v628 = vcvt.s32.f32 %v626
        %v629 = vcvt.s32.f32 %v627
        %630 = vmin.xlane.f32.xlu0 %v629
        %v631 = vpop.xlane.xlu0 %630
        %vm632 = vcmp.eq.f32.partialorder %v629, %v631
        %v633 = vsel %vm632, %v628, inf
        %634 = vmin.xlane.f32.xlu0 %v633
        %v635 = vpop.xlane.xlu0 %634
        %v636 = vcvt.f32.s32 %v635
        %v637 = vcvt.f32.s32 %v631
        %v638 = vshll.u32 %v637, 16
        %v639 = vadd.s32 %v638, %v636
        %v640 = vand.u32 %v619, 65535
        %v641 = vshra.s32 %v619, 16
        %v642 = vcvt.s32.f32 %v640
        %v643 = vcvt.s32.f32 %v641
        %644 = vmin.xlane.f32.xlu0 %v643
        %v645 = vpop.xlane.xlu0 %644
        %vm646 = vcmp.eq.f32.partialorder %v643, %v645
        %v647 = vsel %vm646, %v642, inf
        %648 = vmin.xlane.f32.xlu0 %v647
        %v649 = vpop.xlane.xlu0 %648
        %v650 = vcvt.f32.s32 %v649
        %v651 = vcvt.f32.s32 %v645
        %v652 = vshll.u32 %v651, 16
        %v653 = vadd.s32 %v652, %v650
        %v654 = vand.u32 %v620, 65535
        %v655 = vshra.s32 %v620, 16
        %v656 = vcvt.s32.f32 %v654
        %v657 = vcvt.s32.f32 %v655
        %658 = vmin.xlane.f32.xlu0 %v657
        %v659 = vpop.xlane.xlu0 %658
        %vm660 = vcmp.eq.f32.partialorder %v657, %v659
        %v661 = vsel %vm660, %v656, inf
        %662 = vmin.xlane.f32.xlu0 %v661
        %v663 = vpop.xlane.xlu0 %662
        %v664 = vcvt.f32.s32 %v663
        %v665 = vcvt.f32.s32 %v659
        %v666 = vshll.u32 %v665, 16
        %v667 = vadd.s32 %v666, %v664
        %v668 = vand.u32 %v621, 65535
        %v669 = vshra.s32 %v621, 16
        %v670 = vcvt.s32.f32 %v668
        %v671 = vcvt.s32.f32 %v669
        %672 = vmin.xlane.f32.xlu0 %v671
        %v673 = vpop.xlane.xlu0 %672
        %vm674 = vcmp.eq.f32.partialorder %v671, %v673
        %v675 = vsel %vm674, %v670, inf
        %676 = vmin.xlane.f32.xlu0 %v675
        %v677 = vpop.xlane.xlu0 %676
        %v678 = vcvt.f32.s32 %v677
        %v679 = vcvt.f32.s32 %v673
        %v680 = vshll.u32 %v679, 16
        %v681 = vadd.s32 %v680, %v678
        %v682 = vand.u32 %v622, 65535
        %v683 = vshra.s32 %v622, 16
        %v684 = vcvt.s32.f32 %v682
        %v685 = vcvt.s32.f32 %v683
        %686 = vmin.xlane.f32.xlu0 %v685
        %v687 = vpop.xlane.xlu0 %686
        %vm688 = vcmp.eq.f32.partialorder %v685, %v687
        %v689 = vsel %vm688, %v684, inf
        %690 = vmin.xlane.f32.xlu0 %v689
        %v691 = vpop.xlane.xlu0 %690
        %v692 = vcvt.f32.s32 %v691
        %v693 = vcvt.f32.s32 %v687
        %v694 = vshll.u32 %v693, 16
        %v695 = vadd.s32 %v694, %v692
        %v696 = vand.u32 %v623, 65535
        %v697 = vshra.s32 %v623, 16
        %v698 = vcvt.s32.f32 %v696
        %v699 = vcvt.s32.f32 %v697
        %700 = vmin.xlane.f32.xlu0 %v699
        %v701 = vpop.xlane.xlu0 %700
        %vm702 = vcmp.eq.f32.partialorder %v699, %v701
        %v703 = vsel %vm702, %v698, inf
        %704 = vmin.xlane.f32.xlu0 %v703
        %v705 = vpop.xlane.xlu0 %704
        %v706 = vcvt.f32.s32 %v705
        %v707 = vcvt.f32.s32 %v701
        %v708 = vshll.u32 %v707, 16
        %v709 = vadd.s32 %v708, %v706
        %v710 = vand.u32 %v624, 65535
        %v711 = vshra.s32 %v624, 16
        %v712 = vcvt.s32.f32 %v710
        %v713 = vcvt.s32.f32 %v711
        %714 = vmin.xlane.f32.xlu0 %v713
        %v715 = vpop.xlane.xlu0 %714
        %vm716 = vcmp.eq.f32.partialorder %v713, %v715
        %v717 = vsel %vm716, %v712, inf
        %718 = vmin.xlane.f32.xlu0 %v717
        %v719 = vpop.xlane.xlu0 %718
        %v720 = vcvt.f32.s32 %v719
        %v721 = vcvt.f32.s32 %v715
        %v722 = vshll.u32 %v721, 16
        %v723 = vadd.s32 %v722, %v720
        %v724 = vand.u32 %v625, 65535
        %v725 = vshra.s32 %v625, 16
        %v726 = vcvt.s32.f32 %v724
        %v727 = vcvt.s32.f32 %v725
        %728 = vmin.xlane.f32.xlu0 %v727
        %v729 = vpop.xlane.xlu0 %728
        %vm730 = vcmp.eq.f32.partialorder %v727, %v729
        %v731 = vsel %vm730, %v726, inf
        %732 = vmin.xlane.f32.xlu0 %v731
        %v733 = vpop.xlane.xlu0 %732
        %v734 = vcvt.f32.s32 %v733
        %v735 = vcvt.f32.s32 %v729
        %v736 = vshll.u32 %v735, 16
        %v737 = vadd.s32 %v736, %v734
        %vm738 = vcmp.eq.s32.totalorder %v208, %v639
        %vm739 = vcmp.eq.s32.totalorder %v208, %v653
        %vm740 = vcmp.eq.s32.totalorder %v208, %v667
        %vm741 = vcmp.eq.s32.totalorder %v208, %v681
        %vm742 = vcmp.eq.s32.totalorder %v208, %v695
        %vm743 = vcmp.eq.s32.totalorder %v208, %v709
        %vm744 = vcmp.eq.s32.totalorder %v208, %v723
        %vm745 = vcmp.eq.s32.totalorder %v208, %v737
        %vm746 = vmor %vm353, %vm738
        %vm747 = vmor %vm354, %vm739
        %vm748 = vmor %vm355, %vm740
        %vm749 = vmor %vm356, %vm741
        %vm750 = vmor %vm357, %vm742
        %vm751 = vmor %vm358, %vm743
        %vm752 = vmor %vm359, %vm744
        %vm753 = vmor %vm360, %vm745
        %v754 = vsel %vm738, 1, 0
        %v755 = vsel %vm739, 1, 0
        %v756 = vsel %vm740, 1, 0
        %v757 = vsel %vm741, 1, 0
        %v758 = vsel %vm742, 1, 0
        %v759 = vsel %vm743, 1, 0
        %v760 = vsel %vm744, 1, 0
        %v761 = vsel %vm745, 1, 0
        %v762 = vcvt.s32.f32 %v754
        %v763 = vcvt.s32.f32 %v755
        %v764 = vcvt.s32.f32 %v756
        %v765 = vcvt.s32.f32 %v757
        %v766 = vcvt.s32.f32 %v758
        %v767 = vcvt.s32.f32 %v759
        %v768 = vcvt.s32.f32 %v760
        %v769 = vcvt.s32.f32 %v761
        %770 = vmatpush.msra.mxu0 %v206
        %771 = vmatpush.msra.mxu0 %v205
        %772 = vmatpush.msra.mxu0 %v204
        %773 = vmatpush.msra.mxu0 %v203
        %774 = vmatpush.msra.mxu0 %v202
        %775 = vmatpush.msra.mxu0 %v201
        %776 = vmatpush.msra.mxu0 %v200
        %777 = vmatpush.msra.mxu0 %v199
        %778 = vmatpush.msra.mxu0 %v198
        %779 = vmatpush.msra.mxu0 %v197
        %780 = vmatpush.msra.mxu0 %v196
        %781 = vmatpush.msra.mxu0 %v195
        %782 = vmatpush.msra.mxu0 %v194
        %783 = vmatpush.msra.mxu0 %v193
        %784 = vmatpush.msra.mxu0 %v192
        %785 = vmatpush.msra.mxu0 %v191
        %786 = vmatmul.f32.gmra.mxu0 %v762
        %v787 = vpop.f32.mrf.mxu0
        %v788 = vadd.f32 0.0, %v787
        %789 = vmatmul.f32.gmra.mxu0 %v763
        %v790 = vpop.f32.mrf.mxu0
        %v791 = vadd.f32 0.0, %v790
        %792 = vmatmul.f32.gmra.mxu0 %v764
        %v793 = vpop.f32.mrf.mxu0
        %v794 = vadd.f32 0.0, %v793
        %795 = vmatmul.f32.gmra.mxu0 %v765
        %v796 = vpop.f32.mrf.mxu0
        %v797 = vadd.f32 0.0, %v796
        %798 = vmatmul.f32.gmra.mxu0 %v766
        %v799 = vpop.f32.mrf.mxu0
        %v800 = vadd.f32 0.0, %v799
        %801 = vmatmul.f32.gmra.mxu0 %v767
        %v802 = vpop.f32.mrf.mxu0
        %v803 = vadd.f32 0.0, %v802
        %804 = vmatmul.f32.gmra.mxu0 %v768
        %v805 = vpop.f32.mrf.mxu0
        %v806 = vadd.f32 0.0, %v805
        %807 = vmatmul.f32.gmra.mxu0 %v769
        %v808 = vpop.f32.mrf.mxu0
        %v809 = vadd.f32 0.0, %v808
        %810 = vdwg.mxu0
        %v811 = vmul.f32 %v762, %v395
        %v812 = vmul.f32 %v763, %v398
        %v813 = vmul.f32 %v764, %v401
        %v814 = vmul.f32 %v765, %v404
        %v815 = vmul.f32 %v766, %v407
        %v816 = vmul.f32 %v767, %v410
        %v817 = vmul.f32 %v768, %v413
        %v818 = vmul.f32 %v769, %v416
        %819 = vadd.xlane.f32.xlu0 %v811
        %v820 = vpop.xlane.xlu0 %819
        %821 = vadd.xlane.f32.xlu0 %v812
        %v822 = vpop.xlane.xlu0 %821
        %823 = vadd.xlane.f32.xlu0 %v813
        %v824 = vpop.xlane.xlu0 %823
        %825 = vadd.xlane.f32.xlu0 %v814
        %v826 = vpop.xlane.xlu0 %825
        %827 = vadd.xlane.f32.xlu0 %v815
        %v828 = vpop.xlane.xlu0 %827
        %829 = vadd.xlane.f32.xlu0 %v816
        %v830 = vpop.xlane.xlu0 %829
        %831 = vadd.xlane.f32.xlu0 %v817
        %v832 = vpop.xlane.xlu0 %831
        %833 = vadd.xlane.f32.xlu0 %v818
        %v834 = vpop.xlane.xlu0 %833
        %v835 = vmul.f32 %v762, %v788
        %v836 = vmul.f32 %v763, %v791
        %v837 = vmul.f32 %v764, %v794
        %v838 = vmul.f32 %v765, %v797
        %v839 = vmul.f32 %v766, %v800
        %v840 = vmul.f32 %v767, %v803
        %v841 = vmul.f32 %v768, %v806
        %v842 = vmul.f32 %v769, %v809
        %843 = vadd.xlane.f32.xlu0 %v835
        %v844 = vpop.xlane.xlu0 %843
        %845 = vadd.xlane.f32.xlu0 %v836
        %v846 = vpop.xlane.xlu0 %845
        %847 = vadd.xlane.f32.xlu0 %v837
        %v848 = vpop.xlane.xlu0 %847
        %849 = vadd.xlane.f32.xlu0 %v838
        %v850 = vpop.xlane.xlu0 %849
        %851 = vadd.xlane.f32.xlu0 %v839
        %v852 = vpop.xlane.xlu0 %851
        %853 = vadd.xlane.f32.xlu0 %v840
        %v854 = vpop.xlane.xlu0 %853
        %855 = vadd.xlane.f32.xlu0 %v841
        %v856 = vpop.xlane.xlu0 %855
        %857 = vadd.xlane.f32.xlu0 %v842
        %v858 = vpop.xlane.xlu0 %857
        %v859 = vmul.f32 %v464, %v427
        %v860 = vmul.f32 %v479, %v429
        %v861 = vmul.f32 %v494, %v431
        %v862 = vmul.f32 %v509, %v433
        %v863 = vmul.f32 %v524, %v435
        %v864 = vmul.f32 %v539, %v437
        %v865 = vmul.f32 %v554, %v439
        %v866 = vmul.f32 %v569, %v441
        %v867 = vsub.f32 %v210, %v859
        %v868 = vsub.f32 %v212, %v860
        %v869 = vsub.f32 %v214, %v861
        %v870 = vsub.f32 %v216, %v862
        %v871 = vsub.f32 %v218, %v863
        %v872 = vsub.f32 %v220, %v864
        %v873 = vsub.f32 %v222, %v865
        %v874 = vsub.f32 %v224, %v866
        %v875 = vmul.f32 %v464, %v820
        %v876 = vmul.f32 %v479, %v822
        %v877 = vmul.f32 %v494, %v824
        %v878 = vmul.f32 %v509, %v826
        %v879 = vmul.f32 %v524, %v828
        %v880 = vmul.f32 %v539, %v830
        %v881 = vmul.f32 %v554, %v832
        %v882 = vmul.f32 %v569, %v834
        %v883 = vadd.f32 %v595, %v875
        %v884 = vadd.f32 %v597, %v876
        %v885 = vadd.f32 %v599, %v877
        %v886 = vadd.f32 %v601, %v878
        %v887 = vadd.f32 %v603, %v879
        %v888 = vadd.f32 %v605, %v880
        %v889 = vadd.f32 %v607, %v881
        %v890 = vadd.f32 %v609, %v882
        %v891 = vadd.f32 %v844, 1e-10
        %v892 = vadd.f32 %v846, 1e-10
        %v893 = vadd.f32 %v848, 1e-10
        %v894 = vadd.f32 %v850, 1e-10
        %v895 = vadd.f32 %v852, 1e-10
        %v896 = vadd.f32 %v854, 1e-10
        %v897 = vadd.f32 %v856, 1e-10
        %v898 = vadd.f32 %v858, 1e-10
        %v899 = vmul.f32 1.0, %v463
        %v900 = vmul.f32 1.0, %v478
        %v901 = vmul.f32 1.0, %v493
        %v902 = vmul.f32 1.0, %v508
        %v903 = vmul.f32 1.0, %v523
        %v904 = vmul.f32 1.0, %v538
        %v905 = vmul.f32 1.0, %v553
        %v906 = vmul.f32 1.0, %v568
        %v907 = vmul.f32 %v820, %v899
        %v908 = vmul.f32 %v822, %v900
        %v909 = vmul.f32 %v824, %v901
        %v910 = vmul.f32 %v826, %v902
        %v911 = vmul.f32 %v828, %v903
        %v912 = vmul.f32 %v830, %v904
        %v913 = vmul.f32 %v832, %v905
        %v914 = vmul.f32 %v834, %v906
        %v915 = vmul.f32 %v907, %v820
        %v916 = vmul.f32 %v908, %v822
        %v917 = vmul.f32 %v909, %v824
        %v918 = vmul.f32 %v910, %v826
        %v919 = vmul.f32 %v911, %v828
        %v920 = vmul.f32 %v912, %v830
        %v921 = vmul.f32 %v913, %v832
        %v922 = vmul.f32 %v914, %v834
        %v923 = vsub.f32 %v891, %v915
        %v924 = vsub.f32 %v892, %v916
        %v925 = vsub.f32 %v893, %v917
        %v926 = vsub.f32 %v894, %v918
        %v927 = vsub.f32 %v895, %v919
        %v928 = vsub.f32 %v896, %v920
        %v929 = vsub.f32 %v897, %v921
        %v930 = vsub.f32 %v898, %v922
        %v931 = vmul.f32 %v907, %v867
        %v932 = vmul.f32 %v908, %v868
        %v933 = vmul.f32 %v909, %v869
        %v934 = vmul.f32 %v910, %v870
        %v935 = vmul.f32 %v911, %v871
        %v936 = vmul.f32 %v912, %v872
        %v937 = vmul.f32 %v913, %v873
        %v938 = vmul.f32 %v914, %v874
        %v939 = vsub.f32 %v595, %v931
        %v940 = vsub.f32 %v597, %v932
        %v941 = vsub.f32 %v599, %v933
        %v942 = vsub.f32 %v601, %v934
        %v943 = vsub.f32 %v603, %v935
        %v944 = vsub.f32 %v605, %v936
        %v945 = vsub.f32 %v607, %v937
        %v946 = vsub.f32 %v609, %v938
        %v947 = vrcp.pop %v923
        %v948 = vmul.f32 %v923, %v947
        %v949 = vsub.f32 1.0, %v948
        %v950 = vmul.f32 %v947, %v949
        %v951 = vadd.f32 %v947, %v950
        %vm952 = vweird.f32 %v923
        %vm953 = vweird.f32 %v947
        %vm954 = vmor %vm952, %vm953
        %v955 = vsel %vm954, %v947, %v951
        %v956 = vand.u32 2147483647, %v923
        %vm957 = vcmp.eq.f32.partialorder %v956, 8.507059e+37
        %v958 = vand.u32 %v923, 2147483648
        %v959 = vor.u32 1.1754944e-38, %v958
        %v960 = vsel %vm957, %v959, %v955
        %v961 = vmul.f32 %v939, %v960
        %v962 = vrcp.pop %v924
        %v963 = vmul.f32 %v924, %v962
        %v964 = vsub.f32 1.0, %v963
        %v965 = vmul.f32 %v962, %v964
        %v966 = vadd.f32 %v962, %v965
        %vm967 = vweird.f32 %v924
        %vm968 = vweird.f32 %v962
        %vm969 = vmor %vm967, %vm968
        %v970 = vsel %vm969, %v962, %v966
        %v971 = vand.u32 2147483647, %v924
        %vm972 = vcmp.eq.f32.partialorder %v971, 8.507059e+37
        %v973 = vand.u32 %v924, 2147483648
        %v974 = vor.u32 1.1754944e-38, %v973
        %v975 = vsel %vm972, %v974, %v970
        %v976 = vmul.f32 %v940, %v975
        %v977 = vrcp.pop %v925
        %v978 = vmul.f32 %v925, %v977
        %v979 = vsub.f32 1.0, %v978
        %v980 = vmul.f32 %v977, %v979
        %v981 = vadd.f32 %v977, %v980
        %vm982 = vweird.f32 %v925
        %vm983 = vweird.f32 %v977
        %vm984 = vmor %vm982, %vm983
        %v985 = vsel %vm984, %v977, %v981
        %v986 = vand.u32 2147483647, %v925
        %vm987 = vcmp.eq.f32.partialorder %v986, 8.507059e+37
        %v988 = vand.u32 %v925, 2147483648
        %v989 = vor.u32 1.1754944e-38, %v988
        %v990 = vsel %vm987, %v989, %v985
        %v991 = vmul.f32 %v941, %v990
        %v992 = vrcp.pop %v926
        %v993 = vmul.f32 %v926, %v992
        %v994 = vsub.f32 1.0, %v993
        %v995 = vmul.f32 %v992, %v994
        %v996 = vadd.f32 %v992, %v995
        %vm997 = vweird.f32 %v926
        %vm998 = vweird.f32 %v992
        %vm999 = vmor %vm997, %vm998
        %v1000 = vsel %vm999, %v992, %v996
        %v1001 = vand.u32 2147483647, %v926
        %vm1002 = vcmp.eq.f32.partialorder %v1001, 8.507059e+37
        %v1003 = vand.u32 %v926, 2147483648
        %v1004 = vor.u32 1.1754944e-38, %v1003
        %v1005 = vsel %vm1002, %v1004, %v1000
        %v1006 = vmul.f32 %v942, %v1005
        %v1007 = vrcp.pop %v927
        %v1008 = vmul.f32 %v927, %v1007
        %v1009 = vsub.f32 1.0, %v1008
        %v1010 = vmul.f32 %v1007, %v1009
        %v1011 = vadd.f32 %v1007, %v1010
        %vm1012 = vweird.f32 %v927
        %vm1013 = vweird.f32 %v1007
        %vm1014 = vmor %vm1012, %vm1013
        %v1015 = vsel %vm1014, %v1007, %v1011
        %v1016 = vand.u32 2147483647, %v927
        %vm1017 = vcmp.eq.f32.partialorder %v1016, 8.507059e+37
        %v1018 = vand.u32 %v927, 2147483648
        %v1019 = vor.u32 1.1754944e-38, %v1018
        %v1020 = vsel %vm1017, %v1019, %v1015
        %v1021 = vmul.f32 %v943, %v1020
        %v1022 = vrcp.pop %v928
        %v1023 = vmul.f32 %v928, %v1022
        %v1024 = vsub.f32 1.0, %v1023
        %v1025 = vmul.f32 %v1022, %v1024
        %v1026 = vadd.f32 %v1022, %v1025
        %vm1027 = vweird.f32 %v928
        %vm1028 = vweird.f32 %v1022
        %vm1029 = vmor %vm1027, %vm1028
        %v1030 = vsel %vm1029, %v1022, %v1026
        %v1031 = vand.u32 2147483647, %v928
        %vm1032 = vcmp.eq.f32.partialorder %v1031, 8.507059e+37
        %v1033 = vand.u32 %v928, 2147483648
        %v1034 = vor.u32 1.1754944e-38, %v1033
        %v1035 = vsel %vm1032, %v1034, %v1030
        %v1036 = vmul.f32 %v944, %v1035
        %v1037 = vrcp.pop %v929
        %v1038 = vmul.f32 %v929, %v1037
        %v1039 = vsub.f32 1.0, %v1038
        %v1040 = vmul.f32 %v1037, %v1039
        %v1041 = vadd.f32 %v1037, %v1040
        %vm1042 = vweird.f32 %v929
        %vm1043 = vweird.f32 %v1037
        %vm1044 = vmor %vm1042, %vm1043
        %v1045 = vsel %vm1044, %v1037, %v1041
        %v1046 = vand.u32 2147483647, %v929
        %vm1047 = vcmp.eq.f32.partialorder %v1046, 8.507059e+37
        %v1048 = vand.u32 %v929, 2147483648
        %v1049 = vor.u32 1.1754944e-38, %v1048
        %v1050 = vsel %vm1047, %v1049, %v1045
        %v1051 = vmul.f32 %v945, %v1050
        %v1052 = vrcp.pop %v930
        %v1053 = vmul.f32 %v930, %v1052
        %v1054 = vsub.f32 1.0, %v1053
        %v1055 = vmul.f32 %v1052, %v1054
        %v1056 = vadd.f32 %v1052, %v1055
        %vm1057 = vweird.f32 %v930
        %vm1058 = vweird.f32 %v1052
        %vm1059 = vmor %vm1057, %vm1058
        %v1060 = vsel %vm1059, %v1052, %v1056
        %v1061 = vand.u32 2147483647, %v930
        %vm1062 = vcmp.eq.f32.partialorder %v1061, 8.507059e+37
        %v1063 = vand.u32 %v930, 2147483648
        %v1064 = vor.u32 1.1754944e-38, %v1063
        %v1065 = vsel %vm1062, %v1064, %v1060
        %v1066 = vmul.f32 %v946, %v1065
        %v1067 = vmul.f32 %v820, %v961
        %v1068 = vmul.f32 %v822, %v976
        %v1069 = vmul.f32 %v824, %v991
        %v1070 = vmul.f32 %v826, %v1006
        %v1071 = vmul.f32 %v828, %v1021
        %v1072 = vmul.f32 %v830, %v1036
        %v1073 = vmul.f32 %v832, %v1051
        %v1074 = vmul.f32 %v834, %v1066
        %v1075 = vsub.f32 %v867, %v1067
        %v1076 = vsub.f32 %v868, %v1068
        %v1077 = vsub.f32 %v869, %v1069
        %v1078 = vsub.f32 %v870, %v1070
        %v1079 = vsub.f32 %v871, %v1071
        %v1080 = vsub.f32 %v872, %v1072
        %v1081 = vsub.f32 %v873, %v1073
        %v1082 = vsub.f32 %v874, %v1074
        %v1083 = vmul.f32 %v1075, %v463
        %v1084 = vmul.f32 %v1076, %v478
        %v1085 = vmul.f32 %v1077, %v493
        %v1086 = vmul.f32 %v1078, %v508
        %v1087 = vmul.f32 %v1079, %v523
        %v1088 = vmul.f32 %v1080, %v538
        %v1089 = vmul.f32 %v1081, %v553
        %v1090 = vmul.f32 %v1082, %v568
        %v1091 = vmul.f32 %v1083, %v395
        %v1092 = vmul.f32 %v1084, %v398
        %v1093 = vmul.f32 %v1085, %v401
        %v1094 = vmul.f32 %v1086, %v404
        %v1095 = vmul.f32 %v1087, %v407
        %v1096 = vmul.f32 %v1088, %v410
        %v1097 = vmul.f32 %v1089, %v413
        %v1098 = vmul.f32 %v1090, %v416
        %v1099 = vsub.f32 %v183, %v1091
        %v1100 = vsub.f32 %v184, %v1092
        %v1101 = vsub.f32 %v185, %v1093
        %v1102 = vsub.f32 %v186, %v1094
        %v1103 = vsub.f32 %v187, %v1095
        %v1104 = vsub.f32 %v188, %v1096
        %v1105 = vsub.f32 %v189, %v1097
        %v1106 = vsub.f32 %v190, %v1098
        %v1107 = vmul.f32 %v961, %v788
        %v1108 = vmul.f32 %v976, %v791
        %v1109 = vmul.f32 %v991, %v794
        %v1110 = vmul.f32 %v1006, %v797
        %v1111 = vmul.f32 %v1021, %v800
        %v1112 = vmul.f32 %v1036, %v803
        %v1113 = vmul.f32 %v1051, %v806
        %v1114 = vmul.f32 %v1066, %v809
        %v1115 = vsub.f32 %v1099, %v1107
        %v1116 = vsub.f32 %v1100, %v1108
        %v1117 = vsub.f32 %v1101, %v1109
        %v1118 = vsub.f32 %v1102, %v1110
        %v1119 = vsub.f32 %v1103, %v1111
        %v1120 = vsub.f32 %v1104, %v1112
        %v1121 = vsub.f32 %v1105, %v1113
        %v1122 = vsub.f32 %v1106, %v1114
        %v1123 = vsel %vm746, -inf, %v1115
        %v1124 = vsel %vm747, -inf, %v1116
        %v1125 = vsel %vm748, -inf, %v1117
        %v1126 = vsel %vm749, -inf, %v1118
        %v1127 = vsel %vm750, -inf, %v1119
        %v1128 = vsel %vm751, -inf, %v1120
        %v1129 = vsel %vm752, -inf, %v1121
        %v1130 = vsel %vm753, -inf, %v1122
        %1131 = vmax.xlane.f32.xlu0 %v1123
        %v1132 = vpop.xlane.xlu0 %1131
        %1133 = vmax.xlane.f32.xlu0 %v1124
        %v1134 = vpop.xlane.xlu0 %1133
        %1135 = vmax.xlane.f32.xlu0 %v1125
        %v1136 = vpop.xlane.xlu0 %1135
        %1137 = vmax.xlane.f32.xlu0 %v1126
        %v1138 = vpop.xlane.xlu0 %1137
        %1139 = vmax.xlane.f32.xlu0 %v1127
        %v1140 = vpop.xlane.xlu0 %1139
        %1141 = vmax.xlane.f32.xlu0 %v1128
        %v1142 = vpop.xlane.xlu0 %1141
        %1143 = vmax.xlane.f32.xlu0 %v1129
        %v1144 = vpop.xlane.xlu0 %1143
        %1145 = vmax.xlane.f32.xlu0 %v1130
        %v1146 = vpop.xlane.xlu0 %1145
        %vm1147 = vcmp.ge.f32.partialorder %v1123, %v1132
        %vm1148 = vcmp.ge.f32.partialorder %v1124, %v1134
        %vm1149 = vcmp.ge.f32.partialorder %v1125, %v1136
        %vm1150 = vcmp.ge.f32.partialorder %v1126, %v1138
        %vm1151 = vcmp.ge.f32.partialorder %v1127, %v1140
        %vm1152 = vcmp.ge.f32.partialorder %v1128, %v1142
        %vm1153 = vcmp.ge.f32.partialorder %v1129, %v1144
        %vm1154 = vcmp.ge.f32.partialorder %v1130, %v1146
        %v1155 = vsel %vm1147, %v208, 128
        %v1156 = vsel %vm1148, %v208, 128
        %v1157 = vsel %vm1149, %v208, 128
        %v1158 = vsel %vm1150, %v208, 128
        %v1159 = vsel %vm1151, %v208, 128
        %v1160 = vsel %vm1152, %v208, 128
        %v1161 = vsel %vm1153, %v208, 128
        %v1162 = vsel %vm1154, %v208, 128
        %v1163 = vand.u32 %v1155, 65535
        %v1164 = vshra.s32 %v1155, 16
        %v1165 = vcvt.s32.f32 %v1163
        %v1166 = vcvt.s32.f32 %v1164
        %1167 = vmin.xlane.f32.xlu0 %v1166
        %v1168 = vpop.xlane.xlu0 %1167
        %vm1169 = vcmp.eq.f32.partialorder %v1166, %v1168
        %v1170 = vsel %vm1169, %v1165, inf
        %1171 = vmin.xlane.f32.xlu0 %v1170
        %v1172 = vpop.xlane.xlu0 %1171
        %v1173 = vcvt.f32.s32 %v1172
        %v1174 = vcvt.f32.s32 %v1168
        %v1175 = vshll.u32 %v1174, 16
        %v1176 = vadd.s32 %v1175, %v1173
        %v1177 = vand.u32 %v1156, 65535
        %v1178 = vshra.s32 %v1156, 16
        %v1179 = vcvt.s32.f32 %v1177
        %v1180 = vcvt.s32.f32 %v1178
        %1181 = vmin.xlane.f32.xlu0 %v1180
        %v1182 = vpop.xlane.xlu0 %1181
        %vm1183 = vcmp.eq.f32.partialorder %v1180, %v1182
        %v1184 = vsel %vm1183, %v1179, inf
        %1185 = vmin.xlane.f32.xlu0 %v1184
        %v1186 = vpop.xlane.xlu0 %1185
        %v1187 = vcvt.f32.s32 %v1186
        %v1188 = vcvt.f32.s32 %v1182
        %v1189 = vshll.u32 %v1188, 16
        %v1190 = vadd.s32 %v1189, %v1187
        %v1191 = vand.u32 %v1157, 65535
        %v1192 = vshra.s32 %v1157, 16
        %v1193 = vcvt.s32.f32 %v1191
        %v1194 = vcvt.s32.f32 %v1192
        %1195 = vmin.xlane.f32.xlu0 %v1194
        %v1196 = vpop.xlane.xlu0 %1195
        %vm1197 = vcmp.eq.f32.partialorder %v1194, %v1196
        %v1198 = vsel %vm1197, %v1193, inf
        %1199 = vmin.xlane.f32.xlu0 %v1198
        %v1200 = vpop.xlane.xlu0 %1199
        %v1201 = vcvt.f32.s32 %v1200
        %v1202 = vcvt.f32.s32 %v1196
        %v1203 = vshll.u32 %v1202, 16
        %v1204 = vadd.s32 %v1203, %v1201
        %v1205 = vand.u32 %v1158, 65535
        %v1206 = vshra.s32 %v1158, 16
        %v1207 = vcvt.s32.f32 %v1205
        %v1208 = vcvt.s32.f32 %v1206
        %1209 = vmin.xlane.f32.xlu0 %v1208
        %v1210 = vpop.xlane.xlu0 %1209
        %vm1211 = vcmp.eq.f32.partialorder %v1208, %v1210
        %v1212 = vsel %vm1211, %v1207, inf
        %1213 = vmin.xlane.f32.xlu0 %v1212
        %v1214 = vpop.xlane.xlu0 %1213
        %v1215 = vcvt.f32.s32 %v1214
        %v1216 = vcvt.f32.s32 %v1210
        %v1217 = vshll.u32 %v1216, 16
        %v1218 = vadd.s32 %v1217, %v1215
        %v1219 = vand.u32 %v1159, 65535
        %v1220 = vshra.s32 %v1159, 16
        %v1221 = vcvt.s32.f32 %v1219
        %v1222 = vcvt.s32.f32 %v1220
        %1223 = vmin.xlane.f32.xlu0 %v1222
        %v1224 = vpop.xlane.xlu0 %1223
        %vm1225 = vcmp.eq.f32.partialorder %v1222, %v1224
        %v1226 = vsel %vm1225, %v1221, inf
        %1227 = vmin.xlane.f32.xlu0 %v1226
        %v1228 = vpop.xlane.xlu0 %1227
        %v1229 = vcvt.f32.s32 %v1228
        %v1230 = vcvt.f32.s32 %v1224
        %v1231 = vshll.u32 %v1230, 16
        %v1232 = vadd.s32 %v1231, %v1229
        %v1233 = vand.u32 %v1160, 65535
        %v1234 = vshra.s32 %v1160, 16
        %v1235 = vcvt.s32.f32 %v1233
        %v1236 = vcvt.s32.f32 %v1234
        %1237 = vmin.xlane.f32.xlu0 %v1236
        %v1238 = vpop.xlane.xlu0 %1237
        %vm1239 = vcmp.eq.f32.partialorder %v1236, %v1238
        %v1240 = vsel %vm1239, %v1235, inf
        %1241 = vmin.xlane.f32.xlu0 %v1240
        %v1242 = vpop.xlane.xlu0 %1241
        %v1243 = vcvt.f32.s32 %v1242
        %v1244 = vcvt.f32.s32 %v1238
        %v1245 = vshll.u32 %v1244, 16
        %v1246 = vadd.s32 %v1245, %v1243
        %v1247 = vand.u32 %v1161, 65535
        %v1248 = vshra.s32 %v1161, 16
        %v1249 = vcvt.s32.f32 %v1247
        %v1250 = vcvt.s32.f32 %v1248
        %1251 = vmin.xlane.f32.xlu0 %v1250
        %v1252 = vpop.xlane.xlu0 %1251
        %vm1253 = vcmp.eq.f32.partialorder %v1250, %v1252
        %v1254 = vsel %vm1253, %v1249, inf
        %1255 = vmin.xlane.f32.xlu0 %v1254
        %v1256 = vpop.xlane.xlu0 %1255
        %v1257 = vcvt.f32.s32 %v1256
        %v1258 = vcvt.f32.s32 %v1252
        %v1259 = vshll.u32 %v1258, 16
        %v1260 = vadd.s32 %v1259, %v1257
        %v1261 = vand.u32 %v1162, 65535
        %v1262 = vshra.s32 %v1162, 16
        %v1263 = vcvt.s32.f32 %v1261
        %v1264 = vcvt.s32.f32 %v1262
        %1265 = vmin.xlane.f32.xlu0 %v1264
        %v1266 = vpop.xlane.xlu0 %1265
        %vm1267 = vcmp.eq.f32.partialorder %v1264, %v1266
        %v1268 = vsel %vm1267, %v1263, inf
        %1269 = vmin.xlane.f32.xlu0 %v1268
        %v1270 = vpop.xlane.xlu0 %1269
        %v1271 = vcvt.f32.s32 %v1270
        %v1272 = vcvt.f32.s32 %v1266
        %v1273 = vshll.u32 %v1272, 16
        %v1274 = vadd.s32 %v1273, %v1271
        %vm1275 = vcmp.eq.s32.totalorder %v208, %v1176
        %vm1276 = vcmp.eq.s32.totalorder %v208, %v1190
        %vm1277 = vcmp.eq.s32.totalorder %v208, %v1204
        %vm1278 = vcmp.eq.s32.totalorder %v208, %v1218
        %vm1279 = vcmp.eq.s32.totalorder %v208, %v1232
        %vm1280 = vcmp.eq.s32.totalorder %v208, %v1246
        %vm1281 = vcmp.eq.s32.totalorder %v208, %v1260
        %vm1282 = vcmp.eq.s32.totalorder %v208, %v1274
        %vm1283 = vmor %vm746, %vm1275
        %vm1284 = vmor %vm747, %vm1276
        %vm1285 = vmor %vm748, %vm1277
        %vm1286 = vmor %vm749, %vm1278
        %vm1287 = vmor %vm750, %vm1279
        %vm1288 = vmor %vm751, %vm1280
        %vm1289 = vmor %vm752, %vm1281
        %vm1290 = vmor %vm753, %vm1282
        %v1291 = vsel %vm1275, 1, 0
        %v1292 = vsel %vm1276, 1, 0
        %v1293 = vsel %vm1277, 1, 0
        %v1294 = vsel %vm1278, 1, 0
        %v1295 = vsel %vm1279, 1, 0
        %v1296 = vsel %vm1280, 1, 0
        %v1297 = vsel %vm1281, 1, 0
        %v1298 = vsel %vm1282, 1, 0
        %v1299 = vcvt.s32.f32 %v1291
        %v1300 = vcvt.s32.f32 %v1292
        %v1301 = vcvt.s32.f32 %v1293
        %v1302 = vcvt.s32.f32 %v1294
        %v1303 = vcvt.s32.f32 %v1295
        %v1304 = vcvt.s32.f32 %v1296
        %v1305 = vcvt.s32.f32 %v1297
        %v1306 = vcvt.s32.f32 %v1298
        %1307 = vmatpush.msra.mxu0 %v206
        %1308 = vmatpush.msra.mxu0 %v205
        %1309 = vmatpush.msra.mxu0 %v204
        %1310 = vmatpush.msra.mxu0 %v203
        %1311 = vmatpush.msra.mxu0 %v202
        %1312 = vmatpush.msra.mxu0 %v201
        %1313 = vmatpush.msra.mxu0 %v200
        %1314 = vmatpush.msra.mxu0 %v199
        %1315 = vmatpush.msra.mxu0 %v198
        %1316 = vmatpush.msra.mxu0 %v197
        %1317 = vmatpush.msra.mxu0 %v196
        %1318 = vmatpush.msra.mxu0 %v195
        %1319 = vmatpush.msra.mxu0 %v194
        %1320 = vmatpush.msra.mxu0 %v193
        %1321 = vmatpush.msra.mxu0 %v192
        %1322 = vmatpush.msra.mxu0 %v191
        %1323 = vmatmul.f32.gmra.mxu0 %v1299
        %v1324 = vpop.f32.mrf.mxu0
        %v1325 = vadd.f32 0.0, %v1324
        %1326 = vmatmul.f32.gmra.mxu0 %v1300
        %v1327 = vpop.f32.mrf.mxu0
        %v1328 = vadd.f32 0.0, %v1327
        %1329 = vmatmul.f32.gmra.mxu0 %v1301
        %v1330 = vpop.f32.mrf.mxu0
        %v1331 = vadd.f32 0.0, %v1330
        %1332 = vmatmul.f32.gmra.mxu0 %v1302
        %v1333 = vpop.f32.mrf.mxu0
        %v1334 = vadd.f32 0.0, %v1333
        %1335 = vmatmul.f32.gmra.mxu0 %v1303
        %v1336 = vpop.f32.mrf.mxu0
        %v1337 = vadd.f32 0.0, %v1336
        %1338 = vmatmul.f32.gmra.mxu0 %v1304
        %v1339 = vpop.f32.mrf.mxu0
        %v1340 = vadd.f32 0.0, %v1339
        %1341 = vmatmul.f32.gmra.mxu0 %v1305
        %v1342 = vpop.f32.mrf.mxu0
        %v1343 = vadd.f32 0.0, %v1342
        %1344 = vmatmul.f32.gmra.mxu0 %v1306
        %v1345 = vpop.f32.mrf.mxu0
        %v1346 = vadd.f32 0.0, %v1345
        %1347 = vdwg.mxu0
        %v1348 = vmul.f32 %v1299, %v395
        %v1349 = vmul.f32 %v1300, %v398
        %v1350 = vmul.f32 %v1301, %v401
        %v1351 = vmul.f32 %v1302, %v404
        %v1352 = vmul.f32 %v1303, %v407
        %v1353 = vmul.f32 %v1304, %v410
        %v1354 = vmul.f32 %v1305, %v413
        %v1355 = vmul.f32 %v1306, %v416
        %1356 = vadd.xlane.f32.xlu0 %v1348
        %v1357 = vpop.xlane.xlu0 %1356
        %1358 = vadd.xlane.f32.xlu0 %v1349
        %v1359 = vpop.xlane.xlu0 %1358
        %1360 = vadd.xlane.f32.xlu0 %v1350
        %v1361 = vpop.xlane.xlu0 %1360
        %1362 = vadd.xlane.f32.xlu0 %v1351
        %v1363 = vpop.xlane.xlu0 %1362
        %1364 = vadd.xlane.f32.xlu0 %v1352
        %v1365 = vpop.xlane.xlu0 %1364
        %1366 = vadd.xlane.f32.xlu0 %v1353
        %v1367 = vpop.xlane.xlu0 %1366
        %1368 = vadd.xlane.f32.xlu0 %v1354
        %v1369 = vpop.xlane.xlu0 %1368
        %1370 = vadd.xlane.f32.xlu0 %v1355
        %v1371 = vpop.xlane.xlu0 %1370
        %v1372 = vmul.f32 %v1299, %v788
        %v1373 = vmul.f32 %v1300, %v791
        %v1374 = vmul.f32 %v1301, %v794
        %v1375 = vmul.f32 %v1302, %v797
        %v1376 = vmul.f32 %v1303, %v800
        %v1377 = vmul.f32 %v1304, %v803
        %v1378 = vmul.f32 %v1305, %v806
        %v1379 = vmul.f32 %v1306, %v809
        %1380 = vadd.xlane.f32.xlu0 %v1372
        %v1381 = vpop.xlane.xlu0 %1380
        %1382 = vadd.xlane.f32.xlu0 %v1373
        %v1383 = vpop.xlane.xlu0 %1382
        %1384 = vadd.xlane.f32.xlu0 %v1374
        %v1385 = vpop.xlane.xlu0 %1384
        %1386 = vadd.xlane.f32.xlu0 %v1375
        %v1387 = vpop.xlane.xlu0 %1386
        %1388 = vadd.xlane.f32.xlu0 %v1376
        %v1389 = vpop.xlane.xlu0 %1388
        %1390 = vadd.xlane.f32.xlu0 %v1377
        %v1391 = vpop.xlane.xlu0 %1390
        %1392 = vadd.xlane.f32.xlu0 %v1378
        %v1393 = vpop.xlane.xlu0 %1392
        %1394 = vadd.xlane.f32.xlu0 %v1379
        %v1395 = vpop.xlane.xlu0 %1394
        %v1396 = vmul.f32 %v1299, %v1325
        %v1397 = vmul.f32 %v1300, %v1328
        %v1398 = vmul.f32 %v1301, %v1331
        %v1399 = vmul.f32 %v1302, %v1334
        %v1400 = vmul.f32 %v1303, %v1337
        %v1401 = vmul.f32 %v1304, %v1340
        %v1402 = vmul.f32 %v1305, %v1343
        %v1403 = vmul.f32 %v1306, %v1346
        %1404 = vadd.xlane.f32.xlu0 %v1396
        %v1405 = vpop.xlane.xlu0 %1404
        %1406 = vadd.xlane.f32.xlu0 %v1397
        %v1407 = vpop.xlane.xlu0 %1406
        %1408 = vadd.xlane.f32.xlu0 %v1398
        %v1409 = vpop.xlane.xlu0 %1408
        %1410 = vadd.xlane.f32.xlu0 %v1399
        %v1411 = vpop.xlane.xlu0 %1410
        %1412 = vadd.xlane.f32.xlu0 %v1400
        %v1413 = vpop.xlane.xlu0 %1412
        %1414 = vadd.xlane.f32.xlu0 %v1401
        %v1415 = vpop.xlane.xlu0 %1414
        %1416 = vadd.xlane.f32.xlu0 %v1402
        %v1417 = vpop.xlane.xlu0 %1416
        %1418 = vadd.xlane.f32.xlu0 %v1403
        %v1419 = vpop.xlane.xlu0 %1418
        %v1420 = vmul.f32 %v1083, %v427
        %v1421 = vmul.f32 %v1084, %v429
        %v1422 = vmul.f32 %v1085, %v431
        %v1423 = vmul.f32 %v1086, %v433
        %v1424 = vmul.f32 %v1087, %v435
        %v1425 = vmul.f32 %v1088, %v437
        %v1426 = vmul.f32 %v1089, %v439
        %v1427 = vmul.f32 %v1090, %v441
        %v1428 = vsub.f32 %v210, %v1420
        %v1429 = vsub.f32 %v212, %v1421
        %v1430 = vsub.f32 %v214, %v1422
        %v1431 = vsub.f32 %v216, %v1423
        %v1432 = vsub.f32 %v218, %v1424
        %v1433 = vsub.f32 %v220, %v1425
        %v1434 = vsub.f32 %v222, %v1426
        %v1435 = vsub.f32 %v224, %v1427
        %v1436 = vsub.f32 %v1428, %v1067
        %v1437 = vsub.f32 %v1429, %v1068
        %v1438 = vsub.f32 %v1430, %v1069
        %v1439 = vsub.f32 %v1431, %v1070
        %v1440 = vsub.f32 %v1432, %v1071
        %v1441 = vsub.f32 %v1433, %v1072
        %v1442 = vsub.f32 %v1434, %v1073
        %v1443 = vsub.f32 %v1435, %v1074
        %v1444 = vmul.f32 %v1083, %v820
        %v1445 = vmul.f32 %v1084, %v822
        %v1446 = vmul.f32 %v1085, %v824
        %v1447 = vmul.f32 %v1086, %v826
        %v1448 = vmul.f32 %v1087, %v828
        %v1449 = vmul.f32 %v1088, %v830
        %v1450 = vmul.f32 %v1089, %v832
        %v1451 = vmul.f32 %v1090, %v834
        %v1452 = vsub.f32 %v883, %v1444
        %v1453 = vsub.f32 %v884, %v1445
        %v1454 = vsub.f32 %v885, %v1446
        %v1455 = vsub.f32 %v886, %v1447
        %v1456 = vsub.f32 %v887, %v1448
        %v1457 = vsub.f32 %v888, %v1449
        %v1458 = vsub.f32 %v889, %v1450
        %v1459 = vsub.f32 %v890, %v1451
        %v1460 = vmul.f32 %v961, %v844
        %v1461 = vmul.f32 %v976, %v846
        %v1462 = vmul.f32 %v991, %v848
        %v1463 = vmul.f32 %v1006, %v850
        %v1464 = vmul.f32 %v1021, %v852
        %v1465 = vmul.f32 %v1036, %v854
        %v1466 = vmul.f32 %v1051, %v856
        %v1467 = vmul.f32 %v1066, %v858
        %v1468 = vsub.f32 %v1452, %v1460
        %v1469 = vsub.f32 %v1453, %v1461
        %v1470 = vsub.f32 %v1454, %v1462
        %v1471 = vsub.f32 %v1455, %v1463
        %v1472 = vsub.f32 %v1456, %v1464
        %v1473 = vsub.f32 %v1457, %v1465
        %v1474 = vsub.f32 %v1458, %v1466
        %v1475 = vsub.f32 %v1459, %v1467
        %v1476 = vmul.f32 %v1083, %v1357
        %v1477 = vmul.f32 %v1084, %v1359
        %v1478 = vmul.f32 %v1085, %v1361
        %v1479 = vmul.f32 %v1086, %v1363
        %v1480 = vmul.f32 %v1087, %v1365
        %v1481 = vmul.f32 %v1088, %v1367
        %v1482 = vmul.f32 %v1089, %v1369
        %v1483 = vmul.f32 %v1090, %v1371
        %v1484 = vadd.f32 %v1132, %v1476
        %v1485 = vadd.f32 %v1134, %v1477
        %v1486 = vadd.f32 %v1136, %v1478
        %v1487 = vadd.f32 %v1138, %v1479
        %v1488 = vadd.f32 %v1140, %v1480
        %v1489 = vadd.f32 %v1142, %v1481
        %v1490 = vadd.f32 %v1144, %v1482
        %v1491 = vadd.f32 %v1146, %v1483
        %v1492 = vmul.f32 %v961, %v1381
        %v1493 = vmul.f32 %v976, %v1383
        %v1494 = vmul.f32 %v991, %v1385
        %v1495 = vmul.f32 %v1006, %v1387
        %v1496 = vmul.f32 %v1021, %v1389
        %v1497 = vmul.f32 %v1036, %v1391
        %v1498 = vmul.f32 %v1051, %v1393
        %v1499 = vmul.f32 %v1066, %v1395
        %v1500 = vadd.f32 %v1484, %v1492
        %v1501 = vadd.f32 %v1485, %v1493
        %v1502 = vadd.f32 %v1486, %v1494
        %v1503 = vadd.f32 %v1487, %v1495
        %v1504 = vadd.f32 %v1488, %v1496
        %v1505 = vadd.f32 %v1489, %v1497
        %v1506 = vadd.f32 %v1490, %v1498
        %v1507 = vadd.f32 %v1491, %v1499
        %v1508 = vadd.f32 %v1405, 1e-10
        %v1509 = vadd.f32 %v1407, 1e-10
        %v1510 = vadd.f32 %v1409, 1e-10
        %v1511 = vadd.f32 %v1411, 1e-10
        %v1512 = vadd.f32 %v1413, 1e-10
        %v1513 = vadd.f32 %v1415, 1e-10
        %v1514 = vadd.f32 %v1417, 1e-10
        %v1515 = vadd.f32 %v1419, 1e-10
        %v1516 = vmul.f32 %v907, %v1357
        %v1517 = vmul.f32 %v908, %v1359
        %v1518 = vmul.f32 %v909, %v1361
        %v1519 = vmul.f32 %v910, %v1363
        %v1520 = vmul.f32 %v911, %v1365
        %v1521 = vmul.f32 %v912, %v1367
        %v1522 = vmul.f32 %v913, %v1369
        %v1523 = vmul.f32 %v914, %v1371
        %v1524 = vsub.f32 %v1381, %v1516
        %v1525 = vsub.f32 %v1383, %v1517
        %v1526 = vsub.f32 %v1385, %v1518
        %v1527 = vsub.f32 %v1387, %v1519
        %v1528 = vsub.f32 %v1389, %v1520
        %v1529 = vsub.f32 %v1391, %v1521
        %v1530 = vsub.f32 %v1393, %v1522
        %v1531 = vsub.f32 %v1395, %v1523
        %v1532 = vmul.f32 %v907, %v1436
        %v1533 = vmul.f32 %v908, %v1437
        %v1534 = vmul.f32 %v909, %v1438
        %v1535 = vmul.f32 %v910, %v1439
        %v1536 = vmul.f32 %v911, %v1440
        %v1537 = vmul.f32 %v912, %v1441
        %v1538 = vmul.f32 %v913, %v1442
        %v1539 = vmul.f32 %v914, %v1443
        %v1540 = vsub.f32 %v1468, %v1532
        %v1541 = vsub.f32 %v1469, %v1533
        %v1542 = vsub.f32 %v1470, %v1534
        %v1543 = vsub.f32 %v1471, %v1535
        %v1544 = vsub.f32 %v1472, %v1536
        %v1545 = vsub.f32 %v1473, %v1537
        %v1546 = vsub.f32 %v1474, %v1538
        %v1547 = vsub.f32 %v1475, %v1539
        %v1548 = vmul.f32 %v1357, %v899
        %v1549 = vmul.f32 %v1359, %v900
        %v1550 = vmul.f32 %v1361, %v901
        %v1551 = vmul.f32 %v1363, %v902
        %v1552 = vmul.f32 %v1365, %v903
        %v1553 = vmul.f32 %v1367, %v904
        %v1554 = vmul.f32 %v1369, %v905
        %v1555 = vmul.f32 %v1371, %v906
        %v1556 = vmul.f32 %v1548, %v820
        %v1557 = vmul.f32 %v1549, %v822
        %v1558 = vmul.f32 %v1550, %v824
        %v1559 = vmul.f32 %v1551, %v826
        %v1560 = vmul.f32 %v1552, %v828
        %v1561 = vmul.f32 %v1553, %v830
        %v1562 = vmul.f32 %v1554, %v832
        %v1563 = vmul.f32 %v1555, %v834
        %v1564 = vsub.f32 %v1381, %v1556
        %v1565 = vsub.f32 %v1383, %v1557
        %v1566 = vsub.f32 %v1385, %v1558
        %v1567 = vsub.f32 %v1387, %v1559
        %v1568 = vsub.f32 %v1389, %v1560
        %v1569 = vsub.f32 %v1391, %v1561
        %v1570 = vsub.f32 %v1393, %v1562
        %v1571 = vsub.f32 %v1395, %v1563
        %v1572 = vmul.f32 %v1548, %v1357
        %v1573 = vmul.f32 %v1549, %v1359
        %v1574 = vmul.f32 %v1550, %v1361
        %v1575 = vmul.f32 %v1551, %v1363
        %v1576 = vmul.f32 %v1552, %v1365
        %v1577 = vmul.f32 %v1553, %v1367
        %v1578 = vmul.f32 %v1554, %v1369
        %v1579 = vmul.f32 %v1555, %v1371
        %v1580 = vsub.f32 %v1508, %v1572
        %v1581 = vsub.f32 %v1509, %v1573
        %v1582 = vsub.f32 %v1510, %v1574
        %v1583 = vsub.f32 %v1511, %v1575
        %v1584 = vsub.f32 %v1512, %v1576
        %v1585 = vsub.f32 %v1513, %v1577
        %v1586 = vsub.f32 %v1514, %v1578
        %v1587 = vsub.f32 %v1515, %v1579
        %v1588 = vmul.f32 %v1548, %v1436
        %v1589 = vmul.f32 %v1549, %v1437
        %v1590 = vmul.f32 %v1550, %v1438
        %v1591 = vmul.f32 %v1551, %v1439
        %v1592 = vmul.f32 %v1552, %v1440
        %v1593 = vmul.f32 %v1553, %v1441
        %v1594 = vmul.f32 %v1554, %v1442
        %v1595 = vmul.f32 %v1555, %v1443
        %v1596 = vsub.f32 %v1132, %v1588
        %v1597 = vsub.f32 %v1134, %v1589
        %v1598 = vsub.f32 %v1136, %v1590
        %v1599 = vsub.f32 %v1138, %v1591
        %v1600 = vsub.f32 %v1140, %v1592
        %v1601 = vsub.f32 %v1142, %v1593
        %v1602 = vsub.f32 %v1144, %v1594
        %v1603 = vsub.f32 %v1146, %v1595
        %v1604 = vmul.f32 1.0, %v960
        %v1605 = vmul.f32 1.0, %v975
        %v1606 = vmul.f32 1.0, %v990
        %v1607 = vmul.f32 1.0, %v1005
        %v1608 = vmul.f32 1.0, %v1020
        %v1609 = vmul.f32 1.0, %v1035
        %v1610 = vmul.f32 1.0, %v1050
        %v1611 = vmul.f32 1.0, %v1065
        %v1612 = vmul.f32 %v1564, %v1604
        %v1613 = vmul.f32 %v1565, %v1605
        %v1614 = vmul.f32 %v1566, %v1606
        %v1615 = vmul.f32 %v1567, %v1607
        %v1616 = vmul.f32 %v1568, %v1608
        %v1617 = vmul.f32 %v1569, %v1609
        %v1618 = vmul.f32 %v1570, %v1610
        %v1619 = vmul.f32 %v1571, %v1611
        %v1620 = vmul.f32 %v1612, %v1524
        %v1621 = vmul.f32 %v1613, %v1525
        %v1622 = vmul.f32 %v1614, %v1526
        %v1623 = vmul.f32 %v1615, %v1527
        %v1624 = vmul.f32 %v1616, %v1528
        %v1625 = vmul.f32 %v1617, %v1529
        %v1626 = vmul.f32 %v1618, %v1530
        %v1627 = vmul.f32 %v1619, %v1531
        %v1628 = vsub.f32 %v1580, %v1620
        %v1629 = vsub.f32 %v1581, %v1621
        %v1630 = vsub.f32 %v1582, %v1622
        %v1631 = vsub.f32 %v1583, %v1623
        %v1632 = vsub.f32 %v1584, %v1624
        %v1633 = vsub.f32 %v1585, %v1625
        %v1634 = vsub.f32 %v1586, %v1626
        %v1635 = vsub.f32 %v1587, %v1627
        %v1636 = vmul.f32 %v1612, %v1540
        %v1637 = vmul.f32 %v1613, %v1541
        %v1638 = vmul.f32 %v1614, %v1542
        %v1639 = vmul.f32 %v1615, %v1543
        %v1640 = vmul.f32 %v1616, %v1544
        %v1641 = vmul.f32 %v1617, %v1545
        %v1642 = vmul.f32 %v1618, %v1546
        %v1643 = vmul.f32 %v1619, %v1547
        %v1644 = vsub.f32 %v1596, %v1636
        %v1645 = vsub.f32 %v1597, %v1637
        %v1646 = vsub.f32 %v1598, %v1638
        %v1647 = vsub.f32 %v1599, %v1639
        %v1648 = vsub.f32 %v1600, %v1640
        %v1649 = vsub.f32 %v1601, %v1641
        %v1650 = vsub.f32 %v1602, %v1642
        %v1651 = vsub.f32 %v1603, %v1643
        %v1652 = vrcp.pop %v1628
        %v1653 = vmul.f32 %v1628, %v1652
        %v1654 = vsub.f32 1.0, %v1653
        %v1655 = vmul.f32 %v1652, %v1654
        %v1656 = vadd.f32 %v1652, %v1655
        %vm1657 = vweird.f32 %v1628
        %vm1658 = vweird.f32 %v1652
        %vm1659 = vmor %vm1657, %vm1658
        %v1660 = vsel %vm1659, %v1652, %v1656
        %v1661 = vand.u32 2147483647, %v1628
        %vm1662 = vcmp.eq.f32.partialorder %v1661, 8.507059e+37
        %v1663 = vand.u32 %v1628, 2147483648
        %v1664 = vor.u32 1.1754944e-38, %v1663
        %v1665 = vsel %vm1662, %v1664, %v1660
        %v1666 = vmul.f32 %v1644, %v1665
        %v1667 = vrcp.pop %v1629
        %v1668 = vmul.f32 %v1629, %v1667
        %v1669 = vsub.f32 1.0, %v1668
        %v1670 = vmul.f32 %v1667, %v1669
        %v1671 = vadd.f32 %v1667, %v1670
        %vm1672 = vweird.f32 %v1629
        %vm1673 = vweird.f32 %v1667
        %vm1674 = vmor %vm1672, %vm1673
        %v1675 = vsel %vm1674, %v1667, %v1671
        %v1676 = vand.u32 2147483647, %v1629
        %vm1677 = vcmp.eq.f32.partialorder %v1676, 8.507059e+37
        %v1678 = vand.u32 %v1629, 2147483648
        %v1679 = vor.u32 1.1754944e-38, %v1678
        %v1680 = vsel %vm1677, %v1679, %v1675
        %v1681 = vmul.f32 %v1645, %v1680
        %v1682 = vrcp.pop %v1630
        %v1683 = vmul.f32 %v1630, %v1682
        %v1684 = vsub.f32 1.0, %v1683
        %v1685 = vmul.f32 %v1682, %v1684
        %v1686 = vadd.f32 %v1682, %v1685
        %vm1687 = vweird.f32 %v1630
        %vm1688 = vweird.f32 %v1682
        %vm1689 = vmor %vm1687, %vm1688
        %v1690 = vsel %vm1689, %v1682, %v1686
        %v1691 = vand.u32 2147483647, %v1630
        %vm1692 = vcmp.eq.f32.partialorder %v1691, 8.507059e+37
        %v1693 = vand.u32 %v1630, 2147483648
        %v1694 = vor.u32 1.1754944e-38, %v1693
        %v1695 = vsel %vm1692, %v1694, %v1690
        %v1696 = vmul.f32 %v1646, %v1695
        %v1697 = vrcp.pop %v1631
        %v1698 = vmul.f32 %v1631, %v1697
        %v1699 = vsub.f32 1.0, %v1698
        %v1700 = vmul.f32 %v1697, %v1699
        %v1701 = vadd.f32 %v1697, %v1700
        %vm1702 = vweird.f32 %v1631
        %vm1703 = vweird.f32 %v1697
        %vm1704 = vmor %vm1702, %vm1703
        %v1705 = vsel %vm1704, %v1697, %v1701
        %v1706 = vand.u32 2147483647, %v1631
        %vm1707 = vcmp.eq.f32.partialorder %v1706, 8.507059e+37
        %v1708 = vand.u32 %v1631, 2147483648
        %v1709 = vor.u32 1.1754944e-38, %v1708
        %v1710 = vsel %vm1707, %v1709, %v1705
        %v1711 = vmul.f32 %v1647, %v1710
        %v1712 = vrcp.pop %v1632
        %v1713 = vmul.f32 %v1632, %v1712
        %v1714 = vsub.f32 1.0, %v1713
        %v1715 = vmul.f32 %v1712, %v1714
        %v1716 = vadd.f32 %v1712, %v1715
        %vm1717 = vweird.f32 %v1632
        %vm1718 = vweird.f32 %v1712
        %vm1719 = vmor %vm1717, %vm1718
        %v1720 = vsel %vm1719, %v1712, %v1716
        %v1721 = vand.u32 2147483647, %v1632
        %vm1722 = vcmp.eq.f32.partialorder %v1721, 8.507059e+37
        %v1723 = vand.u32 %v1632, 2147483648
        %v1724 = vor.u32 1.1754944e-38, %v1723
        %v1725 = vsel %vm1722, %v1724, %v1720
        %v1726 = vmul.f32 %v1648, %v1725
        %v1727 = vrcp.pop %v1633
        %v1728 = vmul.f32 %v1633, %v1727
        %v1729 = vsub.f32 1.0, %v1728
        %v1730 = vmul.f32 %v1727, %v1729
        %v1731 = vadd.f32 %v1727, %v1730
        %vm1732 = vweird.f32 %v1633
        %vm1733 = vweird.f32 %v1727
        %vm1734 = vmor %vm1732, %vm1733
        %v1735 = vsel %vm1734, %v1727, %v1731
        %v1736 = vand.u32 2147483647, %v1633
        %vm1737 = vcmp.eq.f32.partialorder %v1736, 8.507059e+37
        %v1738 = vand.u32 %v1633, 2147483648
        %v1739 = vor.u32 1.1754944e-38, %v1738
        %v1740 = vsel %vm1737, %v1739, %v1735
        %v1741 = vmul.f32 %v1649, %v1740
        %v1742 = vrcp.pop %v1634
        %v1743 = vmul.f32 %v1634, %v1742
        %v1744 = vsub.f32 1.0, %v1743
        %v1745 = vmul.f32 %v1742, %v1744
        %v1746 = vadd.f32 %v1742, %v1745
        %vm1747 = vweird.f32 %v1634
        %vm1748 = vweird.f32 %v1742
        %vm1749 = vmor %vm1747, %vm1748
        %v1750 = vsel %vm1749, %v1742, %v1746
        %v1751 = vand.u32 2147483647, %v1634
        %vm1752 = vcmp.eq.f32.partialorder %v1751, 8.507059e+37
        %v1753 = vand.u32 %v1634, 2147483648
        %v1754 = vor.u32 1.1754944e-38, %v1753
        %v1755 = vsel %vm1752, %v1754, %v1750
        %v1756 = vmul.f32 %v1650, %v1755
        %v1757 = vrcp.pop %v1635
        %v1758 = vmul.f32 %v1635, %v1757
        %v1759 = vsub.f32 1.0, %v1758
        %v1760 = vmul.f32 %v1757, %v1759
        %v1761 = vadd.f32 %v1757, %v1760
        %vm1762 = vweird.f32 %v1635
        %vm1763 = vweird.f32 %v1757
        %vm1764 = vmor %vm1762, %vm1763
        %v1765 = vsel %vm1764, %v1757, %v1761
        %v1766 = vand.u32 2147483647, %v1635
        %vm1767 = vcmp.eq.f32.partialorder %v1766, 8.507059e+37
        %v1768 = vand.u32 %v1635, 2147483648
        %v1769 = vor.u32 1.1754944e-38, %v1768
        %v1770 = vsel %vm1767, %v1769, %v1765
        %v1771 = vmul.f32 %v1651, %v1770
        %v1772 = vmul.f32 %v1524, %v1666
        %v1773 = vmul.f32 %v1525, %v1681
        %v1774 = vmul.f32 %v1526, %v1696
        %v1775 = vmul.f32 %v1527, %v1711
        %v1776 = vmul.f32 %v1528, %v1726
        %v1777 = vmul.f32 %v1529, %v1741
        %v1778 = vmul.f32 %v1530, %v1756
        %v1779 = vmul.f32 %v1531, %v1771
        %v1780 = vsub.f32 %v1540, %v1772
        %v1781 = vsub.f32 %v1541, %v1773
        %v1782 = vsub.f32 %v1542, %v1774
        %v1783 = vsub.f32 %v1543, %v1775
        %v1784 = vsub.f32 %v1544, %v1776
        %v1785 = vsub.f32 %v1545, %v1777
        %v1786 = vsub.f32 %v1546, %v1778
        %v1787 = vsub.f32 %v1547, %v1779
        %v1788 = vmul.f32 %v1780, %v960
        %v1789 = vmul.f32 %v1781, %v975
        %v1790 = vmul.f32 %v1782, %v990
        %v1791 = vmul.f32 %v1783, %v1005
        %v1792 = vmul.f32 %v1784, %v1020
        %v1793 = vmul.f32 %v1785, %v1035
        %v1794 = vmul.f32 %v1786, %v1050
        %v1795 = vmul.f32 %v1787, %v1065
        %v1796 = vmul.f32 %v820, %v1788
        %v1797 = vmul.f32 %v822, %v1789
        %v1798 = vmul.f32 %v824, %v1790
        %v1799 = vmul.f32 %v826, %v1791
        %v1800 = vmul.f32 %v828, %v1792
        %v1801 = vmul.f32 %v830, %v1793
        %v1802 = vmul.f32 %v832, %v1794
        %v1803 = vmul.f32 %v834, %v1795
        %v1804 = vsub.f32 %v1436, %v1796
        %v1805 = vsub.f32 %v1437, %v1797
        %v1806 = vsub.f32 %v1438, %v1798
        %v1807 = vsub.f32 %v1439, %v1799
        %v1808 = vsub.f32 %v1440, %v1800
        %v1809 = vsub.f32 %v1441, %v1801
        %v1810 = vsub.f32 %v1442, %v1802
        %v1811 = vsub.f32 %v1443, %v1803
        %v1812 = vmul.f32 %v1357, %v1666
        %v1813 = vmul.f32 %v1359, %v1681
        %v1814 = vmul.f32 %v1361, %v1696
        %v1815 = vmul.f32 %v1363, %v1711
        %v1816 = vmul.f32 %v1365, %v1726
        %v1817 = vmul.f32 %v1367, %v1741
        %v1818 = vmul.f32 %v1369, %v1756
        %v1819 = vmul.f32 %v1371, %v1771
        %v1820 = vsub.f32 %v1804, %v1812
        %v1821 = vsub.f32 %v1805, %v1813
        %v1822 = vsub.f32 %v1806, %v1814
        %v1823 = vsub.f32 %v1807, %v1815
        %v1824 = vsub.f32 %v1808, %v1816
        %v1825 = vsub.f32 %v1809, %v1817
        %v1826 = vsub.f32 %v1810, %v1818
        %v1827 = vsub.f32 %v1811, %v1819
        %v1828 = vmul.f32 %v1820, %v463
        %v1829 = vmul.f32 %v1821, %v478
        %v1830 = vmul.f32 %v1822, %v493
        %v1831 = vmul.f32 %v1823, %v508
        %v1832 = vmul.f32 %v1824, %v523
        %v1833 = vmul.f32 %v1825, %v538
        %v1834 = vmul.f32 %v1826, %v553
        %v1835 = vmul.f32 %v1827, %v568
        %v1836 = vmul.f32 %v1828, %v395
        %v1837 = vmul.f32 %v1829, %v398
        %v1838 = vmul.f32 %v1830, %v401
        %v1839 = vmul.f32 %v1831, %v404
        %v1840 = vmul.f32 %v1832, %v407
        %v1841 = vmul.f32 %v1833, %v410
        %v1842 = vmul.f32 %v1834, %v413
        %v1843 = vmul.f32 %v1835, %v416
        %v1844 = vsub.f32 %v183, %v1836
        %v1845 = vsub.f32 %v184, %v1837
        %v1846 = vsub.f32 %v185, %v1838
        %v1847 = vsub.f32 %v186, %v1839
        %v1848 = vsub.f32 %v187, %v1840
        %v1849 = vsub.f32 %v188, %v1841
        %v1850 = vsub.f32 %v189, %v1842
        %v1851 = vsub.f32 %v190, %v1843
        %v1852 = vmul.f32 %v1788, %v788
        %v1853 = vmul.f32 %v1789, %v791
        %v1854 = vmul.f32 %v1790, %v794
        %v1855 = vmul.f32 %v1791, %v797
        %v1856 = vmul.f32 %v1792, %v800
        %v1857 = vmul.f32 %v1793, %v803
        %v1858 = vmul.f32 %v1794, %v806
        %v1859 = vmul.f32 %v1795, %v809
        %v1860 = vsub.f32 %v1844, %v1852
        %v1861 = vsub.f32 %v1845, %v1853
        %v1862 = vsub.f32 %v1846, %v1854
        %v1863 = vsub.f32 %v1847, %v1855
        %v1864 = vsub.f32 %v1848, %v1856
        %v1865 = vsub.f32 %v1849, %v1857
        %v1866 = vsub.f32 %v1850, %v1858
        %v1867 = vsub.f32 %v1851, %v1859
        %v1868 = vmul.f32 %v1666, %v1325
        %v1869 = vmul.f32 %v1681, %v1328
        %v1870 = vmul.f32 %v1696, %v1331
        %v1871 = vmul.f32 %v1711, %v1334
        %v1872 = vmul.f32 %v1726, %v1337
        %v1873 = vmul.f32 %v1741, %v1340
        %v1874 = vmul.f32 %v1756, %v1343
        %v1875 = vmul.f32 %v1771, %v1346
        %v1876 = vsub.f32 %v1860, %v1868
        %v1877 = vsub.f32 %v1861, %v1869
        %v1878 = vsub.f32 %v1862, %v1870
        %v1879 = vsub.f32 %v1863, %v1871
        %v1880 = vsub.f32 %v1864, %v1872
        %v1881 = vsub.f32 %v1865, %v1873
        %v1882 = vsub.f32 %v1866, %v1874
        %v1883 = vsub.f32 %v1867, %v1875
        %v1884 = vsel %vm1283, -inf, %v1876
        %v1885 = vsel %vm1284, -inf, %v1877
        %v1886 = vsel %vm1285, -inf, %v1878
        %v1887 = vsel %vm1286, -inf, %v1879
        %v1888 = vsel %vm1287, -inf, %v1880
        %v1889 = vsel %vm1288, -inf, %v1881
        %v1890 = vsel %vm1289, -inf, %v1882
        %v1891 = vsel %vm1290, -inf, %v1883
        %1892 = vmax.xlane.f32.xlu0 %v1884
        %v1893 = vpop.xlane.xlu0 %1892
        %1894 = vmax.xlane.f32.xlu0 %v1885
        %v1895 = vpop.xlane.xlu0 %1894
        %1896 = vmax.xlane.f32.xlu0 %v1886
        %v1897 = vpop.xlane.xlu0 %1896
        %1898 = vmax.xlane.f32.xlu0 %v1887
        %v1899 = vpop.xlane.xlu0 %1898
        %1900 = vmax.xlane.f32.xlu0 %v1888
        %v1901 = vpop.xlane.xlu0 %1900
        %1902 = vmax.xlane.f32.xlu0 %v1889
        %v1903 = vpop.xlane.xlu0 %1902
        %1904 = vmax.xlane.f32.xlu0 %v1890
        %v1905 = vpop.xlane.xlu0 %1904
        %1906 = vmax.xlane.f32.xlu0 %v1891
        %v1907 = vpop.xlane.xlu0 %1906
        %vm1908 = vcmp.ge.f32.partialorder %v1884, %v1893
        %vm1909 = vcmp.ge.f32.partialorder %v1885, %v1895
        %vm1910 = vcmp.ge.f32.partialorder %v1886, %v1897
        %vm1911 = vcmp.ge.f32.partialorder %v1887, %v1899
        %vm1912 = vcmp.ge.f32.partialorder %v1888, %v1901
        %vm1913 = vcmp.ge.f32.partialorder %v1889, %v1903
        %vm1914 = vcmp.ge.f32.partialorder %v1890, %v1905
        %vm1915 = vcmp.ge.f32.partialorder %v1891, %v1907
        %v1916 = vsel %vm1908, %v208, 128
        %v1917 = vsel %vm1909, %v208, 128
        %v1918 = vsel %vm1910, %v208, 128
        %v1919 = vsel %vm1911, %v208, 128
        %v1920 = vsel %vm1912, %v208, 128
        %v1921 = vsel %vm1913, %v208, 128
        %v1922 = vsel %vm1914, %v208, 128
        %v1923 = vsel %vm1915, %v208, 128
        %v1924 = vand.u32 %v1916, 65535
        %v1925 = vshra.s32 %v1916, 16
        %v1926 = vcvt.s32.f32 %v1924
        %v1927 = vcvt.s32.f32 %v1925
        %1928 = vmin.xlane.f32.xlu0 %v1927
        %v1929 = vpop.xlane.xlu0 %1928
        %vm1930 = vcmp.eq.f32.partialorder %v1927, %v1929
        %v1931 = vsel %vm1930, %v1926, inf
        %1932 = vmin.xlane.f32.xlu0 %v1931
        %v1933 = vpop.xlane.xlu0 %1932
        %v1934 = vcvt.f32.s32 %v1933
        %v1935 = vcvt.f32.s32 %v1929
        %v1936 = vshll.u32 %v1935, 16
        %v1937 = vadd.s32 %v1936, %v1934
        %v1938 = vand.u32 %v1917, 65535
        %v1939 = vshra.s32 %v1917, 16
        %v1940 = vcvt.s32.f32 %v1938
        %v1941 = vcvt.s32.f32 %v1939
        %1942 = vmin.xlane.f32.xlu0 %v1941
        %v1943 = vpop.xlane.xlu0 %1942
        %vm1944 = vcmp.eq.f32.partialorder %v1941, %v1943
        %v1945 = vsel %vm1944, %v1940, inf
        %1946 = vmin.xlane.f32.xlu0 %v1945
        %v1947 = vpop.xlane.xlu0 %1946
        %v1948 = vcvt.f32.s32 %v1947
        %v1949 = vcvt.f32.s32 %v1943
        %v1950 = vshll.u32 %v1949, 16
        %v1951 = vadd.s32 %v1950, %v1948
        %v1952 = vand.u32 %v1918, 65535
        %v1953 = vshra.s32 %v1918, 16
        %v1954 = vcvt.s32.f32 %v1952
        %v1955 = vcvt.s32.f32 %v1953
        %1956 = vmin.xlane.f32.xlu0 %v1955
        %v1957 = vpop.xlane.xlu0 %1956
        %vm1958 = vcmp.eq.f32.partialorder %v1955, %v1957
        %v1959 = vsel %vm1958, %v1954, inf
        %1960 = vmin.xlane.f32.xlu0 %v1959
        %v1961 = vpop.xlane.xlu0 %1960
        %v1962 = vcvt.f32.s32 %v1961
        %v1963 = vcvt.f32.s32 %v1957
        %v1964 = vshll.u32 %v1963, 16
        %v1965 = vadd.s32 %v1964, %v1962
        %v1966 = vand.u32 %v1919, 65535
        %v1967 = vshra.s32 %v1919, 16
        %v1968 = vcvt.s32.f32 %v1966
        %v1969 = vcvt.s32.f32 %v1967
        %1970 = vmin.xlane.f32.xlu0 %v1969
        %v1971 = vpop.xlane.xlu0 %1970
        %vm1972 = vcmp.eq.f32.partialorder %v1969, %v1971
        %v1973 = vsel %vm1972, %v1968, inf
        %1974 = vmin.xlane.f32.xlu0 %v1973
        %v1975 = vpop.xlane.xlu0 %1974
        %v1976 = vcvt.f32.s32 %v1975
        %v1977 = vcvt.f32.s32 %v1971
        %v1978 = vshll.u32 %v1977, 16
        %v1979 = vadd.s32 %v1978, %v1976
        %v1980 = vand.u32 %v1920, 65535
        %v1981 = vshra.s32 %v1920, 16
        %v1982 = vcvt.s32.f32 %v1980
        %v1983 = vcvt.s32.f32 %v1981
        %1984 = vmin.xlane.f32.xlu0 %v1983
        %v1985 = vpop.xlane.xlu0 %1984
        %vm1986 = vcmp.eq.f32.partialorder %v1983, %v1985
        %v1987 = vsel %vm1986, %v1982, inf
        %1988 = vmin.xlane.f32.xlu0 %v1987
        %v1989 = vpop.xlane.xlu0 %1988
        %v1990 = vcvt.f32.s32 %v1989
        %v1991 = vcvt.f32.s32 %v1985
        %v1992 = vshll.u32 %v1991, 16
        %v1993 = vadd.s32 %v1992, %v1990
        %v1994 = vand.u32 %v1921, 65535
        %v1995 = vshra.s32 %v1921, 16
        %v1996 = vcvt.s32.f32 %v1994
        %v1997 = vcvt.s32.f32 %v1995
        %1998 = vmin.xlane.f32.xlu0 %v1997
        %v1999 = vpop.xlane.xlu0 %1998
        %vm2000 = vcmp.eq.f32.partialorder %v1997, %v1999
        %v2001 = vsel %vm2000, %v1996, inf
        %2002 = vmin.xlane.f32.xlu0 %v2001
        %v2003 = vpop.xlane.xlu0 %2002
        %v2004 = vcvt.f32.s32 %v2003
        %v2005 = vcvt.f32.s32 %v1999
        %v2006 = vshll.u32 %v2005, 16
        %v2007 = vadd.s32 %v2006, %v2004
        %v2008 = vand.u32 %v1922, 65535
        %v2009 = vshra.s32 %v1922, 16
        %v2010 = vcvt.s32.f32 %v2008
        %v2011 = vcvt.s32.f32 %v2009
        %2012 = vmin.xlane.f32.xlu0 %v2011
        %v2013 = vpop.xlane.xlu0 %2012
        %vm2014 = vcmp.eq.f32.partialorder %v2011, %v2013
        %v2015 = vsel %vm2014, %v2010, inf
        %2016 = vmin.xlane.f32.xlu0 %v2015
        %v2017 = vpop.xlane.xlu0 %2016
        %v2018 = vcvt.f32.s32 %v2017
        %v2019 = vcvt.f32.s32 %v2013
        %v2020 = vshll.u32 %v2019, 16
        %v2021 = vadd.s32 %v2020, %v2018
        %v2022 = vand.u32 %v1923, 65535
        %v2023 = vshra.s32 %v1923, 16
        %v2024 = vcvt.s32.f32 %v2022
        %v2025 = vcvt.s32.f32 %v2023
        %2026 = vmin.xlane.f32.xlu0 %v2025
        %v2027 = vpop.xlane.xlu0 %2026
        %vm2028 = vcmp.eq.f32.partialorder %v2025, %v2027
        %v2029 = vsel %vm2028, %v2024, inf
        %2030 = vmin.xlane.f32.xlu0 %v2029
        %v2031 = vpop.xlane.xlu0 %2030
        %v2032 = vcvt.f32.s32 %v2031
        %v2033 = vcvt.f32.s32 %v2027
        %v2034 = vshll.u32 %v2033, 16
        %v2035 = vadd.s32 %v2034, %v2032
        %vm2036 = vcmp.eq.s32.totalorder %v208, %v1937
        %vm2037 = vcmp.eq.s32.totalorder %v208, %v1951
        %vm2038 = vcmp.eq.s32.totalorder %v208, %v1965
        %vm2039 = vcmp.eq.s32.totalorder %v208, %v1979
        %vm2040 = vcmp.eq.s32.totalorder %v208, %v1993
        %vm2041 = vcmp.eq.s32.totalorder %v208, %v2007
        %vm2042 = vcmp.eq.s32.totalorder %v208, %v2021
        %vm2043 = vcmp.eq.s32.totalorder %v208, %v2035
        %v2044 = vsel %vm2036, 1, 0
        %v2045 = vsel %vm2037, 1, 0
        %v2046 = vsel %vm2038, 1, 0
        %v2047 = vsel %vm2039, 1, 0
        %v2048 = vsel %vm2040, 1, 0
        %v2049 = vsel %vm2041, 1, 0
        %v2050 = vsel %vm2042, 1, 0
        %v2051 = vsel %vm2043, 1, 0
        %v2052 = vcvt.s32.f32 %v2044
        %v2053 = vcvt.s32.f32 %v2045
        %v2054 = vcvt.s32.f32 %v2046
        %v2055 = vcvt.s32.f32 %v2047
        %v2056 = vcvt.s32.f32 %v2048
        %v2057 = vcvt.s32.f32 %v2049
        %v2058 = vcvt.s32.f32 %v2050
        %v2059 = vcvt.s32.f32 %v2051
        %2060 = vmatpush.msra.mxu0 %v206
        %2061 = vmatpush.msra.mxu0 %v205
        %2062 = vmatpush.msra.mxu0 %v204
        %2063 = vmatpush.msra.mxu0 %v203
        %2064 = vmatpush.msra.mxu0 %v202
        %2065 = vmatpush.msra.mxu0 %v201
        %2066 = vmatpush.msra.mxu0 %v200
        %2067 = vmatpush.msra.mxu0 %v199
        %2068 = vmatpush.msra.mxu0 %v198
        %2069 = vmatpush.msra.mxu0 %v197
        %2070 = vmatpush.msra.mxu0 %v196
        %2071 = vmatpush.msra.mxu0 %v195
        %2072 = vmatpush.msra.mxu0 %v194
        %2073 = vmatpush.msra.mxu0 %v193
        %2074 = vmatpush.msra.mxu0 %v192
        %2075 = vmatpush.msra.mxu0 %v191
        %2076 = vmatmul.f32.gmra.mxu0 %v2052
        %v2077 = vpop.f32.mrf.mxu0
        %v2078 = vadd.f32 0.0, %v2077
        %2079 = vmatmul.f32.gmra.mxu0 %v2053
        %v2080 = vpop.f32.mrf.mxu0
        %v2081 = vadd.f32 0.0, %v2080
        %2082 = vmatmul.f32.gmra.mxu0 %v2054
        %v2083 = vpop.f32.mrf.mxu0
        %v2084 = vadd.f32 0.0, %v2083
        %2085 = vmatmul.f32.gmra.mxu0 %v2055
        %v2086 = vpop.f32.mrf.mxu0
        %v2087 = vadd.f32 0.0, %v2086
        %2088 = vmatmul.f32.gmra.mxu0 %v2056
        %v2089 = vpop.f32.mrf.mxu0
        %v2090 = vadd.f32 0.0, %v2089
        %2091 = vmatmul.f32.gmra.mxu0 %v2057
        %v2092 = vpop.f32.mrf.mxu0
        %v2093 = vadd.f32 0.0, %v2092
        %2094 = vmatmul.f32.gmra.mxu0 %v2058
        %v2095 = vpop.f32.mrf.mxu0
        %v2096 = vadd.f32 0.0, %v2095
        %2097 = vmatmul.f32.gmra.mxu0 %v2059
        %v2098 = vpop.f32.mrf.mxu0
        %v2099 = vadd.f32 0.0, %v2098
        %2100 = vdwg.mxu0
        %v2101 = vmul.f32 %v2052, %v395
        %v2102 = vmul.f32 %v2053, %v398
        %v2103 = vmul.f32 %v2054, %v401
        %v2104 = vmul.f32 %v2055, %v404
        %v2105 = vmul.f32 %v2056, %v407
        %v2106 = vmul.f32 %v2057, %v410
        %v2107 = vmul.f32 %v2058, %v413
        %v2108 = vmul.f32 %v2059, %v416
        %2109 = vadd.xlane.f32.xlu0 %v2101
        %v2110 = vpop.xlane.xlu0 %2109
        %2111 = vadd.xlane.f32.xlu0 %v2102
        %v2112 = vpop.xlane.xlu0 %2111
        %2113 = vadd.xlane.f32.xlu0 %v2103
        %v2114 = vpop.xlane.xlu0 %2113
        %2115 = vadd.xlane.f32.xlu0 %v2104
        %v2116 = vpop.xlane.xlu0 %2115
        %2117 = vadd.xlane.f32.xlu0 %v2105
        %v2118 = vpop.xlane.xlu0 %2117
        %2119 = vadd.xlane.f32.xlu0 %v2106
        %v2120 = vpop.xlane.xlu0 %2119
        %2121 = vadd.xlane.f32.xlu0 %v2107
        %v2122 = vpop.xlane.xlu0 %2121
        %2123 = vadd.xlane.f32.xlu0 %v2108
        %v2124 = vpop.xlane.xlu0 %2123
        %v2125 = vmul.f32 %v2052, %v788
        %v2126 = vmul.f32 %v2053, %v791
        %v2127 = vmul.f32 %v2054, %v794
        %v2128 = vmul.f32 %v2055, %v797
        %v2129 = vmul.f32 %v2056, %v800
        %v2130 = vmul.f32 %v2057, %v803
        %v2131 = vmul.f32 %v2058, %v806
        %v2132 = vmul.f32 %v2059, %v809
        %2133 = vadd.xlane.f32.xlu0 %v2125
        %v2134 = vpop.xlane.xlu0 %2133
        %2135 = vadd.xlane.f32.xlu0 %v2126
        %v2136 = vpop.xlane.xlu0 %2135
        %2137 = vadd.xlane.f32.xlu0 %v2127
        %v2138 = vpop.xlane.xlu0 %2137
        %2139 = vadd.xlane.f32.xlu0 %v2128
        %v2140 = vpop.xlane.xlu0 %2139
        %2141 = vadd.xlane.f32.xlu0 %v2129
        %v2142 = vpop.xlane.xlu0 %2141
        %2143 = vadd.xlane.f32.xlu0 %v2130
        %v2144 = vpop.xlane.xlu0 %2143
        %2145 = vadd.xlane.f32.xlu0 %v2131
        %v2146 = vpop.xlane.xlu0 %2145
        %2147 = vadd.xlane.f32.xlu0 %v2132
        %v2148 = vpop.xlane.xlu0 %2147
        %v2149 = vmul.f32 %v2052, %v1325
        %v2150 = vmul.f32 %v2053, %v1328
        %v2151 = vmul.f32 %v2054, %v1331
        %v2152 = vmul.f32 %v2055, %v1334
        %v2153 = vmul.f32 %v2056, %v1337
        %v2154 = vmul.f32 %v2057, %v1340
        %v2155 = vmul.f32 %v2058, %v1343
        %v2156 = vmul.f32 %v2059, %v1346
        %2157 = vadd.xlane.f32.xlu0 %v2149
        %v2158 = vpop.xlane.xlu0 %2157
        %2159 = vadd.xlane.f32.xlu0 %v2150
        %v2160 = vpop.xlane.xlu0 %2159
        %2161 = vadd.xlane.f32.xlu0 %v2151
        %v2162 = vpop.xlane.xlu0 %2161
        %2163 = vadd.xlane.f32.xlu0 %v2152
        %v2164 = vpop.xlane.xlu0 %2163
        %2165 = vadd.xlane.f32.xlu0 %v2153
        %v2166 = vpop.xlane.xlu0 %2165
        %2167 = vadd.xlane.f32.xlu0 %v2154
        %v2168 = vpop.xlane.xlu0 %2167
        %2169 = vadd.xlane.f32.xlu0 %v2155
        %v2170 = vpop.xlane.xlu0 %2169
        %2171 = vadd.xlane.f32.xlu0 %v2156
        %v2172 = vpop.xlane.xlu0 %2171
        %v2173 = vmul.f32 %v2052, %v2078
        %v2174 = vmul.f32 %v2053, %v2081
        %v2175 = vmul.f32 %v2054, %v2084
        %v2176 = vmul.f32 %v2055, %v2087
        %v2177 = vmul.f32 %v2056, %v2090
        %v2178 = vmul.f32 %v2057, %v2093
        %v2179 = vmul.f32 %v2058, %v2096
        %v2180 = vmul.f32 %v2059, %v2099
        %2181 = vadd.xlane.f32.xlu0 %v2173
        %v2182 = vpop.xlane.xlu0 %2181
        %2183 = vadd.xlane.f32.xlu0 %v2174
        %v2184 = vpop.xlane.xlu0 %2183
        %2185 = vadd.xlane.f32.xlu0 %v2175
        %v2186 = vpop.xlane.xlu0 %2185
        %2187 = vadd.xlane.f32.xlu0 %v2176
        %v2188 = vpop.xlane.xlu0 %2187
        %2189 = vadd.xlane.f32.xlu0 %v2177
        %v2190 = vpop.xlane.xlu0 %2189
        %2191 = vadd.xlane.f32.xlu0 %v2178
        %v2192 = vpop.xlane.xlu0 %2191
        %2193 = vadd.xlane.f32.xlu0 %v2179
        %v2194 = vpop.xlane.xlu0 %2193
        %2195 = vadd.xlane.f32.xlu0 %v2180
        %v2196 = vpop.xlane.xlu0 %2195
        %v2197 = vmul.f32 %v1828, %v427
        %v2198 = vmul.f32 %v1829, %v429
        %v2199 = vmul.f32 %v1830, %v431
        %v2200 = vmul.f32 %v1831, %v433
        %v2201 = vmul.f32 %v1832, %v435
        %v2202 = vmul.f32 %v1833, %v437
        %v2203 = vmul.f32 %v1834, %v439
        %v2204 = vmul.f32 %v1835, %v441
        %v2205 = vsub.f32 %v210, %v2197
        %v2206 = vsub.f32 %v212, %v2198
        %v2207 = vsub.f32 %v214, %v2199
        %v2208 = vsub.f32 %v216, %v2200
        %v2209 = vsub.f32 %v218, %v2201
        %v2210 = vsub.f32 %v220, %v2202
        %v2211 = vsub.f32 %v222, %v2203
        %v2212 = vsub.f32 %v224, %v2204
        %v2213 = vsub.f32 %v2205, %v1796
        %v2214 = vsub.f32 %v2206, %v1797
        %v2215 = vsub.f32 %v2207, %v1798
        %v2216 = vsub.f32 %v2208, %v1799
        %v2217 = vsub.f32 %v2209, %v1800
        %v2218 = vsub.f32 %v2210, %v1801
        %v2219 = vsub.f32 %v2211, %v1802
        %v2220 = vsub.f32 %v2212, %v1803
        %v2221 = vsub.f32 %v2213, %v1812
        %v2222 = vsub.f32 %v2214, %v1813
        %v2223 = vsub.f32 %v2215, %v1814
        %v2224 = vsub.f32 %v2216, %v1815
        %v2225 = vsub.f32 %v2217, %v1816
        %v2226 = vsub.f32 %v2218, %v1817
        %v2227 = vsub.f32 %v2219, %v1818
        %v2228 = vsub.f32 %v2220, %v1819
        %v2229 = vmul.f32 %v1828, %v820
        %v2230 = vmul.f32 %v1829, %v822
        %v2231 = vmul.f32 %v1830, %v824
        %v2232 = vmul.f32 %v1831, %v826
        %v2233 = vmul.f32 %v1832, %v828
        %v2234 = vmul.f32 %v1833, %v830
        %v2235 = vmul.f32 %v1834, %v832
        %v2236 = vmul.f32 %v1835, %v834
        %v2237 = vsub.f32 %v883, %v2229
        %v2238 = vsub.f32 %v884, %v2230
        %v2239 = vsub.f32 %v885, %v2231
        %v2240 = vsub.f32 %v886, %v2232
        %v2241 = vsub.f32 %v887, %v2233
        %v2242 = vsub.f32 %v888, %v2234
        %v2243 = vsub.f32 %v889, %v2235
        %v2244 = vsub.f32 %v890, %v2236
        %v2245 = vmul.f32 %v1788, %v844
        %v2246 = vmul.f32 %v1789, %v846
        %v2247 = vmul.f32 %v1790, %v848
        %v2248 = vmul.f32 %v1791, %v850
        %v2249 = vmul.f32 %v1792, %v852
        %v2250 = vmul.f32 %v1793, %v854
        %v2251 = vmul.f32 %v1794, %v856
        %v2252 = vmul.f32 %v1795, %v858
        %v2253 = vsub.f32 %v2237, %v2245
        %v2254 = vsub.f32 %v2238, %v2246
        %v2255 = vsub.f32 %v2239, %v2247
        %v2256 = vsub.f32 %v2240, %v2248
        %v2257 = vsub.f32 %v2241, %v2249
        %v2258 = vsub.f32 %v2242, %v2250
        %v2259 = vsub.f32 %v2243, %v2251
        %v2260 = vsub.f32 %v2244, %v2252
        %v2261 = vmul.f32 %v1666, %v1381
        %v2262 = vmul.f32 %v1681, %v1383
        %v2263 = vmul.f32 %v1696, %v1385
        %v2264 = vmul.f32 %v1711, %v1387
        %v2265 = vmul.f32 %v1726, %v1389
        %v2266 = vmul.f32 %v1741, %v1391
        %v2267 = vmul.f32 %v1756, %v1393
        %v2268 = vmul.f32 %v1771, %v1395
        %v2269 = vsub.f32 %v2253, %v2261
        %v2270 = vsub.f32 %v2254, %v2262
        %v2271 = vsub.f32 %v2255, %v2263
        %v2272 = vsub.f32 %v2256, %v2264
        %v2273 = vsub.f32 %v2257, %v2265
        %v2274 = vsub.f32 %v2258, %v2266
        %v2275 = vsub.f32 %v2259, %v2267
        %v2276 = vsub.f32 %v2260, %v2268
        %v2277 = vmul.f32 %v1828, %v1357
        %v2278 = vmul.f32 %v1829, %v1359
        %v2279 = vmul.f32 %v1830, %v1361
        %v2280 = vmul.f32 %v1831, %v1363
        %v2281 = vmul.f32 %v1832, %v1365
        %v2282 = vmul.f32 %v1833, %v1367
        %v2283 = vmul.f32 %v1834, %v1369
        %v2284 = vmul.f32 %v1835, %v1371
        %v2285 = vsub.f32 %v1500, %v2277
        %v2286 = vsub.f32 %v1501, %v2278
        %v2287 = vsub.f32 %v1502, %v2279
        %v2288 = vsub.f32 %v1503, %v2280
        %v2289 = vsub.f32 %v1504, %v2281
        %v2290 = vsub.f32 %v1505, %v2282
        %v2291 = vsub.f32 %v1506, %v2283
        %v2292 = vsub.f32 %v1507, %v2284
        %v2293 = vmul.f32 %v1788, %v1381
        %v2294 = vmul.f32 %v1789, %v1383
        %v2295 = vmul.f32 %v1790, %v1385
        %v2296 = vmul.f32 %v1791, %v1387
        %v2297 = vmul.f32 %v1792, %v1389
        %v2298 = vmul.f32 %v1793, %v1391
        %v2299 = vmul.f32 %v1794, %v1393
        %v2300 = vmul.f32 %v1795, %v1395
        %v2301 = vsub.f32 %v2285, %v2293
        %v2302 = vsub.f32 %v2286, %v2294
        %v2303 = vsub.f32 %v2287, %v2295
        %v2304 = vsub.f32 %v2288, %v2296
        %v2305 = vsub.f32 %v2289, %v2297
        %v2306 = vsub.f32 %v2290, %v2298
        %v2307 = vsub.f32 %v2291, %v2299
        %v2308 = vsub.f32 %v2292, %v2300
        %v2309 = vmul.f32 %v1666, %v1405
        %v2310 = vmul.f32 %v1681, %v1407
        %v2311 = vmul.f32 %v1696, %v1409
        %v2312 = vmul.f32 %v1711, %v1411
        %v2313 = vmul.f32 %v1726, %v1413
        %v2314 = vmul.f32 %v1741, %v1415
        %v2315 = vmul.f32 %v1756, %v1417
        %v2316 = vmul.f32 %v1771, %v1419
        %v2317 = vsub.f32 %v2301, %v2309
        %v2318 = vsub.f32 %v2302, %v2310
        %v2319 = vsub.f32 %v2303, %v2311
        %v2320 = vsub.f32 %v2304, %v2312
        %v2321 = vsub.f32 %v2305, %v2313
        %v2322 = vsub.f32 %v2306, %v2314
        %v2323 = vsub.f32 %v2307, %v2315
        %v2324 = vsub.f32 %v2308, %v2316
        %v2325 = vadd.f32 %v2182, 1e-10
        %v2326 = vadd.f32 %v2184, 1e-10
        %v2327 = vadd.f32 %v2186, 1e-10
        %v2328 = vadd.f32 %v2188, 1e-10
        %v2329 = vadd.f32 %v2190, 1e-10
        %v2330 = vadd.f32 %v2192, 1e-10
        %v2331 = vadd.f32 %v2194, 1e-10
        %v2332 = vadd.f32 %v2196, 1e-10
        %v2333 = vmul.f32 %v907, %v2110
        %v2334 = vmul.f32 %v908, %v2112
        %v2335 = vmul.f32 %v909, %v2114
        %v2336 = vmul.f32 %v910, %v2116
        %v2337 = vmul.f32 %v911, %v2118
        %v2338 = vmul.f32 %v912, %v2120
        %v2339 = vmul.f32 %v913, %v2122
        %v2340 = vmul.f32 %v914, %v2124
        %v2341 = vsub.f32 %v2134, %v2333
        %v2342 = vsub.f32 %v2136, %v2334
        %v2343 = vsub.f32 %v2138, %v2335
        %v2344 = vsub.f32 %v2140, %v2336
        %v2345 = vsub.f32 %v2142, %v2337
        %v2346 = vsub.f32 %v2144, %v2338
        %v2347 = vsub.f32 %v2146, %v2339
        %v2348 = vsub.f32 %v2148, %v2340
        %v2349 = vmul.f32 %v907, %v2221
        %v2350 = vmul.f32 %v908, %v2222
        %v2351 = vmul.f32 %v909, %v2223
        %v2352 = vmul.f32 %v910, %v2224
        %v2353 = vmul.f32 %v911, %v2225
        %v2354 = vmul.f32 %v912, %v2226
        %v2355 = vmul.f32 %v913, %v2227
        %v2356 = vmul.f32 %v914, %v2228
        %v2357 = vsub.f32 %v2269, %v2349
        %v2358 = vsub.f32 %v2270, %v2350
        %v2359 = vsub.f32 %v2271, %v2351
        %v2360 = vsub.f32 %v2272, %v2352
        %v2361 = vsub.f32 %v2273, %v2353
        %v2362 = vsub.f32 %v2274, %v2354
        %v2363 = vsub.f32 %v2275, %v2355
        %v2364 = vsub.f32 %v2276, %v2356
        %v2365 = vmul.f32 %v1548, %v2110
        %v2366 = vmul.f32 %v1549, %v2112
        %v2367 = vmul.f32 %v1550, %v2114
        %v2368 = vmul.f32 %v1551, %v2116
        %v2369 = vmul.f32 %v1552, %v2118
        %v2370 = vmul.f32 %v1553, %v2120
        %v2371 = vmul.f32 %v1554, %v2122
        %v2372 = vmul.f32 %v1555, %v2124
        %v2373 = vsub.f32 %v2158, %v2365
        %v2374 = vsub.f32 %v2160, %v2366
        %v2375 = vsub.f32 %v2162, %v2367
        %v2376 = vsub.f32 %v2164, %v2368
        %v2377 = vsub.f32 %v2166, %v2369
        %v2378 = vsub.f32 %v2168, %v2370
        %v2379 = vsub.f32 %v2170, %v2371
        %v2380 = vsub.f32 %v2172, %v2372
        %v2381 = vmul.f32 %v1548, %v2221
        %v2382 = vmul.f32 %v1549, %v2222
        %v2383 = vmul.f32 %v1550, %v2223
        %v2384 = vmul.f32 %v1551, %v2224
        %v2385 = vmul.f32 %v1552, %v2225
        %v2386 = vmul.f32 %v1553, %v2226
        %v2387 = vmul.f32 %v1554, %v2227
        %v2388 = vmul.f32 %v1555, %v2228
        %v2389 = vsub.f32 %v2317, %v2381
        %v2390 = vsub.f32 %v2318, %v2382
        %v2391 = vsub.f32 %v2319, %v2383
        %v2392 = vsub.f32 %v2320, %v2384
        %v2393 = vsub.f32 %v2321, %v2385
        %v2394 = vsub.f32 %v2322, %v2386
        %v2395 = vsub.f32 %v2323, %v2387
        %v2396 = vsub.f32 %v2324, %v2388
        %v2397 = vmul.f32 %v2110, %v899
        %v2398 = vmul.f32 %v2112, %v900
        %v2399 = vmul.f32 %v2114, %v901
        %v2400 = vmul.f32 %v2116, %v902
        %v2401 = vmul.f32 %v2118, %v903
        %v2402 = vmul.f32 %v2120, %v904
        %v2403 = vmul.f32 %v2122, %v905
        %v2404 = vmul.f32 %v2124, %v906
        %v2405 = vmul.f32 %v2397, %v820
        %v2406 = vmul.f32 %v2398, %v822
        %v2407 = vmul.f32 %v2399, %v824
        %v2408 = vmul.f32 %v2400, %v826
        %v2409 = vmul.f32 %v2401, %v828
        %v2410 = vmul.f32 %v2402, %v830
        %v2411 = vmul.f32 %v2403, %v832
        %v2412 = vmul.f32 %v2404, %v834
        %v2413 = vsub.f32 %v2134, %v2405
        %v2414 = vsub.f32 %v2136, %v2406
        %v2415 = vsub.f32 %v2138, %v2407
        %v2416 = vsub.f32 %v2140, %v2408
        %v2417 = vsub.f32 %v2142, %v2409
        %v2418 = vsub.f32 %v2144, %v2410
        %v2419 = vsub.f32 %v2146, %v2411
        %v2420 = vsub.f32 %v2148, %v2412
        %v2421 = vmul.f32 %v2397, %v1357
        %v2422 = vmul.f32 %v2398, %v1359
        %v2423 = vmul.f32 %v2399, %v1361
        %v2424 = vmul.f32 %v2400, %v1363
        %v2425 = vmul.f32 %v2401, %v1365
        %v2426 = vmul.f32 %v2402, %v1367
        %v2427 = vmul.f32 %v2403, %v1369
        %v2428 = vmul.f32 %v2404, %v1371
        %v2429 = vsub.f32 %v2158, %v2421
        %v2430 = vsub.f32 %v2160, %v2422
        %v2431 = vsub.f32 %v2162, %v2423
        %v2432 = vsub.f32 %v2164, %v2424
        %v2433 = vsub.f32 %v2166, %v2425
        %v2434 = vsub.f32 %v2168, %v2426
        %v2435 = vsub.f32 %v2170, %v2427
        %v2436 = vsub.f32 %v2172, %v2428
        %v2437 = vmul.f32 %v2397, %v2110
        %v2438 = vmul.f32 %v2398, %v2112
        %v2439 = vmul.f32 %v2399, %v2114
        %v2440 = vmul.f32 %v2400, %v2116
        %v2441 = vmul.f32 %v2401, %v2118
        %v2442 = vmul.f32 %v2402, %v2120
        %v2443 = vmul.f32 %v2403, %v2122
        %v2444 = vmul.f32 %v2404, %v2124
        %v2445 = vsub.f32 %v2325, %v2437
        %v2446 = vsub.f32 %v2326, %v2438
        %v2447 = vsub.f32 %v2327, %v2439
        %v2448 = vsub.f32 %v2328, %v2440
        %v2449 = vsub.f32 %v2329, %v2441
        %v2450 = vsub.f32 %v2330, %v2442
        %v2451 = vsub.f32 %v2331, %v2443
        %v2452 = vsub.f32 %v2332, %v2444
        %v2453 = vmul.f32 %v2397, %v2221
        %v2454 = vmul.f32 %v2398, %v2222
        %v2455 = vmul.f32 %v2399, %v2223
        %v2456 = vmul.f32 %v2400, %v2224
        %v2457 = vmul.f32 %v2401, %v2225
        %v2458 = vmul.f32 %v2402, %v2226
        %v2459 = vmul.f32 %v2403, %v2227
        %v2460 = vmul.f32 %v2404, %v2228
        %v2461 = vsub.f32 %v1893, %v2453
        %v2462 = vsub.f32 %v1895, %v2454
        %v2463 = vsub.f32 %v1897, %v2455
        %v2464 = vsub.f32 %v1899, %v2456
        %v2465 = vsub.f32 %v1901, %v2457
        %v2466 = vsub.f32 %v1903, %v2458
        %v2467 = vsub.f32 %v1905, %v2459
        %v2468 = vsub.f32 %v1907, %v2460
        %v2469 = vmul.f32 %v1612, %v2341
        %v2470 = vmul.f32 %v1613, %v2342
        %v2471 = vmul.f32 %v1614, %v2343
        %v2472 = vmul.f32 %v1615, %v2344
        %v2473 = vmul.f32 %v1616, %v2345
        %v2474 = vmul.f32 %v1617, %v2346
        %v2475 = vmul.f32 %v1618, %v2347
        %v2476 = vmul.f32 %v1619, %v2348
        %v2477 = vsub.f32 %v2373, %v2469
        %v2478 = vsub.f32 %v2374, %v2470
        %v2479 = vsub.f32 %v2375, %v2471
        %v2480 = vsub.f32 %v2376, %v2472
        %v2481 = vsub.f32 %v2377, %v2473
        %v2482 = vsub.f32 %v2378, %v2474
        %v2483 = vsub.f32 %v2379, %v2475
        %v2484 = vsub.f32 %v2380, %v2476
        %v2485 = vmul.f32 %v1612, %v2357
        %v2486 = vmul.f32 %v1613, %v2358
        %v2487 = vmul.f32 %v1614, %v2359
        %v2488 = vmul.f32 %v1615, %v2360
        %v2489 = vmul.f32 %v1616, %v2361
        %v2490 = vmul.f32 %v1617, %v2362
        %v2491 = vmul.f32 %v1618, %v2363
        %v2492 = vmul.f32 %v1619, %v2364
        %v2493 = vsub.f32 %v2389, %v2485
        %v2494 = vsub.f32 %v2390, %v2486
        %v2495 = vsub.f32 %v2391, %v2487
        %v2496 = vsub.f32 %v2392, %v2488
        %v2497 = vsub.f32 %v2393, %v2489
        %v2498 = vsub.f32 %v2394, %v2490
        %v2499 = vsub.f32 %v2395, %v2491
        %v2500 = vsub.f32 %v2396, %v2492
        %v2501 = vmul.f32 %v2413, %v1604
        %v2502 = vmul.f32 %v2414, %v1605
        %v2503 = vmul.f32 %v2415, %v1606
        %v2504 = vmul.f32 %v2416, %v1607
        %v2505 = vmul.f32 %v2417, %v1608
        %v2506 = vmul.f32 %v2418, %v1609
        %v2507 = vmul.f32 %v2419, %v1610
        %v2508 = vmul.f32 %v2420, %v1611
        %v2509 = vmul.f32 %v2501, %v1524
        %v2510 = vmul.f32 %v2502, %v1525
        %v2511 = vmul.f32 %v2503, %v1526
        %v2512 = vmul.f32 %v2504, %v1527
        %v2513 = vmul.f32 %v2505, %v1528
        %v2514 = vmul.f32 %v2506, %v1529
        %v2515 = vmul.f32 %v2507, %v1530
        %v2516 = vmul.f32 %v2508, %v1531
        %v2517 = vsub.f32 %v2429, %v2509
        %v2518 = vsub.f32 %v2430, %v2510
        %v2519 = vsub.f32 %v2431, %v2511
        %v2520 = vsub.f32 %v2432, %v2512
        %v2521 = vsub.f32 %v2433, %v2513
        %v2522 = vsub.f32 %v2434, %v2514
        %v2523 = vsub.f32 %v2435, %v2515
        %v2524 = vsub.f32 %v2436, %v2516
        %v2525 = vmul.f32 %v2501, %v2341
        %v2526 = vmul.f32 %v2502, %v2342
        %v2527 = vmul.f32 %v2503, %v2343
        %v2528 = vmul.f32 %v2504, %v2344
        %v2529 = vmul.f32 %v2505, %v2345
        %v2530 = vmul.f32 %v2506, %v2346
        %v2531 = vmul.f32 %v2507, %v2347
        %v2532 = vmul.f32 %v2508, %v2348
        %v2533 = vsub.f32 %v2445, %v2525
        %v2534 = vsub.f32 %v2446, %v2526
        %v2535 = vsub.f32 %v2447, %v2527
        %v2536 = vsub.f32 %v2448, %v2528
        %v2537 = vsub.f32 %v2449, %v2529
        %v2538 = vsub.f32 %v2450, %v2530
        %v2539 = vsub.f32 %v2451, %v2531
        %v2540 = vsub.f32 %v2452, %v2532
        %v2541 = vmul.f32 %v2501, %v2357
        %v2542 = vmul.f32 %v2502, %v2358
        %v2543 = vmul.f32 %v2503, %v2359
        %v2544 = vmul.f32 %v2504, %v2360
        %v2545 = vmul.f32 %v2505, %v2361
        %v2546 = vmul.f32 %v2506, %v2362
        %v2547 = vmul.f32 %v2507, %v2363
        %v2548 = vmul.f32 %v2508, %v2364
        %v2549 = vsub.f32 %v2461, %v2541
        %v2550 = vsub.f32 %v2462, %v2542
        %v2551 = vsub.f32 %v2463, %v2543
        %v2552 = vsub.f32 %v2464, %v2544
        %v2553 = vsub.f32 %v2465, %v2545
        %v2554 = vsub.f32 %v2466, %v2546
        %v2555 = vsub.f32 %v2467, %v2547
        %v2556 = vsub.f32 %v2468, %v2548
        %v2557 = vmul.f32 1.0, %v1665
        %v2558 = vmul.f32 1.0, %v1680
        %v2559 = vmul.f32 1.0, %v1695
        %v2560 = vmul.f32 1.0, %v1710
        %v2561 = vmul.f32 1.0, %v1725
        %v2562 = vmul.f32 1.0, %v1740
        %v2563 = vmul.f32 1.0, %v1755
        %v2564 = vmul.f32 1.0, %v1770
        %v2565 = vmul.f32 %v2517, %v2557
        %v2566 = vmul.f32 %v2518, %v2558
        %v2567 = vmul.f32 %v2519, %v2559
        %v2568 = vmul.f32 %v2520, %v2560
        %v2569 = vmul.f32 %v2521, %v2561
        %v2570 = vmul.f32 %v2522, %v2562
        %v2571 = vmul.f32 %v2523, %v2563
        %v2572 = vmul.f32 %v2524, %v2564
        %v2573 = vmul.f32 %v2565, %v2477
        %v2574 = vmul.f32 %v2566, %v2478
        %v2575 = vmul.f32 %v2567, %v2479
        %v2576 = vmul.f32 %v2568, %v2480
        %v2577 = vmul.f32 %v2569, %v2481
        %v2578 = vmul.f32 %v2570, %v2482
        %v2579 = vmul.f32 %v2571, %v2483
        %v2580 = vmul.f32 %v2572, %v2484
        %v2581 = vsub.f32 %v2533, %v2573
        %v2582 = vsub.f32 %v2534, %v2574
        %v2583 = vsub.f32 %v2535, %v2575
        %v2584 = vsub.f32 %v2536, %v2576
        %v2585 = vsub.f32 %v2537, %v2577
        %v2586 = vsub.f32 %v2538, %v2578
        %v2587 = vsub.f32 %v2539, %v2579
        %v2588 = vsub.f32 %v2540, %v2580
        %v2589 = vmul.f32 %v2565, %v2493
        %v2590 = vmul.f32 %v2566, %v2494
        %v2591 = vmul.f32 %v2567, %v2495
        %v2592 = vmul.f32 %v2568, %v2496
        %v2593 = vmul.f32 %v2569, %v2497
        %v2594 = vmul.f32 %v2570, %v2498
        %v2595 = vmul.f32 %v2571, %v2499
        %v2596 = vmul.f32 %v2572, %v2500
        %v2597 = vsub.f32 %v2549, %v2589
        %v2598 = vsub.f32 %v2550, %v2590
        %v2599 = vsub.f32 %v2551, %v2591
        %v2600 = vsub.f32 %v2552, %v2592
        %v2601 = vsub.f32 %v2553, %v2593
        %v2602 = vsub.f32 %v2554, %v2594
        %v2603 = vsub.f32 %v2555, %v2595
        %v2604 = vsub.f32 %v2556, %v2596
        %v2605 = vrcp.pop %v2581
        %v2606 = vmul.f32 %v2581, %v2605
        %v2607 = vsub.f32 1.0, %v2606
        %v2608 = vmul.f32 %v2605, %v2607
        %v2609 = vadd.f32 %v2605, %v2608
        %vm2610 = vweird.f32 %v2581
        %vm2611 = vweird.f32 %v2605
        %vm2612 = vmor %vm2610, %vm2611
        %v2613 = vsel %vm2612, %v2605, %v2609
        %v2614 = vand.u32 2147483647, %v2581
        %vm2615 = vcmp.eq.f32.partialorder %v2614, 8.507059e+37
        %v2616 = vand.u32 %v2581, 2147483648
        %v2617 = vor.u32 1.1754944e-38, %v2616
        %v2618 = vsel %vm2615, %v2617, %v2613
        %v2619 = vmul.f32 %v2597, %v2618
        %v2620 = vrcp.pop %v2582
        %v2621 = vmul.f32 %v2582, %v2620
        %v2622 = vsub.f32 1.0, %v2621
        %v2623 = vmul.f32 %v2620, %v2622
        %v2624 = vadd.f32 %v2620, %v2623
        %vm2625 = vweird.f32 %v2582
        %vm2626 = vweird.f32 %v2620
        %vm2627 = vmor %vm2625, %vm2626
        %v2628 = vsel %vm2627, %v2620, %v2624
        %v2629 = vand.u32 2147483647, %v2582
        %vm2630 = vcmp.eq.f32.partialorder %v2629, 8.507059e+37
        %v2631 = vand.u32 %v2582, 2147483648
        %v2632 = vor.u32 1.1754944e-38, %v2631
        %v2633 = vsel %vm2630, %v2632, %v2628
        %v2634 = vmul.f32 %v2598, %v2633
        %v2635 = vrcp.pop %v2583
        %v2636 = vmul.f32 %v2583, %v2635
        %v2637 = vsub.f32 1.0, %v2636
        %v2638 = vmul.f32 %v2635, %v2637
        %v2639 = vadd.f32 %v2635, %v2638
        %vm2640 = vweird.f32 %v2583
        %vm2641 = vweird.f32 %v2635
        %vm2642 = vmor %vm2640, %vm2641
        %v2643 = vsel %vm2642, %v2635, %v2639
        %v2644 = vand.u32 2147483647, %v2583
        %vm2645 = vcmp.eq.f32.partialorder %v2644, 8.507059e+37
        %v2646 = vand.u32 %v2583, 2147483648
        %v2647 = vor.u32 1.1754944e-38, %v2646
        %v2648 = vsel %vm2645, %v2647, %v2643
        %v2649 = vmul.f32 %v2599, %v2648
        %v2650 = vrcp.pop %v2584
        %v2651 = vmul.f32 %v2584, %v2650
        %v2652 = vsub.f32 1.0, %v2651
        %v2653 = vmul.f32 %v2650, %v2652
        %v2654 = vadd.f32 %v2650, %v2653
        %vm2655 = vweird.f32 %v2584
        %vm2656 = vweird.f32 %v2650
        %vm2657 = vmor %vm2655, %vm2656
        %v2658 = vsel %vm2657, %v2650, %v2654
        %v2659 = vand.u32 2147483647, %v2584
        %vm2660 = vcmp.eq.f32.partialorder %v2659, 8.507059e+37
        %v2661 = vand.u32 %v2584, 2147483648
        %v2662 = vor.u32 1.1754944e-38, %v2661
        %v2663 = vsel %vm2660, %v2662, %v2658
        %v2664 = vmul.f32 %v2600, %v2663
        %v2665 = vrcp.pop %v2585
        %v2666 = vmul.f32 %v2585, %v2665
        %v2667 = vsub.f32 1.0, %v2666
        %v2668 = vmul.f32 %v2665, %v2667
        %v2669 = vadd.f32 %v2665, %v2668
        %vm2670 = vweird.f32 %v2585
        %vm2671 = vweird.f32 %v2665
        %vm2672 = vmor %vm2670, %vm2671
        %v2673 = vsel %vm2672, %v2665, %v2669
        %v2674 = vand.u32 2147483647, %v2585
        %vm2675 = vcmp.eq.f32.partialorder %v2674, 8.507059e+37
        %v2676 = vand.u32 %v2585, 2147483648
        %v2677 = vor.u32 1.1754944e-38, %v2676
        %v2678 = vsel %vm2675, %v2677, %v2673
        %v2679 = vmul.f32 %v2601, %v2678
        %v2680 = vrcp.pop %v2586
        %v2681 = vmul.f32 %v2586, %v2680
        %v2682 = vsub.f32 1.0, %v2681
        %v2683 = vmul.f32 %v2680, %v2682
        %v2684 = vadd.f32 %v2680, %v2683
        %vm2685 = vweird.f32 %v2586
        %vm2686 = vweird.f32 %v2680
        %vm2687 = vmor %vm2685, %vm2686
        %v2688 = vsel %vm2687, %v2680, %v2684
        %v2689 = vand.u32 2147483647, %v2586
        %vm2690 = vcmp.eq.f32.partialorder %v2689, 8.507059e+37
        %v2691 = vand.u32 %v2586, 2147483648
        %v2692 = vor.u32 1.1754944e-38, %v2691
        %v2693 = vsel %vm2690, %v2692, %v2688
        %v2694 = vmul.f32 %v2602, %v2693
        %v2695 = vrcp.pop %v2587
        %v2696 = vmul.f32 %v2587, %v2695
        %v2697 = vsub.f32 1.0, %v2696
        %v2698 = vmul.f32 %v2695, %v2697
        %v2699 = vadd.f32 %v2695, %v2698
        %vm2700 = vweird.f32 %v2587
        %vm2701 = vweird.f32 %v2695
        %vm2702 = vmor %vm2700, %vm2701
        %v2703 = vsel %vm2702, %v2695, %v2699
        %v2704 = vand.u32 2147483647, %v2587
        %vm2705 = vcmp.eq.f32.partialorder %v2704, 8.507059e+37
        %v2706 = vand.u32 %v2587, 2147483648
        %v2707 = vor.u32 1.1754944e-38, %v2706
        %v2708 = vsel %vm2705, %v2707, %v2703
        %v2709 = vmul.f32 %v2603, %v2708
        %v2710 = vrcp.pop %v2588
        %v2711 = vmul.f32 %v2588, %v2710
        %v2712 = vsub.f32 1.0, %v2711
        %v2713 = vmul.f32 %v2710, %v2712
        %v2714 = vadd.f32 %v2710, %v2713
        %vm2715 = vweird.f32 %v2588
        %vm2716 = vweird.f32 %v2710
        %vm2717 = vmor %vm2715, %vm2716
        %v2718 = vsel %vm2717, %v2710, %v2714
        %v2719 = vand.u32 2147483647, %v2588
        %vm2720 = vcmp.eq.f32.partialorder %v2719, 8.507059e+37
        %v2721 = vand.u32 %v2588, 2147483648
        %v2722 = vor.u32 1.1754944e-38, %v2721
        %v2723 = vsel %vm2720, %v2722, %v2718
        %v2724 = vmul.f32 %v2604, %v2723
        %v2725 = vmul.f32 %v2477, %v2619
        %v2726 = vmul.f32 %v2478, %v2634
        %v2727 = vmul.f32 %v2479, %v2649
        %v2728 = vmul.f32 %v2480, %v2664
        %v2729 = vmul.f32 %v2481, %v2679
        %v2730 = vmul.f32 %v2482, %v2694
        %v2731 = vmul.f32 %v2483, %v2709
        %v2732 = vmul.f32 %v2484, %v2724
        %v2733 = vsub.f32 %v2493, %v2725
        %v2734 = vsub.f32 %v2494, %v2726
        %v2735 = vsub.f32 %v2495, %v2727
        %v2736 = vsub.f32 %v2496, %v2728
        %v2737 = vsub.f32 %v2497, %v2729
        %v2738 = vsub.f32 %v2498, %v2730
        %v2739 = vsub.f32 %v2499, %v2731
        %v2740 = vsub.f32 %v2500, %v2732
        %v2741 = vmul.f32 %v2733, %v1665
        %v2742 = vmul.f32 %v2734, %v1680
        %v2743 = vmul.f32 %v2735, %v1695
        %v2744 = vmul.f32 %v2736, %v1710
        %v2745 = vmul.f32 %v2737, %v1725
        %v2746 = vmul.f32 %v2738, %v1740
        %v2747 = vmul.f32 %v2739, %v1755
        %v2748 = vmul.f32 %v2740, %v1770
        %v2749 = vmul.f32 %v1524, %v2741
        %v2750 = vmul.f32 %v1525, %v2742
        %v2751 = vmul.f32 %v1526, %v2743
        %v2752 = vmul.f32 %v1527, %v2744
        %v2753 = vmul.f32 %v1528, %v2745
        %v2754 = vmul.f32 %v1529, %v2746
        %v2755 = vmul.f32 %v1530, %v2747
        %v2756 = vmul.f32 %v1531, %v2748
        %v2757 = vsub.f32 %v2357, %v2749
        %v2758 = vsub.f32 %v2358, %v2750
        %v2759 = vsub.f32 %v2359, %v2751
        %v2760 = vsub.f32 %v2360, %v2752
        %v2761 = vsub.f32 %v2361, %v2753
        %v2762 = vsub.f32 %v2362, %v2754
        %v2763 = vsub.f32 %v2363, %v2755
        %v2764 = vsub.f32 %v2364, %v2756
        %v2765 = vmul.f32 %v2341, %v2619
        %v2766 = vmul.f32 %v2342, %v2634
        %v2767 = vmul.f32 %v2343, %v2649
        %v2768 = vmul.f32 %v2344, %v2664
        %v2769 = vmul.f32 %v2345, %v2679
        %v2770 = vmul.f32 %v2346, %v2694
        %v2771 = vmul.f32 %v2347, %v2709
        %v2772 = vmul.f32 %v2348, %v2724
        %v2773 = vsub.f32 %v2757, %v2765
        %v2774 = vsub.f32 %v2758, %v2766
        %v2775 = vsub.f32 %v2759, %v2767
        %v2776 = vsub.f32 %v2760, %v2768
        %v2777 = vsub.f32 %v2761, %v2769
        %v2778 = vsub.f32 %v2762, %v2770
        %v2779 = vsub.f32 %v2763, %v2771
        %v2780 = vsub.f32 %v2764, %v2772
        %v2781 = vmul.f32 %v2773, %v960
        %v2782 = vmul.f32 %v2774, %v975
        %v2783 = vmul.f32 %v2775, %v990
        %v2784 = vmul.f32 %v2776, %v1005
        %v2785 = vmul.f32 %v2777, %v1020
        %v2786 = vmul.f32 %v2778, %v1035
        %v2787 = vmul.f32 %v2779, %v1050
        %v2788 = vmul.f32 %v2780, %v1065
        %v2789 = vmul.f32 %v820, %v2781
        %v2790 = vmul.f32 %v822, %v2782
        %v2791 = vmul.f32 %v824, %v2783
        %v2792 = vmul.f32 %v826, %v2784
        %v2793 = vmul.f32 %v828, %v2785
        %v2794 = vmul.f32 %v830, %v2786
        %v2795 = vmul.f32 %v832, %v2787
        %v2796 = vmul.f32 %v834, %v2788
        %v2797 = vsub.f32 %v2221, %v2789
        %v2798 = vsub.f32 %v2222, %v2790
        %v2799 = vsub.f32 %v2223, %v2791
        %v2800 = vsub.f32 %v2224, %v2792
        %v2801 = vsub.f32 %v2225, %v2793
        %v2802 = vsub.f32 %v2226, %v2794
        %v2803 = vsub.f32 %v2227, %v2795
        %v2804 = vsub.f32 %v2228, %v2796
        %v2805 = vmul.f32 %v1357, %v2741
        %v2806 = vmul.f32 %v1359, %v2742
        %v2807 = vmul.f32 %v1361, %v2743
        %v2808 = vmul.f32 %v1363, %v2744
        %v2809 = vmul.f32 %v1365, %v2745
        %v2810 = vmul.f32 %v1367, %v2746
        %v2811 = vmul.f32 %v1369, %v2747
        %v2812 = vmul.f32 %v1371, %v2748
        %v2813 = vsub.f32 %v2797, %v2805
        %v2814 = vsub.f32 %v2798, %v2806
        %v2815 = vsub.f32 %v2799, %v2807
        %v2816 = vsub.f32 %v2800, %v2808
        %v2817 = vsub.f32 %v2801, %v2809
        %v2818 = vsub.f32 %v2802, %v2810
        %v2819 = vsub.f32 %v2803, %v2811
        %v2820 = vsub.f32 %v2804, %v2812
        %v2821 = vmul.f32 %v2110, %v2619
        %v2822 = vmul.f32 %v2112, %v2634
        %v2823 = vmul.f32 %v2114, %v2649
        %v2824 = vmul.f32 %v2116, %v2664
        %v2825 = vmul.f32 %v2118, %v2679
        %v2826 = vmul.f32 %v2120, %v2694
        %v2827 = vmul.f32 %v2122, %v2709
        %v2828 = vmul.f32 %v2124, %v2724
        %v2829 = vsub.f32 %v2813, %v2821
        %v2830 = vsub.f32 %v2814, %v2822
        %v2831 = vsub.f32 %v2815, %v2823
        %v2832 = vsub.f32 %v2816, %v2824
        %v2833 = vsub.f32 %v2817, %v2825
        %v2834 = vsub.f32 %v2818, %v2826
        %v2835 = vsub.f32 %v2819, %v2827
        %v2836 = vsub.f32 %v2820, %v2828
        %v2837 = vmul.f32 %v2829, %v463
        %v2838 = vmul.f32 %v2830, %v478
        %v2839 = vmul.f32 %v2831, %v493
        %v2840 = vmul.f32 %v2832, %v508
        %v2841 = vmul.f32 %v2833, %v523
        %v2842 = vmul.f32 %v2834, %v538
        %v2843 = vmul.f32 %v2835, %v553
        %v2844 = vmul.f32 %v2836, %v568
        %v2845 = vsel %vm353, %v2837, 0.0
        %v2846 = vsel %vm354, %v2838, 0.0
        %v2847 = vsel %vm355, %v2839, 0.0
        %v2848 = vsel %vm356, %v2840, 0.0
        %v2849 = vsel %vm357, %v2841, 0.0
        %v2850 = vsel %vm358, %v2842, 0.0
        %v2851 = vsel %vm359, %v2843, 0.0
        %v2852 = vsel %vm360, %v2844, 0.0
        %v2853 = vsel %vm738, %v2781, %v2845
        %v2854 = vsel %vm739, %v2782, %v2846
        %v2855 = vsel %vm740, %v2783, %v2847
        %v2856 = vsel %vm741, %v2784, %v2848
        %v2857 = vsel %vm742, %v2785, %v2849
        %v2858 = vsel %vm743, %v2786, %v2850
        %v2859 = vsel %vm744, %v2787, %v2851
        %v2860 = vsel %vm745, %v2788, %v2852
        %v2861 = vsel %vm1275, %v2741, %v2853
        %v2862 = vsel %vm1276, %v2742, %v2854
        %v2863 = vsel %vm1277, %v2743, %v2855
        %v2864 = vsel %vm1278, %v2744, %v2856
        %v2865 = vsel %vm1279, %v2745, %v2857
        %v2866 = vsel %vm1280, %v2746, %v2858
        %v2867 = vsel %vm1281, %v2747, %v2859
        %v2868 = vsel %vm1282, %v2748, %v2860
        %v2869 = vsel %vm2036, %v2619, %v2861
        %v2870 = vsel %vm2037, %v2634, %v2862
        %v2871 = vsel %vm2038, %v2649, %v2863
        %v2872 = vsel %vm2039, %v2664, %v2864
        %v2873 = vsel %vm2040, %v2679, %v2865
        %v2874 = vsel %vm2041, %v2694, %v2866
        %v2875 = vsel %vm2042, %v2709, %v2867
        %v2876 = vsel %vm2043, %v2724, %v2868
        %v2877 = vmax.f32 %v2869, -10000000.0
        %v2878 = vmax.f32 %v2870, -10000000.0
        %v2879 = vmax.f32 %v2871, -10000000.0
        %v2880 = vmax.f32 %v2872, -10000000.0
        %v2881 = vmax.f32 %v2873, -10000000.0
        %v2882 = vmax.f32 %v2874, -10000000.0
        %v2883 = vmax.f32 %v2875, -10000000.0
        %v2884 = vmax.f32 %v2876, -10000000.0
        %v2885 = vmin.f32 %v2877, 10000000.0
        %v2886 = vmin.f32 %v2878, 10000000.0
        %v2887 = vmin.f32 %v2879, 10000000.0
        %v2888 = vmin.f32 %v2880, 10000000.0
        %v2889 = vmin.f32 %v2881, 10000000.0
        %v2890 = vmin.f32 %v2882, 10000000.0
        %v2891 = vmin.f32 %v2883, 10000000.0
        %v2892 = vmin.f32 %v2884, 10000000.0
        %2893 = vst [vmem:[%s180] sm:$0xff] %v2885
        %2894 = vst [vmem:[%s180 + $0x8] sm:$0xff] %v2886
        %2895 = vst [vmem:[%s180 + $0x10] sm:$0xff] %v2887
        %2896 = vst [vmem:[%s180 + $0x18] sm:$0xff] %v2888
        %2897 = vst [vmem:[%s180 + $0x20] sm:$0xff] %v2889
        %2898 = vst [vmem:[%s180 + $0x28] sm:$0xff] %v2890
        %2899 = vst [vmem:[%s180 + $0x30] sm:$0xff] %v2891
        %2900 = vst [vmem:[%s180 + $0x38] sm:$0xff] %v2892
        %s2901 = sand.u32 %s75, 1
        %s2902 = scalar_lea.sflag [#allocation4], %s2901
        %s2903 = sand.u32 %s75, 1
        %s2904 = smul.addr %s2903, 64
        %s2905 = scalar_lea.vmem [#allocation7], %s2904
        // Predicated region
        $region37: #{tpu_custom_call.1} parent=27 // pred_check
          %p2906 = pneg %p85
        $region38: #{tpu_custom_call.1} parent=27 // pred_check_branch
          %2908 = sbr.rel (%p2906) target = $region40
        $region39: #{tpu_custom_call.1} parent=27 // pred_region
          %s2909 = smul.u32 8, %s20
          %2911 = vsyncadd %s2902, 0
          %s2912 = smul.addr %s2909, 8
          %s2913 = scalar_lea.hbm %s2, %s2912
          %s2914 = sshll.u32 %s2905, 4
          %s2915 = int_to_ptr.vmem [resolvable:$true] %s2914
          %s2916 = sshll.u32 %s2913, 4
          %s2917 = int_to_ptr.hbm [resolvable:$true] %s2916
          %2922 = dma.vmem_to_hbm [thread:$0]  %s2915, 1024, %s2917, %s2902, 128, 128, 8
        $region40: #{tpu_custom_call.1} parent=27 // pred_fallthru
          _
      $region28: #{tpu_custom_call.1} parent=5 // pred_fallthru
        _
      %p2923 = scmp.le.s32.totalorder 2, %s15
      // Predicated region
      $region41: #{tpu_custom_call.1} parent=5 // pred_check
        %p2924 = pneg %p2923
      $region42: #{tpu_custom_call.1} parent=5 // pred_check_branch
        %2926 = sbr.rel (%p2924) target = $region44
      $region43: #{tpu_custom_call.1} parent=5 // pred_region
        %s2927 = ssub.s32 %s15, 2
        // Predicated region
        $region45: #{tpu_custom_call.1} parent=43 // pred_check
          %p2928 = pneg %p91
        $region46: #{tpu_custom_call.1} parent=43 // pred_check_branch
          %2930 = sbr.rel (%p2928) target = $region48
        $region47: #{tpu_custom_call.1} parent=43 // pred_region
          %s2931 = sand.u32 %s76, 1
          %s2932 = scalar_lea.sflag [#allocation4], %s2931
          %s2933 = sand.u32 %s76, 1
          %s2934 = smul.addr %s2933, 64
          %s2935 = scalar_lea.vmem [#allocation7], %s2934
          %2937 = dma.done %s2932, 1024
        $region48: #{tpu_custom_call.1} parent=43 // pred_fallthru
          _
      $region44: #{tpu_custom_call.1} parent=5 // pred_fallthru
        _
    $region6: #{tpu_custom_call.1} parent=1 // loop_footer
      %s19 = sadd.s32 1, %s15
    $region7: #{tpu_custom_call.1} parent=1 // loop_footer_branch
      %14 = sbr.rel target = $region3
    $region8: #{tpu_custom_call.1} parent=1 // loop_exit
      _
    %2938 = vsyncpa [#allocation3], 1
    %s2939 = scalar_lea.sflag [#allocation3], 1
    %2940 = vsyncpa %s2939, 1
    %2941 = vsyncpa [#allocation6], 1
    %2942 = vsyncpa [#allocation4], 1
    %s2943 = scalar_lea.sflag [#allocation4], 1
    %2944 = vsyncpa %s2943, 1

</llo_original>
